<compile_context>
chip_gen: v6e
topology: v6e:2x2x1
jax: 0.10.0
libtpu: 0.0.40
codegen_flags: <defaults>
</compile_context>

<pallas_src>
import math
from functools import partial

import jax
import jax.numpy as jnp
from jax.experimental import pallas as pl
from jax.experimental.pallas import tpu as pltpu

LN_EPS = 1e-5  # PyTorch nn.LayerNorm default


# ----------------------------- in-kernel helpers ---------------------------- #

def _layer_norm(x, g, b):
    """Row-wise LayerNorm over the last dim (fp32 statistics)."""
    mean = jnp.mean(x, axis=-1, keepdims=True)
    xc = x - mean
    var = jnp.mean(xc * xc, axis=-1, keepdims=True)
    return xc * jax.lax.rsqrt(var + LN_EPS) * g + b


def _mha_self(x, w_qkv, b_qkv, w_o, b_o, num_heads):
    """Multi-head self-attention on one batch element.

    x: (S, E). The 1/sqrt(head_dim) query scale is already baked into w_qkv/b_qkv.
    """
    S, E = x.shape
    Dh = E // num_heads
    qkv = jnp.dot(x, w_qkv, preferred_element_type=jnp.float32) + b_qkv   # (S, 3E)
    q, k, v = qkv[:, :E], qkv[:, E:2 * E], qkv[:, 2 * E:]
    heads = []
    for h in range(num_heads):                                            # static unroll
        sl = slice(h * Dh, (h + 1) * Dh)
        qh, kh, vh = q[:, sl], k[:, sl], v[:, sl]
        s = jax.lax.dot_general(qh, kh, (((1,), (1,)), ((), ())),
                                preferred_element_type=jnp.float32)       # (S, S)
        s = s - jnp.max(s, axis=-1, keepdims=True)
        p = jnp.exp(s)
        p = p * pl.reciprocal(jnp.sum(p, axis=-1, keepdims=True), approx=True)
        heads.append(jnp.dot(p, vh, preferred_element_type=jnp.float32))  # (S, Dh)
    o = jnp.concatenate(heads, axis=-1)                                   # (S, E)
    return jnp.dot(o, w_o, preferred_element_type=jnp.float32) + b_o


def _ffn(x, w1, b1, w2, b2):
    h = jnp.maximum(jnp.dot(x, w1, preferred_element_type=jnp.float32) + b1, 0.0)
    return jnp.dot(h, w2, preferred_element_type=jnp.float32) + b2


# ------------------------------- Pallas kernels ----------------------------- #

def _embed_kernel(patches_ref, w_ref, b_ref, cls_ref, pos_ref, o_ref):
    # patches: (1, N, C*P*P) for this batch; w: (C*P*P, E); cls: (1, E); pos: (1+N, E)
    tok = jnp.dot(patches_ref[0].astype(jnp.float32), w_ref[...],
                  preferred_element_type=jnp.float32) + b_ref[...]        # (N, E)
    seq = jnp.concatenate([cls_ref[...], tok], axis=0) + pos_ref[...]     # (1+N, E)
    o_ref[0] = seq.astype(o_ref.dtype)


def _encoder_layer_kernel(x_ref, wqkv_ref, bqkv_ref, wo_ref, bo_ref,
                          w1_ref, fb1_ref, w2_ref, fb2_ref,
                          g1_ref, be1_ref, g2_ref, be2_ref,
                          o_ref, *, num_heads):
    # nn.TransformerEncoderLayer, post-norm, ReLU activation, dropout = identity.
    x = x_ref[0].astype(jnp.float32)                                      # (S, E)
    a = _mha_self(x, wqkv_ref[...], bqkv_ref[...], wo_ref[...], bo_ref[...], num_heads)
    h1 = _layer_norm(x + a, g1_ref[...], be1_ref[...])
    f = _ffn(h1, w1_ref[...], fb1_ref[...], w2_ref[...], fb2_ref[...])
    o_ref[0] = _layer_norm(h1 + f, g2_ref[...], be2_ref[...]).astype(o_ref.dtype)


def _decoder_layer_kernel(x_ref, lat_ref,
                          wqkv_ref, bqkv_ref, wo_ref, bo_ref,
                          wvc_ref, bvc_ref, woc_ref, boc_ref,
                          w1_ref, fb1_ref, w2_ref, fb2_ref,
                          g1_ref, be1_ref, g2_ref, be2_ref, g3_ref, be3_ref,
                          o_ref, *, num_heads):
    # nn.TransformerDecoderLayer, post-norm, ReLU activation, dropout = identity.
    x = x_ref[0].astype(jnp.float32)                                      # (N, E)
    a = _mha_self(x, wqkv_ref[...], bqkv_ref[...], wo_ref[...], bo_ref[...], num_heads)
    h1 = _layer_norm(x + a, g1_ref[...], be1_ref[...])
    # Cross-attention: every memory row equals the latent, so the per-head softmax is
    # uniform and the attention output equals out_proj(V_proj(latent)) for every query
    # (mathematically identical to nn.MultiheadAttention on the repeated memory).
    lat = lat_ref[0].astype(jnp.float32)                                  # (1, E)
    vlat = jnp.dot(lat, wvc_ref[...], preferred_element_type=jnp.float32) + bvc_ref[...]
    cross = jnp.dot(vlat, woc_ref[...], preferred_element_type=jnp.float32) + boc_ref[...]
    h2 = _layer_norm(h1 + cross, g2_ref[...], be2_ref[...])               # broadcast (1,E)
    f = _ffn(h2, w1_ref[...], fb1_ref[...], w2_ref[...], fb2_ref[...])
    o_ref[0] = _layer_norm(h2 + f, g3_ref[...], be3_ref[...]).astype(o_ref.dtype)


def _unembed_kernel(x_ref, w_ref, b_ref, o_ref):
    o_ref[0] = (jnp.dot(x_ref[0].astype(jnp.float32), w_ref[...],
                        preferred_element_type=jnp.float32) + b_ref[...]).astype(o_ref.dtype)


# ------------------------------ BlockSpec helpers --------------------------- #

def _batched(shape):
    """Per-batch block over the leading axis; remaining dims are the full extent."""
    rest = (0,) * (len(shape) - 1)

    def idx(b):
        return (b,) + rest

    return pl.BlockSpec((1,) + tuple(shape[1:]), idx)


def _replicated(shape):
    """Whole-array block, identical for every batch grid step (kept resident)."""
    zeros = (0,) * len(shape)

    def idx(b):
        return zeros

    return pl.BlockSpec(tuple(shape), idx)


# ------------------------------ model composition --------------------------- #

def autoencoder_forward(x, pp, cfg):
    B, C, H, W = x.shape
    P = cfg["patch_size"]
    E = cfg["embed_dim"]
    nh = cfg["num_heads"]
    M = cfg["mlp_dim"]
    Hp, Wp = H // P, W // P
    N = Hp * Wp
    S = 1 + N
    CPP = C * P * P
    PPC = P * P * C
    par = pltpu.CompilerParams(dimension_semantics=("parallel",))

    # ----- ViTEncoder -----
    # Conv2d(kernel=P, stride=P) == patch extraction + linear projection.
    patches = x.reshape(B, C, Hp, P, Wp, P).transpose(0, 2, 4, 1, 3, 5).reshape(B, N, CPP)

    seq = pl.pallas_call(
        _embed_kernel,
        out_shape=jax.ShapeDtypeStruct((B, S, E), jnp.float32),
        grid=(B,),
        in_specs=[_batched((B, N, CPP)), _replicated((CPP, E)), _replicated((1, E)),
                  _replicated((1, E)), _replicated((S, E))],
        out_specs=_batched((B, S, E)),
        compiler_params=par,
    )(patches, pp["patch_w"], pp["patch_b"], pp["cls"], pp["enc_pos"])

    for lp in pp["enc_layers"]:
        seq = pl.pallas_call(
            partial(_encoder_layer_kernel, num_heads=nh),
            out_shape=jax.ShapeDtypeStruct((B, S, E), jnp.float32),
            grid=(B,),
            in_specs=[_batched((B, S, E)),
                      _replicated((E, 3 * E)), _replicated((1, 3 * E)),
                      _replicated((E, E)), _replicated((1, E)),
                      _replicated((E, M)), _replicated((1, M)),
                      _replicated((M, E)), _replicated((1, E)),
                      _replicated((1, E)), _replicated((1, E)),
                      _replicated((1, E)), _replicated((1, E))],
            out_specs=_batched((B, S, E)),
            compiler_params=par,
        )(seq, lp["w_qkv"], lp["b_qkv"], lp["w_o"], lp["b_o"],
          lp["w1"], lp["b1"], lp["w2"], lp["b2"],
          lp["ln1_g"], lp["ln1_b"], lp["ln2_g"], lp["ln2_b"])

    latent = seq[:, 0:1, :]                                   # cls embedding, (B, 1, E)

    # ----- TransformerDecoder -----
    xd = jnp.broadcast_to(pp["dec_pos"][None], (B, N, E))     # zeros target + pos_embed
    for lp in pp["dec_layers"]:
        xd = pl.pallas_call(
            partial(_decoder_layer_kernel, num_heads=nh),
            out_shape=jax.ShapeDtypeStruct((B, N, E), jnp.float32),
            grid=(B,),
            in_specs=[_batched((B, N, E)), _batched((B, 1, E)),
                      _replicated((E, 3 * E)), _replicated((1, 3 * E)),
                      _replicated((E, E)), _replicated((1, E)),
                      _replicated((E, E)), _replicated((1, E)),
                      _replicated((E, E)), _replicated((1, E)),
                      _replicated((E, M)), _replicated((1, M)),
                      _replicated((M, E)), _replicated((1, E)),
                      _replicated((1, E)), _replicated((1, E)),
                      _replicated((1, E)), _replicated((1, E)),
                      _replicated((1, E)), _replicated((1, E))],
            out_specs=_batched((B, N, E)),
            compiler_params=par,
        )(xd, latent,
          lp["w_qkv"], lp["b_qkv"], lp["w_o"], lp["b_o"],
          lp["w_vc"], lp["b_vc"], lp["w_oc"], lp["b_oc"],
          lp["w1"], lp["b1"], lp["w2"], lp["b2"],
          lp["ln1_g"], lp["ln1_b"], lp["ln2_g"], lp["ln2_b"],
          lp["ln3_g"], lp["ln3_b"])

    out = pl.pallas_call(
        _unembed_kernel,
        out_shape=jax.ShapeDtypeStruct((B, N, PPC), jnp.float32),
        grid=(B,),
        in_specs=[_batched((B, N, E)), _replicated((E, PPC)), _replicated((1, PPC))],
        out_specs=_batched((B, N, PPC)),
        compiler_params=par,
    )(xd, pp["unembed_w"], pp["unembed_b"])

    out = out.reshape(B, Hp, Wp, C, P, P).transpose(0, 3, 1, 4, 2, 5).reshape(B, C, H, W)
    return out


# ------------------------------ parameter handling -------------------------- #

def init_params(key, cfg):
    """Parameters in the PyTorch layouts (weights stored as (out, in), like nn.Linear)."""
    C, P, E = cfg["in_channels"], cfg["patch_size"], cfg["embed_dim"]
    D, M = cfg["depth"], cfg["mlp_dim"]
    N = (cfg["image_size"] // P) ** 2
    keys = iter(jax.random.split(key, 256))

    def nrm(shape, scale=0.02):
        return (scale * jax.random.normal(next(keys), shape)).astype(jnp.float32)

    def zeros(shape):
        return jnp.zeros(shape, jnp.float32)

    def ones(shape):
        return jnp.ones(shape, jnp.float32)

    def attn_params():
        return {"in_proj_weight": nrm((3 * E, E)), "in_proj_bias": zeros((3 * E,)),
                "out_proj_weight": nrm((E, E)), "out_proj_bias": zeros((E,))}

    def enc_layer_params():
        return {"self_attn": attn_params(),
                "lin1_w": nrm((M, E)), "lin1_b": zeros((M,)),
                "lin2_w": nrm((E, M)), "lin2_b": zeros((E,)),
                "norm1_w": ones((E,)), "norm1_b": zeros((E,)),
                "norm2_w": ones((E,)), "norm2_b": zeros((E,))}

    def dec_layer_params():
        d = enc_layer_params()
        d["cross_attn"] = attn_params()
        d["norm3_w"] = ones((E,))
        d["norm3_b"] = zeros((E,))
        return d

    return {
        "patch_embed_w": nrm((E, C, P, P)),
        "patch_embed_b": zeros((E,)),
        "cls_token": nrm((1, 1, E)),          # torch inits to zeros; random here (synthetic)
        "enc_pos_embed": nrm((1, 1 + N, E)),  # torch inits to zeros; random here (synthetic)
        "dec_pos_embed": nrm((1, N, E)),
        "unembed_w": nrm((P * P * C, E)),
        "unembed_b": zeros((P * P * C,)),
        "enc_layers": [enc_layer_params() for _ in range(D)],
        "dec_layers": [dec_layer_params() for _ in range(D)],
    }


def prepare_params(params, cfg):
    """One-time prep: transpose weights to (in, out), pack QKV, bake in the q scale."""
    E = cfg["embed_dim"]
    nh = cfg["num_heads"]
    C, P = cfg["in_channels"], cfg["patch_size"]
    scale = 1.0 / math.sqrt(E // nh)

    def row(v):
        return jnp.asarray(v).reshape(1, -1)

    def prep_self_attn(a):
        w, bb = a["in_proj_weight"], a["in_proj_bias"]
        wq, wk, wv = w[:E], w[E:2 * E], w[2 * E:]
        bq, bk, bv = bb[:E], bb[E:2 * E], bb[2 * E:]
        # Bake the 1/sqrt(head_dim) query scale into the packed (E, 3E) projection.
        w_qkv = jnp.concatenate([wq.T * scale, wk.T, wv.T], axis=1)
        b_qkv = jnp.concatenate([bq * scale, bk, bv]).reshape(1, 3 * E)
        return {"w_qkv": w_qkv, "b_qkv": b_qkv,
                "w_o": a["out_proj_weight"].T, "b_o": row(a["out_proj_bias"])}

    def prep_cross_attn(a):
        # Memory rows are identical (latent repeated) -> only V and output projections matter.
        w, bb = a["in_proj_weight"], a["in_proj_bias"]
        return {"w_vc": w[2 * E:].T, "b_vc": row(bb[2 * E:]),
                "w_oc": a["out_proj_weight"].T, "b_oc": row(a["out_proj_bias"])}

    def prep_common(lp):
        return {"w1": lp["lin1_w"].T, "b1": row(lp["lin1_b"]),
                "w2": lp["lin2_w"].T, "b2": row(lp["lin2_b"]),
                "ln1_g": row(lp["norm1_w"]), "ln1_b": row(lp["norm1_b"]),
                "ln2_g": row(lp["norm2_w"]), "ln2_b": row(lp["norm2_b"])}

    def prep_enc(lp):
        d = prep_self_attn(lp["self_attn"])
        d.update(prep_common(lp))
        return d

    def prep_dec(lp):
        d = prep_enc(lp)
        d.update(prep_cross_attn(lp["cross_attn"]))
        d.update({"ln3_g": row(lp["norm3_w"]), "ln3_b": row(lp["norm3_b"])})
        return d

    return {
        "patch_w": params["patch_embed_w"].reshape(E, C * P * P).T,   # (C*P*P, E)
        "patch_b": row(params["patch_embed_b"]),
        "cls": params["cls_token"].reshape(1, E),
        "enc_pos": params["enc_pos_embed"].reshape(-1, E),            # (1+N, E)
        "dec_pos": params["dec_pos_embed"].reshape(-1, E),            # (N, E)
        "unembed_w": params["unembed_w"].T,                           # (E, P*P*C)
        "unembed_b": row(params["unembed_b"]),
        "enc_layers": [prep_enc(l) for l in params["enc_layers"]],
        "dec_layers": [prep_dec(l) for l in params["dec_layers"]],
    }


# ------------------------------------ main ----------------------------------- #

if __name__ == "__main__":
    cfg = dict(image_size=16, patch_size=8, in_channels=3, embed_dim=32,
               depth=2, num_heads=4, mlp_dim=64, latent_dim=32)
    key = jax.random.PRNGKey(0)
    kx, kp = jax.random.split(key)
    x = jax.random.normal(kx, (2, cfg["in_channels"], cfg["image_size"], cfg["image_size"]),
                          dtype=jnp.float32)
    params = init_params(kp, cfg)
    prepped = prepare_params(params, cfg)   # transposes/packing done once, not per forward

    fwd = jax.jit(partial(autoencoder_forward, cfg=cfg))
    out = fwd(x, prepped)
    jax.block_until_ready(out)
    assert out.shape == x.shape and out.dtype == jnp.float32
    print("KERNEL_OK")
</pallas_src>

<mosaic_0001>
module attributes {stable_mosaic.version = 11 : i64} {
  func.func @_embed_kernel(%arg0: i32, %arg1: memref<1x4x192xf32, #tpu.memory_space<vmem>>, %arg2: memref<192x32xf32, #tpu.memory_space<vmem>>, %arg3: memref<1x32xf32, #tpu.memory_space<vmem>>, %arg4: memref<1x32xf32, #tpu.memory_space<vmem>>, %arg5: memref<5x32xf32, #tpu.memory_space<vmem>>, %arg6: memref<1x5x32xf32, #tpu.memory_space<vmem>>) attributes {dimension_semantics = [#tpu.dimension_semantics<parallel>], iteration_bounds = array<i64: 2>, scalar_prefetch = 0 : i64, scratch_operands = 0 : i64, tpu.core_type = #tpu.core_type<tc>, window_params = [{transform_indices = @transform_0, window_bounds = array<i64: 1, 4, 192>}, {pipeline_mode = #tpu.pipeline_mode<synchronous>, transform_indices = @transform_1, window_bounds = array<i64: 192, 32>}, {pipeline_mode = #tpu.pipeline_mode<synchronous>, transform_indices = @transform_2, window_bounds = array<i64: 1, 32>}, {pipeline_mode = #tpu.pipeline_mode<synchronous>, transform_indices = @transform_3, window_bounds = array<i64: 1, 32>}, {pipeline_mode = #tpu.pipeline_mode<synchronous>, transform_indices = @transform_4, window_bounds = array<i64: 5, 32>}, {transform_indices = @transform_5, window_bounds = array<i64: 1, 5, 32>}]} {
    %c0 = arith.constant 0 : index
    %c0_0 = arith.constant 0 : index
    %c0_1 = arith.constant 0 : index
    %0 = vector.load %arg1[%c0, %c0_0, %c0_1] : memref<1x4x192xf32, #tpu.memory_space<vmem>>, vector<1x4x192xf32>
    %1 = vector.shape_cast %0 : vector<1x4x192xf32> to vector<4x192xf32>
    %c0_2 = arith.constant 0 : index
    %c0_3 = arith.constant 0 : index
    %2 = vector.load %arg2[%c0_2, %c0_3] : memref<192x32xf32, #tpu.memory_space<vmem>>, vector<192x32xf32>
    %cst = arith.constant dense<0.000000e+00> : vector<4x32xf32>
    %3 = tpu.matmul %1, %2, %cst {dimension_numbers = #tpu.dot_dimension_numbers<[1], [0], [0], [1], [0, 0, 1, 1], [], []>} : vector<4x192xf32>, vector<192x32xf32>, vector<4x32xf32> -> vector<4x32xf32>
    %c0_4 = arith.constant 0 : index
    %c0_5 = arith.constant 0 : index
    %4 = vector.load %arg3[%c0_4, %c0_5] : memref<1x32xf32, #tpu.memory_space<vmem>>, vector<1x32xf32>
    %5 = vector.broadcast %4 : vector<1x32xf32> to vector<4x32xf32>
    %6 = arith.addf %3, %5 : vector<4x32xf32>
    %c0_6 = arith.constant 0 : index
    %c0_7 = arith.constant 0 : index
    %7 = vector.load %arg4[%c0_6, %c0_7] : memref<1x32xf32, #tpu.memory_space<vmem>>, vector<1x32xf32>
    %8 = tpu.concatenate %7, %6 in 0 : vector<1x32xf32>, vector<4x32xf32> -> vector<5x32xf32>
    %c0_8 = arith.constant 0 : index
    %c0_9 = arith.constant 0 : index
    %9 = vector.load %arg5[%c0_8, %c0_9] : memref<5x32xf32, #tpu.memory_space<vmem>>, vector<5x32xf32>
    %10 = arith.addf %8, %9 : vector<5x32xf32>
    %c0_10 = arith.constant 0 : index
    %c0_11 = arith.constant 0 : index
    %c0_12 = arith.constant 0 : index
    %11 = vector.load %arg6[%c0_10, %c0_11, %c0_12] : memref<1x5x32xf32, #tpu.memory_space<vmem>>, vector<1x5x32xf32>
    %12 = vector.shape_cast %11 : vector<1x5x32xf32> to vector<5x32xf32>
    %13 = vector.shape_cast %10 : vector<5x32xf32> to vector<1x5x32xf32>
    tpu.vector_store %arg6[%c0_10, %c0_11, %c0_12], %13 {strides = array<i32>} : memref<1x5x32xf32, #tpu.memory_space<vmem>>, vector<1x5x32xf32>,
    return
  }
  func.func @transform_0(%arg0: i32) -> (i32, i32, i32) {
    %c0_i32 = arith.constant 0 : i32
    %c0_i32_0 = arith.constant 0 : i32
    %c0_i32_1 = arith.constant 0 : i32
    return %arg0, %c0_i32, %c0_i32_0 : i32, i32, i32
  }
  func.func @transform_1(%arg0: i32) -> (i32, i32) {
    %c0_i32 = arith.constant 0 : i32
    %c0_i32_0 = arith.constant 0 : i32
    %c0_i32_1 = arith.constant 0 : i32
    return %c0_i32, %c0_i32_0 : i32, i32
  }
  func.func @transform_2(%arg0: i32) -> (i32, i32) {
    %c0_i32 = arith.constant 0 : i32
    %c0_i32_0 = arith.constant 0 : i32
    %c0_i32_1 = arith.constant 0 : i32
    return %c0_i32, %c0_i32_0 : i32, i32
  }
  func.func @transform_3(%arg0: i32) -> (i32, i32) {
    %c0_i32 = arith.constant 0 : i32
    %c0_i32_0 = arith.constant 0 : i32
    %c0_i32_1 = arith.constant 0 : i32
    return %c0_i32, %c0_i32_0 : i32, i32
  }
  func.func @transform_4(%arg0: i32) -> (i32, i32) {
    %c0_i32 = arith.constant 0 : i32
    %c0_i32_0 = arith.constant 0 : i32
    %c0_i32_1 = arith.constant 0 : i32
    return %c0_i32, %c0_i32_0 : i32, i32
  }
  func.func @transform_5(%arg0: i32) -> (i32, i32, i32) {
    %c0_i32 = arith.constant 0 : i32
    %c0_i32_0 = arith.constant 0 : i32
    %c0_i32_1 = arith.constant 0 : i32
    return %arg0, %c0_i32, %c0_i32_0 : i32, i32, i32
  }
}

module attributes {stable_mosaic.version = 11 : i64} {
  func.func @_encoder_layer_kernel(%arg0: i32, %arg1: memref<1x5x32xf32, #tpu.memory_space<vmem>>, %arg2: memref<32x96xf32, #tpu.memory_space<vmem>>, %arg3: memref<1x96xf32, #tpu.memory_space<vmem>>, %arg4: memref<32x32xf32, #tpu.memory_space<vmem>>, %arg5: memref<1x32xf32, #tpu.memory_space<vmem>>, %arg6: memref<32x64xf32, #tpu.memory_space<vmem>>, %arg7: memref<1x64xf32, #tpu.memory_space<vmem>>, %arg8: memref<64x32xf32, #tpu.memory_space<vmem>>, %arg9: memref<1x32xf32, #tpu.memory_space<vmem>>, %arg10: memref<1x32xf32, #tpu.memory_space<vmem>>, %arg11: memref<1x32xf32, #tpu.memory_space<vmem>>, %arg12: memref<1x32xf32, #tpu.memory_space<vmem>>, %arg13: memref<1x32xf32, #tpu.memory_space<vmem>>, %arg14: memref<1x5x32xf32, #tpu.memory_space<vmem>>) attributes {dimension_semantics = [#tpu.dimension_semantics<parallel>], iteration_bounds = array<i64: 2>, scalar_prefetch = 0 : i64, scratch_operands = 0 : i64, tpu.core_type = #tpu.core_type<tc>, window_params = [{transform_indices = @transform_0, window_bounds = array<i64: 1, 5, 32>}, {pipeline_mode = #tpu.pipeline_mode<synchronous>, transform_indices = @transform_1, window_bounds = array<i64: 32, 96>}, {pipeline_mode = #tpu.pipeline_mode<synchronous>, transform_indices = @transform_2, window_bounds = array<i64: 1, 96>}, {pipeline_mode = #tpu.pipeline_mode<synchronous>, transform_indices = @transform_3, window_bounds = array<i64: 32, 32>}, {pipeline_mode = #tpu.pipeline_mode<synchronous>, transform_indices = @transform_4, window_bounds = array<i64: 1, 32>}, {pipeline_mode = #tpu.pipeline_mode<synchronous>, transform_indices = @transform_5, window_bounds = array<i64: 32, 64>}, {pipeline_mode = #tpu.pipeline_mode<synchronous>, transform_indices = @transform_6, window_bounds = array<i64: 1, 64>}, {pipeline_mode = #tpu.pipeline_mode<synchronous>, transform_indices = @transform_7, window_bounds = array<i64: 64, 32>}, {pipeline_mode = #tpu.pipeline_mode<synchronous>, transform_indices = @transform_8, window_bounds = array<i64: 1, 32>}, {pipeline_mode = #tpu.pipeline_mode<synchronous>, transform_indices = @transform_9, window_bounds = array<i64: 1, 32>}, {pipeline_mode = #tpu.pipeline_mode<synchronous>, transform_indices = @transform_10, window_bounds = array<i64: 1, 32>}, {pipeline_mode = #tpu.pipeline_mode<synchronous>, transform_indices = @transform_11, window_bounds = array<i64: 1, 32>}, {pipeline_mode = #tpu.pipeline_mode<synchronous>, transform_indices = @transform_12, window_bounds = array<i64: 1, 32>}, {transform_indices = @transform_13, window_bounds = array<i64: 1, 5, 32>}]} {
    %c0 = arith.constant 0 : index
    %c0_0 = arith.constant 0 : index
    %c0_1 = arith.constant 0 : index
    %0 = vector.load %arg1[%c0, %c0_0, %c0_1] : memref<1x5x32xf32, #tpu.memory_space<vmem>>, vector<1x5x32xf32>
    %1 = vector.shape_cast %0 : vector<1x5x32xf32> to vector<5x32xf32>
    %c0_2 = arith.constant 0 : index
    %c0_3 = arith.constant 0 : index
    %2 = vector.load %arg2[%c0_2, %c0_3] : memref<32x96xf32, #tpu.memory_space<vmem>>, vector<32x96xf32>
    %c0_4 = arith.constant 0 : index
    %c0_5 = arith.constant 0 : index
    %3 = vector.load %arg3[%c0_4, %c0_5] : memref<1x96xf32, #tpu.memory_space<vmem>>, vector<1x96xf32>
    %c0_6 = arith.constant 0 : index
    %c0_7 = arith.constant 0 : index
    %4 = vector.load %arg4[%c0_6, %c0_7] : memref<32x32xf32, #tpu.memory_space<vmem>>, vector<32x32xf32>
    %c0_8 = arith.constant 0 : index
    %c0_9 = arith.constant 0 : index
    %5 = vector.load %arg5[%c0_8, %c0_9] : memref<1x32xf32, #tpu.memory_space<vmem>>, vector<1x32xf32>
    %cst = arith.constant dense<0.000000e+00> : vector<5x96xf32>
    %6 = tpu.matmul %1, %2, %cst {dimension_numbers = #tpu.dot_dimension_numbers<[1], [0], [0], [1], [0, 0, 1, 1], [], []>} : vector<5x32xf32>, vector<32x96xf32>, vector<5x96xf32> -> vector<5x96xf32>
    %7 = vector.broadcast %3 : vector<1x96xf32> to vector<5x96xf32>
    %8 = arith.addf %6, %7 : vector<5x96xf32>
    %9 = vector.extract_strided_slice %8 {offsets = [0, 0], sizes = [5, 32], strides = [1, 1]} : vector<5x96xf32> to vector<5x32xf32>
    %10 = vector.extract_strided_slice %8 {offsets = [0, 32], sizes = [5, 32], strides = [1, 1]} : vector<5x96xf32> to vector<5x32xf32>
    %11 = vector.extract_strided_slice %8 {offsets = [0, 64], sizes = [5, 32], strides = [1, 1]} : vector<5x96xf32> to vector<5x32xf32>
    %12 = vector.extract_strided_slice %9 {offsets = [0, 0], sizes = [5, 8], strides = [1, 1]} : vector<5x32xf32> to vector<5x8xf32>
    %13 = vector.extract_strided_slice %10 {offsets = [0, 0], sizes = [5, 8], strides = [1, 1]} : vector<5x32xf32> to vector<5x8xf32>
    %14 = vector.extract_strided_slice %11 {offsets = [0, 0], sizes = [5, 8], strides = [1, 1]} : vector<5x32xf32> to vector<5x8xf32>
    %cst_10 = arith.constant dense<0.000000e+00> : vector<5x5xf32>
    %15 = tpu.matmul %12, %13, %cst_10 {dimension_numbers = #tpu.dot_dimension_numbers<[1], [1], [0], [0], [0, 0, 1, 0], [], []>} : vector<5x8xf32>, vector<5x8xf32>, vector<5x5xf32> -> vector<5x5xf32>
    %cst_11 = arith.constant dense<0xFF800000> : vector<5xf32>
    %16 = vector.multi_reduction <maximumf>, %15, %cst_11 [1] : vector<5x5xf32> to vector<5xf32>
    %17 = vector.shape_cast %16 : vector<5xf32> to vector<5x1xf32>
    %18 = vector.broadcast %17 : vector<5x1xf32> to vector<5x5xf32>
    %19 = arith.subf %15, %18 : vector<5x5xf32>
    %20 = math.exp %19 : vector<5x5xf32>
    %cst_12 = arith.constant dense<0.000000e+00> : vector<5xf32>
    %21 = vector.multi_reduction <add>, %20, %cst_12 [1] : vector<5x5xf32> to vector<5xf32>
    %22 = vector.shape_cast %21 : vector<5xf32> to vector<5x1xf32>
    %23 = tpu.reciprocal %22 {approx = true} : vector<5x1xf32> -> vector<5x1xf32>
    %24 = vector.broadcast %23 : vector<5x1xf32> to vector<5x5xf32>
    %25 = arith.mulf %20, %24 : vector<5x5xf32>
    %cst_13 = arith.constant dense<0.000000e+00> : vector<5x8xf32>
    %26 = tpu.matmul %25, %14, %cst_13 {dimension_numbers = #tpu.dot_dimension_numbers<[1], [0], [0], [1], [0, 0, 1, 1], [], []>} : vector<5x5xf32>, vector<5x8xf32>, vector<5x8xf32> -> vector<5x8xf32>
    %27 = vector.extract_strided_slice %9 {offsets = [0, 8], sizes = [5, 8], strides = [1, 1]} : vector<5x32xf32> to vector<5x8xf32>
    %28 = vector.extract_strided_slice %10 {offsets = [0, 8], sizes = [5, 8], strides = [1, 1]} : vector<5x32xf32> to vector<5x8xf32>
    %29 = vector.extract_strided_slice %11 {offsets = [0, 8], sizes = [5, 8], strides = [1, 1]} : vector<5x32xf32> to vector<5x8xf32>
    %cst_14 = arith.constant dense<0.000000e+00> : vector<5x5xf32>
    %30 = tpu.matmul %27, %28, %cst_14 {dimension_numbers = #tpu.dot_dimension_numbers<[1], [1], [0], [0], [0, 0, 1, 0], [], []>} : vector<5x8xf32>, vector<5x8xf32>, vector<5x5xf32> -> vector<5x5xf32>
    %cst_15 = arith.constant dense<0xFF800000> : vector<5xf32>
    %31 = vector.multi_reduction <maximumf>, %30, %cst_15 [1] : vector<5x5xf32> to vector<5xf32>
    %32 = vector.shape_cast %31 : vector<5xf32> to vector<5x1xf32>
    %33 = vector.broadcast %32 : vector<5x1xf32> to vector<5x5xf32>
    %34 = arith.subf %30, %33 : vector<5x5xf32>
    %35 = math.exp %34 : vector<5x5xf32>
    %cst_16 = arith.constant dense<0.000000e+00> : vector<5xf32>
    %36 = vector.multi_reduction <add>, %35, %cst_16 [1] : vector<5x5xf32> to vector<5xf32>
    %37 = vector.shape_cast %36 : vector<5xf32> to vector<5x1xf32>
    %38 = tpu.reciprocal %37 {approx = true} : vector<5x1xf32> -> vector<5x1xf32>
    %39 = vector.broadcast %38 : vector<5x1xf32> to vector<5x5xf32>
    %40 = arith.mulf %35, %39 : vector<5x5xf32>
    %cst_17 = arith.constant dense<0.000000e+00> : vector<5x8xf32>
    %41 = tpu.matmul %40, %29, %cst_17 {dimension_numbers = #tpu.dot_dimension_numbers<[1], [0], [0], [1], [0, 0, 1, 1], [], []>} : vector<5x5xf32>, vector<5x8xf32>, vector<5x8xf32> -> vector<5x8xf32>
    %42 = vector.extract_strided_slice %9 {offsets = [0, 16], sizes = [5, 8], strides = [1, 1]} : vector<5x32xf32> to vector<5x8xf32>
    %43 = vector.extract_strided_slice %10 {offsets = [0, 16], sizes = [5, 8], strides = [1, 1]} : vector<5x32xf32> to vector<5x8xf32>
    %44 = vector.extract_strided_slice %11 {offsets = [0, 16], sizes = [5, 8], strides = [1, 1]} : vector<5x32xf32> to vector<5x8xf32>
    %cst_18 = arith.constant dense<0.000000e+00> : vector<5x5xf32>
    %45 = tpu.matmul %42, %43, %cst_18 {dimension_numbers = #tpu.dot_dimension_numbers<[1], [1], [0], [0], [0, 0, 1, 0], [], []>} : vector<5x8xf32>, vector<5x8xf32>, vector<5x5xf32> -> vector<5x5xf32>
    %cst_19 = arith.constant dense<0xFF800000> : vector<5xf32>
    %46 = vector.multi_reduction <maximumf>, %45, %cst_19 [1] : vector<5x5xf32> to vector<5xf32>
    %47 = vector.shape_cast %46 : vector<5xf32> to vector<5x1xf32>
    %48 = vector.broadcast %47 : vector<5x1xf32> to vector<5x5xf32>
    %49 = arith.subf %45, %48 : vector<5x5xf32>
    %50 = math.exp %49 : vector<5x5xf32>
    %cst_20 = arith.constant dense<0.000000e+00> : vector<5xf32>
    %51 = vector.multi_reduction <add>, %50, %cst_20 [1] : vector<5x5xf32> to vector<5xf32>
    %52 = vector.shape_cast %51 : vector<5xf32> to vector<5x1xf32>
    %53 = tpu.reciprocal %52 {approx = true} : vector<5x1xf32> -> vector<5x1xf32>
    %54 = vector.broadcast %53 : vector<5x1xf32> to vector<5x5xf32>
    %55 = arith.mulf %50, %54 : vector<5x5xf32>
    %cst_21 = arith.constant dense<0.000000e+00> : vector<5x8xf32>
    %56 = tpu.matmul %55, %44, %cst_21 {dimension_numbers = #tpu.dot_dimension_numbers<[1], [0], [0], [1], [0, 0, 1, 1], [], []>} : vector<5x5xf32>, vector<5x8xf32>, vector<5x8xf32> -> vector<5x8xf32>
    %57 = vector.extract_strided_slice %9 {offsets = [0, 24], sizes = [5, 8], strides = [1, 1]} : vector<5x32xf32> to vector<5x8xf32>
    %58 = vector.extract_strided_slice %10 {offsets = [0, 24], sizes = [5, 8], strides = [1, 1]} : vector<5x32xf32> to vector<5x8xf32>
    %59 = vector.extract_strided_slice %11 {offsets = [0, 24], sizes = [5, 8], strides = [1, 1]} : vector<5x32xf32> to vector<5x8xf32>
    %cst_22 = arith.constant dense<0.000000e+00> : vector<5x5xf32>
    %60 = tpu.matmul %57, %58, %cst_22 {dimension_numbers = #tpu.dot_dimension_numbers<[1], [1], [0], [0], [0, 0, 1, 0], [], []>} : vector<5x8xf32>, vector<5x8xf32>, vector<5x5xf32> -> vector<5x5xf32>
    %cst_23 = arith.constant dense<0xFF800000> : vector<5xf32>
    %61 = vector.multi_reduction <maximumf>, %60, %cst_23 [1] : vector<5x5xf32> to vector<5xf32>
    %62 = vector.shape_cast %61 : vector<5xf32> to vector<5x1xf32>
    %63 = vector.broadcast %62 : vector<5x1xf32> to vector<5x5xf32>
    %64 = arith.subf %60, %63 : vector<5x5xf32>
    %65 = math.exp %64 : vector<5x5xf32>
    %cst_24 = arith.constant dense<0.000000e+00> : vector<5xf32>
    %66 = vector.multi_reduction <add>, %65, %cst_24 [1] : vector<5x5xf32> to vector<5xf32>
    %67 = vector.shape_cast %66 : vector<5xf32> to vector<5x1xf32>
    %68 = tpu.reciprocal %67 {approx = true} : vector<5x1xf32> -> vector<5x1xf32>
    %69 = vector.broadcast %68 : vector<5x1xf32> to vector<5x5xf32>
    %70 = arith.mulf %65, %69 : vector<5x5xf32>
    %cst_25 = arith.constant dense<0.000000e+00> : vector<5x8xf32>
    %71 = tpu.matmul %70, %59, %cst_25 {dimension_numbers = #tpu.dot_dimension_numbers<[1], [0], [0], [1], [0, 0, 1, 1], [], []>} : vector<5x5xf32>, vector<5x8xf32>, vector<5x8xf32> -> vector<5x8xf32>
    %72 = tpu.concatenate %26, %41, %56, %71 in 1 : vector<5x8xf32>, vector<5x8xf32>, vector<5x8xf32>, vector<5x8xf32> -> vector<5x32xf32>
    %cst_26 = arith.constant dense<0.000000e+00> : vector<5x32xf32>
    %73 = tpu.matmul %72, %4, %cst_26 {dimension_numbers = #tpu.dot_dimension_numbers<[1], [0], [0], [1], [0, 0, 1, 1], [], []>} : vector<5x32xf32>, vector<32x32xf32>, vector<5x32xf32> -> vector<5x32xf32>
    %74 = vector.broadcast %5 : vector<1x32xf32> to vector<5x32xf32>
    %75 = arith.addf %73, %74 : vector<5x32xf32>
    %76 = arith.addf %1, %75 : vector<5x32xf32>
    %c0_27 = arith.constant 0 : index
    %c0_28 = arith.constant 0 : index
    %77 = vector.load %arg10[%c0_27, %c0_28] : memref<1x32xf32, #tpu.memory_space<vmem>>, vector<1x32xf32>
    %c0_29 = arith.constant 0 : index
    %c0_30 = arith.constant 0 : index
    %78 = vector.load %arg11[%c0_29, %c0_30] : memref<1x32xf32, #tpu.memory_space<vmem>>, vector<1x32xf32>
    %cst_31 = arith.constant dense<0.000000e+00> : vector<5xf32>
    %79 = vector.multi_reduction <add>, %76, %cst_31 [1] : vector<5x32xf32> to vector<5xf32>
    %80 = vector.shape_cast %79 : vector<5xf32> to vector<5x1xf32>
    %cst_32 = arith.constant 3.200000e+01 : f32
    %81 = vector.broadcast %cst_32 : f32 to vector<5x1xf32>
    %82 = arith.divf %80, %81 : vector<5x1xf32>
    %83 = vector.broadcast %82 : vector<5x1xf32> to vector<5x32xf32>
    %84 = arith.subf %76, %83 : vector<5x32xf32>
    %85 = arith.mulf %84, %84 : vector<5x32xf32>
    %cst_33 = arith.constant dense<0.000000e+00> : vector<5xf32>
    %86 = vector.multi_reduction <add>, %85, %cst_33 [1] : vector<5x32xf32> to vector<5xf32>
    %87 = vector.shape_cast %86 : vector<5xf32> to vector<5x1xf32>
    %cst_34 = arith.constant 3.200000e+01 : f32
    %88 = vector.broadcast %cst_34 : f32 to vector<5x1xf32>
    %89 = arith.divf %87, %88 : vector<5x1xf32>
    %cst_35 = arith.constant 9.99999974E-6 : f32
    %90 = vector.broadcast %cst_35 : f32 to vector<5x1xf32>
    %91 = arith.addf %89, %90 : vector<5x1xf32>
    %92 = math.rsqrt %91 : vector<5x1xf32>
    %93 = vector.broadcast %92 : vector<5x1xf32> to vector<5x32xf32>
    %94 = arith.mulf %84, %93 : vector<5x32xf32>
    %95 = vector.broadcast %77 : vector<1x32xf32> to vector<5x32xf32>
    %96 = arith.mulf %94, %95 : vector<5x32xf32>
    %97 = vector.broadcast %78 : vector<1x32xf32> to vector<5x32xf32>
    %98 = arith.addf %96, %97 : vector<5x32xf32>
    %c0_36 = arith.constant 0 : index
    %c0_37 = arith.constant 0 : index
    %99 = vector.load %arg6[%c0_36, %c0_37] : memref<32x64xf32, #tpu.memory_space<vmem>>, vector<32x64xf32>
    %c0_38 = arith.constant 0 : index
    %c0_39 = arith.constant 0 : index
    %100 = vector.load %arg7[%c0_38, %c0_39] : memref<1x64xf32, #tpu.memory_space<vmem>>, vector<1x64xf32>
    %c0_40 = arith.constant 0 : index
    %c0_41 = arith.constant 0 : index
    %101 = vector.load %arg8[%c0_40, %c0_41] : memref<64x32xf32, #tpu.memory_space<vmem>>, vector<64x32xf32>
    %c0_42 = arith.constant 0 : index
    %c0_43 = arith.constant 0 : index
    %102 = vector.load %arg9[%c0_42, %c0_43] : memref<1x32xf32, #tpu.memory_space<vmem>>, vector<1x32xf32>
    %cst_44 = arith.constant dense<0.000000e+00> : vector<5x64xf32>
    %103 = tpu.matmul %98, %99, %cst_44 {dimension_numbers = #tpu.dot_dimension_numbers<[1], [0], [0], [1], [0, 0, 1, 1], [], []>} : vector<5x32xf32>, vector<32x64xf32>, vector<5x64xf32> -> vector<5x64xf32>
    %104 = vector.broadcast %100 : vector<1x64xf32> to vector<5x64xf32>
    %105 = arith.addf %103, %104 : vector<5x64xf32>
    %cst_45 = arith.constant 0.000000e+00 : f32
    %106 = vector.broadcast %cst_45 : f32 to vector<5x64xf32>
    %107 = arith.maximumf %105, %106 : vector<5x64xf32>
    %cst_46 = arith.constant dense<0.000000e+00> : vector<5x32xf32>
    %108 = tpu.matmul %107, %101, %cst_46 {dimension_numbers = #tpu.dot_dimension_numbers<[1], [0], [0], [1], [0, 0, 1, 1], [], []>} : vector<5x64xf32>, vector<64x32xf32>, vector<5x32xf32> -> vector<5x32xf32>
    %109 = vector.broadcast %102 : vector<1x32xf32> to vector<5x32xf32>
    %110 = arith.addf %108, %109 : vector<5x32xf32>
    %111 = arith.addf %98, %110 : vector<5x32xf32>
    %c0_47 = arith.constant 0 : index
    %c0_48 = arith.constant 0 : index
    %112 = vector.load %arg12[%c0_47, %c0_48] : memref<1x32xf32, #tpu.memory_space<vmem>>, vector<1x32xf32>
    %c0_49 = arith.constant 0 : index
    %c0_50 = arith.constant 0 : index
    %113 = vector.load %arg13[%c0_49, %c0_50] : memref<1x32xf32, #tpu.memory_space<vmem>>, vector<1x32xf32>
    %cst_51 = arith.constant dense<0.000000e+00> : vector<5xf32>
    %114 = vector.multi_reduction <add>, %111, %cst_51 [1] : vector<5x32xf32> to vector<5xf32>
    %115 = vector.shape_cast %114 : vector<5xf32> to vector<5x1xf32>
    %cst_52 = arith.constant 3.200000e+01 : f32
    %116 = vector.broadcast %cst_52 : f32 to vector<5x1xf32>
    %117 = arith.divf %115, %116 : vector<5x1xf32>
    %118 = vector.broadcast %117 : vector<5x1xf32> to vector<5x32xf32>
    %119 = arith.subf %111, %118 : vector<5x32xf32>
    %120 = arith.mulf %119, %119 : vector<5x32xf32>
    %cst_53 = arith.constant dense<0.000000e+00> : vector<5xf32>
    %121 = vector.multi_reduction <add>, %120, %cst_53 [1] : vector<5x32xf32> to vector<5xf32>
    %122 = vector.shape_cast %121 : vector<5xf32> to vector<5x1xf32>
    %cst_54 = arith.constant 3.200000e+01 : f32
    %123 = vector.broadcast %cst_54 : f32 to vector<5x1xf32>
    %124 = arith.divf %122, %123 : vector<5x1xf32>
    %cst_55 = arith.constant 9.99999974E-6 : f32
    %125 = vector.broadcast %cst_55 : f32 to vector<5x1xf32>
    %126 = arith.addf %124, %125 : vector<5x1xf32>
    %127 = math.rsqrt %126 : vector<5x1xf32>
    %128 = vector.broadcast %127 : vector<5x1xf32> to vector<5x32xf32>
    %129 = arith.mulf %119, %128 : vector<5x32xf32>
    %130 = vector.broadcast %112 : vector<1x32xf32> to vector<5x32xf32>
    %131 = arith.mulf %129, %130 : vector<5x32xf32>
    %132 = vector.broadcast %113 : vector<1x32xf32> to vector<5x32xf32>
    %133 = arith.addf %131, %132 : vector<5x32xf32>
    %c0_56 = arith.constant 0 : index
    %c0_57 = arith.constant 0 : index
    %c0_58 = arith.constant 0 : index
    %134 = vector.load %arg14[%c0_56, %c0_57, %c0_58] : memref<1x5x32xf32, #tpu.memory_space<vmem>>, vector<1x5x32xf32>
    %135 = vector.shape_cast %134 : vector<1x5x32xf32> to vector<5x32xf32>
    %136 = vector.shape_cast %133 : vector<5x32xf32> to vector<1x5x32xf32>
    tpu.vector_store %arg14[%c0_56, %c0_57, %c0_58], %136 {strides = array<i32>} : memref<1x5x32xf32, #tpu.memory_space<vmem>>, vector<1x5x32xf32>,
    return
  }
  func.func @transform_0(%arg0: i32) -> (i32, i32, i32) {
    %c0_i32 = arith.constant 0 : i32
    %c0_i32_0 = arith.constant 0 : i32
    %c0_i32_1 = arith.constant 0 : i32
    return %arg0, %c0_i32, %c0_i32_0 : i32, i32, i32
  }
  func.func @transform_1(%arg0: i32) -> (i32, i32) {
    %c0_i32 = arith.constant 0 : i32
    %c0_i32_0 = arith.constant 0 : i32
    %c0_i32_1 = arith.constant 0 : i32
    return %c0_i32, %c0_i32_0 : i32, i32
  }
  func.func @transform_2(%arg0: i32) -> (i32, i32) {
    %c0_i32 = arith.constant 0 : i32
    %c0_i32_0 = arith.constant 0 : i32
    %c0_i32_1 = arith.constant 0 : i32
    return %c0_i32, %c0_i32_0 : i32, i32
  }
  func.func @transform_3(%arg0: i32) -> (i32, i32) {
    %c0_i32 = arith.constant 0 : i32
    %c0_i32_0 = arith.constant 0 : i32
    %c0_i32_1 = arith.constant 0 : i32
    return %c0_i32, %c0_i32_0 : i32, i32
  }
  func.func @transform_4(%arg0: i32) -> (i32, i32) {
    %c0_i32 = arith.constant 0 : i32
    %c0_i32_0 = arith.constant 0 : i32
    %c0_i32_1 = arith.constant 0 : i32
    return %c0_i32, %c0_i32_0 : i32, i32
  }
  func.func @transform_5(%arg0: i32) -> (i32, i32) {
    %c0_i32 = arith.constant 0 : i32
    %c0_i32_0 = arith.constant 0 : i32
    %c0_i32_1 = arith.constant 0 : i32
    return %c0_i32, %c0_i32_0 : i32, i32
  }
  func.func @transform_6(%arg0: i32) -> (i32, i32) {
    %c0_i32 = arith.constant 0 : i32
    %c0_i32_0 = arith.constant 0 : i32
    %c0_i32_1 = arith.constant 0 : i32
    return %c0_i32, %c0_i32_0 : i32, i32
  }
  func.func @transform_7(%arg0: i32) -> (i32, i32) {
    %c0_i32 = arith.constant 0 : i32
    %c0_i32_0 = arith.constant 0 : i32
    %c0_i32_1 = arith.constant 0 : i32
    return %c0_i32, %c0_i32_0 : i32, i32
  }
  func.func @transform_8(%arg0: i32) -> (i32, i32) {
    %c0_i32 = arith.constant 0 : i32
    %c0_i32_0 = arith.constant 0 : i32
    %c0_i32_1 = arith.constant 0 : i32
    return %c0_i32, %c0_i32_0 : i32, i32
  }
  func.func @transform_9(%arg0: i32) -> (i32, i32) {
    %c0_i32 = arith.constant 0 : i32
    %c0_i32_0 = arith.constant 0 : i32
    %c0_i32_1 = arith.constant 0 : i32
    return %c0_i32, %c0_i32_0 : i32, i32
  }
  func.func @transform_10(%arg0: i32) -> (i32, i32) {
    %c0_i32 = arith.constant 0 : i32
    %c0_i32_0 = arith.constant 0 : i32
    %c0_i32_1 = arith.constant 0 : i32
    return %c0_i32, %c0_i32_0 : i32, i32
  }
  func.func @transform_11(%arg0: i32) -> (i32, i32) {
    %c0_i32 = arith.constant 0 : i32
    %c0_i32_0 = arith.constant 0 : i32
    %c0_i32_1 = arith.constant 0 : i32
    return %c0_i32, %c0_i32_0 : i32, i32
  }
  func.func @transform_12(%arg0: i32) -> (i32, i32) {
    %c0_i32 = arith.constant 0 : i32
    %c0_i32_0 = arith.constant 0 : i32
    %c0_i32_1 = arith.constant 0 : i32
    return %c0_i32, %c0_i32_0 : i32, i32
  }
  func.func @transform_13(%arg0: i32) -> (i32, i32, i32) {
    %c0_i32 = arith.constant 0 : i32
    %c0_i32_0 = arith.constant 0 : i32
    %c0_i32_1 = arith.constant 0 : i32
    return %arg0, %c0_i32, %c0_i32_0 : i32, i32, i32
  }
}

module attributes {stable_mosaic.version = 11 : i64} {
  func.func @_unembed_kernel(%arg0: i32, %arg1: memref<1x4x32xf32, #tpu.memory_space<vmem>>, %arg2: memref<32x192xf32, #tpu.memory_space<vmem>>, %arg3: memref<1x192xf32, #tpu.memory_space<vmem>>, %arg4: memref<1x4x192xf32, #tpu.memory_space<vmem>>) attributes {dimension_semantics = [#tpu.dimension_semantics<parallel>], iteration_bounds = array<i64: 2>, scalar_prefetch = 0 : i64, scratch_operands = 0 : i64, tpu.core_type = #tpu.core_type<tc>, window_params = [{transform_indices = @transform_0, window_bounds = array<i64: 1, 4, 32>}, {pipeline_mode = #tpu.pipeline_mode<synchronous>, transform_indices = @transform_1, window_bounds = array<i64: 32, 192>}, {pipeline_mode = #tpu.pipeline_mode<synchronous>, transform_indices = @transform_2, window_bounds = array<i64: 1, 192>}, {transform_indices = @transform_3, window_bounds = array<i64: 1, 4, 192>}]} {
    %c0 = arith.constant 0 : index
    %c0_0 = arith.constant 0 : index
    %c0_1 = arith.constant 0 : index
    %0 = vector.load %arg1[%c0, %c0_0, %c0_1] : memref<1x4x32xf32, #tpu.memory_space<vmem>>, vector<1x4x32xf32>
    %1 = vector.shape_cast %0 : vector<1x4x32xf32> to vector<4x32xf32>
    %c0_2 = arith.constant 0 : index
    %c0_3 = arith.constant 0 : index
    %2 = vector.load %arg2[%c0_2, %c0_3] : memref<32x192xf32, #tpu.memory_space<vmem>>, vector<32x192xf32>
    %cst = arith.constant dense<0.000000e+00> : vector<4x192xf32>
    %3 = tpu.matmul %1, %2, %cst {dimension_numbers = #tpu.dot_dimension_numbers<[1], [0], [0], [1], [0, 0, 1, 1], [], []>} : vector<4x32xf32>, vector<32x192xf32>, vector<4x192xf32> -> vector<4x192xf32>
    %c0_4 = arith.constant 0 : index
    %c0_5 = arith.constant 0 : index
    %4 = vector.load %arg3[%c0_4, %c0_5] : memref<1x192xf32, #tpu.memory_space<vmem>>, vector<1x192xf32>
    %5 = vector.broadcast %4 : vector<1x192xf32> to vector<4x192xf32>
    %6 = arith.addf %3, %5 : vector<4x192xf32>
    %c0_6 = arith.constant 0 : index
    %c0_7 = arith.constant 0 : index
    %c0_8 = arith.constant 0 : index
    %7 = vector.load %arg4[%c0_6, %c0_7, %c0_8] : memref<1x4x192xf32, #tpu.memory_space<vmem>>, vector<1x4x192xf32>
    %8 = vector.shape_cast %7 : vector<1x4x192xf32> to vector<4x192xf32>
    %9 = vector.shape_cast %6 : vector<4x192xf32> to vector<1x4x192xf32>
    tpu.vector_store %arg4[%c0_6, %c0_7, %c0_8], %9 {strides = array<i32>} : memref<1x4x192xf32, #tpu.memory_space<vmem>>, vector<1x4x192xf32>,
    return
  }
  func.func @transform_0(%arg0: i32) -> (i32, i32, i32) {
    %c0_i32 = arith.constant 0 : i32
    %c0_i32_0 = arith.constant 0 : i32
    %c0_i32_1 = arith.constant 0 : i32
    return %arg0, %c0_i32, %c0_i32_0 : i32, i32, i32
  }
  func.func @transform_1(%arg0: i32) -> (i32, i32) {
    %c0_i32 = arith.constant 0 : i32
    %c0_i32_0 = arith.constant 0 : i32
    %c0_i32_1 = arith.constant 0 : i32
    return %c0_i32, %c0_i32_0 : i32, i32
  }
  func.func @transform_2(%arg0: i32) -> (i32, i32) {
    %c0_i32 = arith.constant 0 : i32
    %c0_i32_0 = arith.constant 0 : i32
    %c0_i32_1 = arith.constant 0 : i32
    return %c0_i32, %c0_i32_0 : i32, i32
  }
  func.func @transform_3(%arg0: i32) -> (i32, i32, i32) {
    %c0_i32 = arith.constant 0 : i32
    %c0_i32_0 = arith.constant 0 : i32
    %c0_i32_1 = arith.constant 0 : i32
    return %arg0, %c0_i32, %c0_i32_0 : i32, i32, i32
  }
}

module attributes {stable_mosaic.version = 11 : i64} {
  func.func @_decoder_layer_kernel(%arg0: i32, %arg1: memref<1x4x32xf32, #tpu.memory_space<vmem>>, %arg2: memref<1x1x32xf32, #tpu.memory_space<vmem>>, %arg3: memref<32x96xf32, #tpu.memory_space<vmem>>, %arg4: memref<1x96xf32, #tpu.memory_space<vmem>>, %arg5: memref<32x32xf32, #tpu.memory_space<vmem>>, %arg6: memref<1x32xf32, #tpu.memory_space<vmem>>, %arg7: memref<32x32xf32, #tpu.memory_space<vmem>>, %arg8: memref<1x32xf32, #tpu.memory_space<vmem>>, %arg9: memref<32x32xf32, #tpu.memory_space<vmem>>, %arg10: memref<1x32xf32, #tpu.memory_space<vmem>>, %arg11: memref<32x64xf32, #tpu.memory_space<vmem>>, %arg12: memref<1x64xf32, #tpu.memory_space<vmem>>, %arg13: memref<64x32xf32, #tpu.memory_space<vmem>>, %arg14: memref<1x32xf32, #tpu.memory_space<vmem>>, %arg15: memref<1x32xf32, #tpu.memory_space<vmem>>, %arg16: memref<1x32xf32, #tpu.memory_space<vmem>>, %arg17: memref<1x32xf32, #tpu.memory_space<vmem>>, %arg18: memref<1x32xf32, #tpu.memory_space<vmem>>, %arg19: memref<1x32xf32, #tpu.memory_space<vmem>>, %arg20: memref<1x32xf32, #tpu.memory_space<vmem>>, %arg21: memref<1x4x32xf32, #tpu.memory_space<vmem>>) attributes {dimension_semantics = [#tpu.dimension_semantics<parallel>], iteration_bounds = array<i64: 2>, scalar_prefetch = 0 : i64, scratch_operands = 0 : i64, tpu.core_type = #tpu.core_type<tc>, window_params = [{transform_indices = @transform_0, window_bounds = array<i64: 1, 4, 32>}, {transform_indices = @transform_1, window_bounds = array<i64: 1, 1, 32>}, {pipeline_mode = #tpu.pipeline_mode<synchronous>, transform_indices = @transform_2, window_bounds = array<i64: 32, 96>}, {pipeline_mode = #tpu.pipeline_mode<synchronous>, transform_indices = @transform_3, window_bounds = array<i64: 1, 96>}, {pipeline_mode = #tpu.pipeline_mode<synchronous>, transform_indices = @transform_4, window_bounds = array<i64: 32, 32>}, {pipeline_mode = #tpu.pipeline_mode<synchronous>, transform_indices = @transform_5, window_bounds = array<i64: 1, 32>}, {pipeline_mode = #tpu.pipeline_mode<synchronous>, transform_indices = @transform_6, window_bounds = array<i64: 32, 32>}, {pipeline_mode = #tpu.pipeline_mode<synchronous>, transform_indices = @transform_7, window_bounds = array<i64: 1, 32>}, {pipeline_mode = #tpu.pipeline_mode<synchronous>, transform_indices = @transform_8, window_bounds = array<i64: 32, 32>}, {pipeline_mode = #tpu.pipeline_mode<synchronous>, transform_indices = @transform_9, window_bounds = array<i64: 1, 32>}, {pipeline_mode = #tpu.pipeline_mode<synchronous>, transform_indices = @transform_10, window_bounds = array<i64: 32, 64>}, {pipeline_mode = #tpu.pipeline_mode<synchronous>, transform_indices = @transform_11, window_bounds = array<i64: 1, 64>}, {pipeline_mode = #tpu.pipeline_mode<synchronous>, transform_indices = @transform_12, window_bounds = array<i64: 64, 32>}, {pipeline_mode = #tpu.pipeline_mode<synchronous>, transform_indices = @transform_13, window_bounds = array<i64: 1, 32>}, {pipeline_mode = #tpu.pipeline_mode<synchronous>, transform_indices = @transform_14, window_bounds = array<i64: 1, 32>}, {pipeline_mode = #tpu.pipeline_mode<synchronous>, transform_indices = @transform_15, window_bounds = array<i64: 1, 32>}, {pipeline_mode = #tpu.pipeline_mode<synchronous>, transform_indices = @transform_16, window_bounds = array<i64: 1, 32>}, {pipeline_mode = #tpu.pipeline_mode<synchronous>, transform_indices = @transform_17, window_bounds = array<i64: 1, 32>}, {pipeline_mode = #tpu.pipeline_mode<synchronous>, transform_indices = @transform_18, window_bounds = array<i64: 1, 32>}, {pipeline_mode = #tpu.pipeline_mode<synchronous>, transform_indices = @transform_19, window_bounds = array<i64: 1, 32>}, {transform_indices = @transform_20, window_bounds = array<i64: 1, 4, 32>}]} {
    %c0 = arith.constant 0 : index
    %c0_0 = arith.constant 0 : index
    %c0_1 = arith.constant 0 : index
    %0 = vector.load %arg1[%c0, %c0_0, %c0_1] : memref<1x4x32xf32, #tpu.memory_space<vmem>>, vector<1x4x32xf32>
    %1 = vector.shape_cast %0 : vector<1x4x32xf32> to vector<4x32xf32>
    %c0_2 = arith.constant 0 : index
    %c0_3 = arith.constant 0 : index
    %2 = vector.load %arg3[%c0_2, %c0_3] : memref<32x96xf32, #tpu.memory_space<vmem>>, vector<32x96xf32>
    %c0_4 = arith.constant 0 : index
    %c0_5 = arith.constant 0 : index
    %3 = vector.load %arg4[%c0_4, %c0_5] : memref<1x96xf32, #tpu.memory_space<vmem>>, vector<1x96xf32>
    %c0_6 = arith.constant 0 : index
    %c0_7 = arith.constant 0 : index
    %4 = vector.load %arg5[%c0_6, %c0_7] : memref<32x32xf32, #tpu.memory_space<vmem>>, vector<32x32xf32>
    %c0_8 = arith.constant 0 : index
    %c0_9 = arith.constant 0 : index
    %5 = vector.load %arg6[%c0_8, %c0_9] : memref<1x32xf32, #tpu.memory_space<vmem>>, vector<1x32xf32>
    %cst = arith.constant dense<0.000000e+00> : vector<4x96xf32>
    %6 = tpu.matmul %1, %2, %cst {dimension_numbers = #tpu.dot_dimension_numbers<[1], [0], [0], [1], [0, 0, 1, 1], [], []>} : vector<4x32xf32>, vector<32x96xf32>, vector<4x96xf32> -> vector<4x96xf32>
    %7 = vector.broadcast %3 : vector<1x96xf32> to vector<4x96xf32>
    %8 = arith.addf %6, %7 : vector<4x96xf32>
    %9 = vector.extract_strided_slice %8 {offsets = [0, 0], sizes = [4, 32], strides = [1, 1]} : vector<4x96xf32> to vector<4x32xf32>
    %10 = vector.extract_strided_slice %8 {offsets = [0, 32], sizes = [4, 32], strides = [1, 1]} : vector<4x96xf32> to vector<4x32xf32>
    %11 = vector.extract_strided_slice %8 {offsets = [0, 64], sizes = [4, 32], strides = [1, 1]} : vector<4x96xf32> to vector<4x32xf32>
    %12 = vector.extract_strided_slice %9 {offsets = [0, 0], sizes = [4, 8], strides = [1, 1]} : vector<4x32xf32> to vector<4x8xf32>
    %13 = vector.extract_strided_slice %10 {offsets = [0, 0], sizes = [4, 8], strides = [1, 1]} : vector<4x32xf32> to vector<4x8xf32>
    %14 = vector.extract_strided_slice %11 {offsets = [0, 0], sizes = [4, 8], strides = [1, 1]} : vector<4x32xf32> to vector<4x8xf32>
    %cst_10 = arith.constant dense<0.000000e+00> : vector<4x4xf32>
    %15 = tpu.matmul %12, %13, %cst_10 {dimension_numbers = #tpu.dot_dimension_numbers<[1], [1], [0], [0], [0, 0, 1, 0], [], []>} : vector<4x8xf32>, vector<4x8xf32>, vector<4x4xf32> -> vector<4x4xf32>
    %cst_11 = arith.constant dense<0xFF800000> : vector<4xf32>
    %16 = vector.multi_reduction <maximumf>, %15, %cst_11 [1] : vector<4x4xf32> to vector<4xf32>
    %17 = vector.shape_cast %16 : vector<4xf32> to vector<4x1xf32>
    %18 = vector.broadcast %17 : vector<4x1xf32> to vector<4x4xf32>
    %19 = arith.subf %15, %18 : vector<4x4xf32>
    %20 = math.exp %19 : vector<4x4xf32>
    %cst_12 = arith.constant dense<0.000000e+00> : vector<4xf32>
    %21 = vector.multi_reduction <add>, %20, %cst_12 [1] : vector<4x4xf32> to vector<4xf32>
    %22 = vector.shape_cast %21 : vector<4xf32> to vector<4x1xf32>
    %23 = tpu.reciprocal %22 {approx = true} : vector<4x1xf32> -> vector<4x1xf32>
    %24 = vector.broadcast %23 : vector<4x1xf32> to vector<4x4xf32>
    %25 = arith.mulf %20, %24 : vector<4x4xf32>
    %cst_13 = arith.constant dense<0.000000e+00> : vector<4x8xf32>
    %26 = tpu.matmul %25, %14, %cst_13 {dimension_numbers = #tpu.dot_dimension_numbers<[1], [0], [0], [1], [0, 0, 1, 1], [], []>} : vector<4x4xf32>, vector<4x8xf32>, vector<4x8xf32> -> vector<4x8xf32>
    %27 = vector.extract_strided_slice %9 {offsets = [0, 8], sizes = [4, 8], strides = [1, 1]} : vector<4x32xf32> to vector<4x8xf32>
    %28 = vector.extract_strided_slice %10 {offsets = [0, 8], sizes = [4, 8], strides = [1, 1]} : vector<4x32xf32> to vector<4x8xf32>
    %29 = vector.extract_strided_slice %11 {offsets = [0, 8], sizes = [4, 8], strides = [1, 1]} : vector<4x32xf32> to vector<4x8xf32>
    %cst_14 = arith.constant dense<0.000000e+00> : vector<4x4xf32>
    %30 = tpu.matmul %27, %28, %cst_14 {dimension_numbers = #tpu.dot_dimension_numbers<[1], [1], [0], [0], [0, 0, 1, 0], [], []>} : vector<4x8xf32>, vector<4x8xf32>, vector<4x4xf32> -> vector<4x4xf32>
    %cst_15 = arith.constant dense<0xFF800000> : vector<4xf32>
    %31 = vector.multi_reduction <maximumf>, %30, %cst_15 [1] : vector<4x4xf32> to vector<4xf32>
    %32 = vector.shape_cast %31 : vector<4xf32> to vector<4x1xf32>
    %33 = vector.broadcast %32 : vector<4x1xf32> to vector<4x4xf32>
    %34 = arith.subf %30, %33 : vector<4x4xf32>
    %35 = math.exp %34 : vector<4x4xf32>
    %cst_16 = arith.constant dense<0.000000e+00> : vector<4xf32>
    %36 = vector.multi_reduction <add>, %35, %cst_16 [1] : vector<4x4xf32> to vector<4xf32>
    %37 = vector.shape_cast %36 : vector<4xf32> to vector<4x1xf32>
    %38 = tpu.reciprocal %37 {approx = true} : vector<4x1xf32> -> vector<4x1xf32>
    %39 = vector.broadcast %38 : vector<4x1xf32> to vector<4x4xf32>
    %40 = arith.mulf %35, %39 : vector<4x4xf32>
    %cst_17 = arith.constant dense<0.000000e+00> : vector<4x8xf32>
    %41 = tpu.matmul %40, %29, %cst_17 {dimension_numbers = #tpu.dot_dimension_numbers<[1], [0], [0], [1], [0, 0, 1, 1], [], []>} : vector<4x4xf32>, vector<4x8xf32>, vector<4x8xf32> -> vector<4x8xf32>
    %42 = vector.extract_strided_slice %9 {offsets = [0, 16], sizes = [4, 8], strides = [1, 1]} : vector<4x32xf32> to vector<4x8xf32>
    %43 = vector.extract_strided_slice %10 {offsets = [0, 16], sizes = [4, 8], strides = [1, 1]} : vector<4x32xf32> to vector<4x8xf32>
    %44 = vector.extract_strided_slice %11 {offsets = [0, 16], sizes = [4, 8], strides = [1, 1]} : vector<4x32xf32> to vector<4x8xf32>
    %cst_18 = arith.constant dense<0.000000e+00> : vector<4x4xf32>
    %45 = tpu.matmul %42, %43, %cst_18 {dimension_numbers = #tpu.dot_dimension_numbers<[1], [1], [0], [0], [0, 0, 1, 0], [], []>} : vector<4x8xf32>, vector<4x8xf32>, vector<4x4xf32> -> vector<4x4xf32>
    %cst_19 = arith.constant dense<0xFF800000> : vector<4xf32>
    %46 = vector.multi_reduction <maximumf>, %45, %cst_19 [1] : vector<4x4xf32> to vector<4xf32>
    %47 = vector.shape_cast %46 : vector<4xf32> to vector<4x1xf32>
    %48 = vector.broadcast %47 : vector<4x1xf32> to vector<4x4xf32>
    %49 = arith.subf %45, %48 : vector<4x4xf32>
    %50 = math.exp %49 : vector<4x4xf32>
    %cst_20 = arith.constant dense<0.000000e+00> : vector<4xf32>
    %51 = vector.multi_reduction <add>, %50, %cst_20 [1] : vector<4x4xf32> to vector<4xf32>
    %52 = vector.shape_cast %51 : vector<4xf32> to vector<4x1xf32>
    %53 = tpu.reciprocal %52 {approx = true} : vector<4x1xf32> -> vector<4x1xf32>
    %54 = vector.broadcast %53 : vector<4x1xf32> to vector<4x4xf32>
    %55 = arith.mulf %50, %54 : vector<4x4xf32>
    %cst_21 = arith.constant dense<0.000000e+00> : vector<4x8xf32>
    %56 = tpu.matmul %55, %44, %cst_21 {dimension_numbers = #tpu.dot_dimension_numbers<[1], [0], [0], [1], [0, 0, 1, 1], [], []>} : vector<4x4xf32>, vector<4x8xf32>, vector<4x8xf32> -> vector<4x8xf32>
    %57 = vector.extract_strided_slice %9 {offsets = [0, 24], sizes = [4, 8], strides = [1, 1]} : vector<4x32xf32> to vector<4x8xf32>
    %58 = vector.extract_strided_slice %10 {offsets = [0, 24], sizes = [4, 8], strides = [1, 1]} : vector<4x32xf32> to vector<4x8xf32>
    %59 = vector.extract_strided_slice %11 {offsets = [0, 24], sizes = [4, 8], strides = [1, 1]} : vector<4x32xf32> to vector<4x8xf32>
    %cst_22 = arith.constant dense<0.000000e+00> : vector<4x4xf32>
    %60 = tpu.matmul %57, %58, %cst_22 {dimension_numbers = #tpu.dot_dimension_numbers<[1], [1], [0], [0], [0, 0, 1, 0], [], []>} : vector<4x8xf32>, vector<4x8xf32>, vector<4x4xf32> -> vector<4x4xf32>
    %cst_23 = arith.constant dense<0xFF800000> : vector<4xf32>
    %61 = vector.multi_reduction <maximumf>, %60, %cst_23 [1] : vector<4x4xf32> to vector<4xf32>
    %62 = vector.shape_cast %61 : vector<4xf32> to vector<4x1xf32>
    %63 = vector.broadcast %62 : vector<4x1xf32> to vector<4x4xf32>
    %64 = arith.subf %60, %63 : vector<4x4xf32>
    %65 = math.exp %64 : vector<4x4xf32>
    %cst_24 = arith.constant dense<0.000000e+00> : vector<4xf32>
    %66 = vector.multi_reduction <add>, %65, %cst_24 [1] : vector<4x4xf32> to vector<4xf32>
    %67 = vector.shape_cast %66 : vector<4xf32> to vector<4x1xf32>
    %68 = tpu.reciprocal %67 {approx = true} : vector<4x1xf32> -> vector<4x1xf32>
    %69 = vector.broadcast %68 : vector<4x1xf32> to vector<4x4xf32>
    %70 = arith.mulf %65, %69 : vector<4x4xf32>
    %cst_25 = arith.constant dense<0.000000e+00> : vector<4x8xf32>
    %71 = tpu.matmul %70, %59, %cst_25 {dimension_numbers = #tpu.dot_dimension_numbers<[1], [0], [0], [1], [0, 0, 1, 1], [], []>} : vector<4x4xf32>, vector<4x8xf32>, vector<4x8xf32> -> vector<4x8xf32>
    %72 = tpu.concatenate %26, %41, %56, %71 in 1 : vector<4x8xf32>, vector<4x8xf32>, vector<4x8xf32>, vector<4x8xf32> -> vector<4x32xf32>
    %cst_26 = arith.constant dense<0.000000e+00> : vector<4x32xf32>
    %73 = tpu.matmul %72, %4, %cst_26 {dimension_numbers = #tpu.dot_dimension_numbers<[1], [0], [0], [1], [0, 0, 1, 1], [], []>} : vector<4x32xf32>, vector<32x32xf32>, vector<4x32xf32> -> vector<4x32xf32>
    %74 = vector.broadcast %5 : vector<1x32xf32> to vector<4x32xf32>
    %75 = arith.addf %73, %74 : vector<4x32xf32>
    %76 = arith.addf %1, %75 : vector<4x32xf32>
    %c0_27 = arith.constant 0 : index
    %c0_28 = arith.constant 0 : index
    %77 = vector.load %arg15[%c0_27, %c0_28] : memref<1x32xf32, #tpu.memory_space<vmem>>, vector<1x32xf32>
    %c0_29 = arith.constant 0 : index
    %c0_30 = arith.constant 0 : index
    %78 = vector.load %arg16[%c0_29, %c0_30] : memref<1x32xf32, #tpu.memory_space<vmem>>, vector<1x32xf32>
    %cst_31 = arith.constant dense<0.000000e+00> : vector<4xf32>
    %79 = vector.multi_reduction <add>, %76, %cst_31 [1] : vector<4x32xf32> to vector<4xf32>
    %80 = vector.shape_cast %79 : vector<4xf32> to vector<4x1xf32>
    %cst_32 = arith.constant 3.200000e+01 : f32
    %81 = vector.broadcast %cst_32 : f32 to vector<4x1xf32>
    %82 = arith.divf %80, %81 : vector<4x1xf32>
    %83 = vector.broadcast %82 : vector<4x1xf32> to vector<4x32xf32>
    %84 = arith.subf %76, %83 : vector<4x32xf32>
    %85 = arith.mulf %84, %84 : vector<4x32xf32>
    %cst_33 = arith.constant dense<0.000000e+00> : vector<4xf32>
    %86 = vector.multi_reduction <add>, %85, %cst_33 [1] : vector<4x32xf32> to vector<4xf32>
    %87 = vector.shape_cast %86 : vector<4xf32> to vector<4x1xf32>
    %cst_34 = arith.constant 3.200000e+01 : f32
    %88 = vector.broadcast %cst_34 : f32 to vector<4x1xf32>
    %89 = arith.divf %87, %88 : vector<4x1xf32>
    %cst_35 = arith.constant 9.99999974E-6 : f32
    %90 = vector.broadcast %cst_35 : f32 to vector<4x1xf32>
    %91 = arith.addf %89, %90 : vector<4x1xf32>
    %92 = math.rsqrt %91 : vector<4x1xf32>
    %93 = vector.broadcast %92 : vector<4x1xf32> to vector<4x32xf32>
    %94 = arith.mulf %84, %93 : vector<4x32xf32>
    %95 = vector.broadcast %77 : vector<1x32xf32> to vector<4x32xf32>
    %96 = arith.mulf %94, %95 : vector<4x32xf32>
    %97 = vector.broadcast %78 : vector<1x32xf32> to vector<4x32xf32>
    %98 = arith.addf %96, %97 : vector<4x32xf32>
    %c0_36 = arith.constant 0 : index
    %c0_37 = arith.constant 0 : index
    %c0_38 = arith.constant 0 : index
    %99 = vector.load %arg2[%c0_36, %c0_37, %c0_38] : memref<1x1x32xf32, #tpu.memory_space<vmem>>, vector<1x1x32xf32>
    %100 = vector.shape_cast %99 : vector<1x1x32xf32> to vector<1x32xf32>
    %c0_39 = arith.constant 0 : index
    %c0_40 = arith.constant 0 : index
    %101 = vector.load %arg7[%c0_39, %c0_40] : memref<32x32xf32, #tpu.memory_space<vmem>>, vector<32x32xf32>
    %cst_41 = arith.constant dense<0.000000e+00> : vector<1x32xf32>
    %102 = tpu.matmul %100, %101, %cst_41 {dimension_numbers = #tpu.dot_dimension_numbers<[1], [0], [0], [1], [0, 0, 1, 1], [], []>} : vector<1x32xf32>, vector<32x32xf32>, vector<1x32xf32> -> vector<1x32xf32>
    %c0_42 = arith.constant 0 : index
    %c0_43 = arith.constant 0 : index
    %103 = vector.load %arg8[%c0_42, %c0_43] : memref<1x32xf32, #tpu.memory_space<vmem>>, vector<1x32xf32>
    %104 = arith.addf %102, %103 : vector<1x32xf32>
    %c0_44 = arith.constant 0 : index
    %c0_45 = arith.constant 0 : index
    %105 = vector.load %arg9[%c0_44, %c0_45] : memref<32x32xf32, #tpu.memory_space<vmem>>, vector<32x32xf32>
    %cst_46 = arith.constant dense<0.000000e+00> : vector<1x32xf32>
    %106 = tpu.matmul %104, %105, %cst_46 {dimension_numbers = #tpu.dot_dimension_numbers<[1], [0], [0], [1], [0, 0, 1, 1], [], []>} : vector<1x32xf32>, vector<32x32xf32>, vector<1x32xf32> -> vector<1x32xf32>
    %c0_47 = arith.constant 0 : index
    %c0_48 = arith.constant 0 : index
    %107 = vector.load %arg10[%c0_47, %c0_48] : memref<1x32xf32, #tpu.memory_space<vmem>>, vector<1x32xf32>
    %108 = arith.addf %106, %107 : vector<1x32xf32>
    %109 = vector.broadcast %108 : vector<1x32xf32> to vector<4x32xf32>
    %110 = arith.addf %98, %109 : vector<4x32xf32>
    %c0_49 = arith.constant 0 : index
    %c0_50 = arith.constant 0 : index
    %111 = vector.load %arg17[%c0_49, %c0_50] : memref<1x32xf32, #tpu.memory_space<vmem>>, vector<1x32xf32>
    %c0_51 = arith.constant 0 : index
    %c0_52 = arith.constant 0 : index
    %112 = vector.load %arg18[%c0_51, %c0_52] : memref<1x32xf32, #tpu.memory_space<vmem>>, vector<1x32xf32>
    %cst_53 = arith.constant dense<0.000000e+00> : vector<4xf32>
    %113 = vector.multi_reduction <add>, %110, %cst_53 [1] : vector<4x32xf32> to vector<4xf32>
    %114 = vector.shape_cast %113 : vector<4xf32> to vector<4x1xf32>
    %cst_54 = arith.constant 3.200000e+01 : f32
    %115 = vector.broadcast %cst_54 : f32 to vector<4x1xf32>
    %116 = arith.divf %114, %115 : vector<4x1xf32>
    %117 = vector.broadcast %116 : vector<4x1xf32> to vector<4x32xf32>
    %118 = arith.subf %110, %117 : vector<4x32xf32>
    %119 = arith.mulf %118, %118 : vector<4x32xf32>
    %cst_55 = arith.constant dense<0.000000e+00> : vector<4xf32>
    %120 = vector.multi_reduction <add>, %119, %cst_55 [1] : vector<4x32xf32> to vector<4xf32>
    %121 = vector.shape_cast %120 : vector<4xf32> to vector<4x1xf32>
    %cst_56 = arith.constant 3.200000e+01 : f32
    %122 = vector.broadcast %cst_56 : f32 to vector<4x1xf32>
    %123 = arith.divf %121, %122 : vector<4x1xf32>
    %cst_57 = arith.constant 9.99999974E-6 : f32
    %124 = vector.broadcast %cst_57 : f32 to vector<4x1xf32>
    %125 = arith.addf %123, %124 : vector<4x1xf32>
    %126 = math.rsqrt %125 : vector<4x1xf32>
    %127 = vector.broadcast %126 : vector<4x1xf32> to vector<4x32xf32>
    %128 = arith.mulf %118, %127 : vector<4x32xf32>
    %129 = vector.broadcast %111 : vector<1x32xf32> to vector<4x32xf32>
    %130 = arith.mulf %128, %129 : vector<4x32xf32>
    %131 = vector.broadcast %112 : vector<1x32xf32> to vector<4x32xf32>
    %132 = arith.addf %130, %131 : vector<4x32xf32>
    %c0_58 = arith.constant 0 : index
    %c0_59 = arith.constant 0 : index
    %133 = vector.load %arg11[%c0_58, %c0_59] : memref<32x64xf32, #tpu.memory_space<vmem>>, vector<32x64xf32>
    %c0_60 = arith.constant 0 : index
    %c0_61 = arith.constant 0 : index
    %134 = vector.load %arg12[%c0_60, %c0_61] : memref<1x64xf32, #tpu.memory_space<vmem>>, vector<1x64xf32>
    %c0_62 = arith.constant 0 : index
    %c0_63 = arith.constant 0 : index
    %135 = vector.load %arg13[%c0_62, %c0_63] : memref<64x32xf32, #tpu.memory_space<vmem>>, vector<64x32xf32>
    %c0_64 = arith.constant 0 : index
    %c0_65 = arith.constant 0 : index
    %136 = vector.load %arg14[%c0_64, %c0_65] : memref<1x32xf32, #tpu.memory_space<vmem>>, vector<1x32xf32>
    %cst_66 = arith.constant dense<0.000000e+00> : vector<4x64xf32>
    %137 = tpu.matmul %132, %133, %cst_66 {dimension_numbers = #tpu.dot_dimension_numbers<[1], [0], [0], [1], [0, 0, 1, 1], [], []>} : vector<4x32xf32>, vector<32x64xf32>, vector<4x64xf32> -> vector<4x64xf32>
    %138 = vector.broadcast %134 : vector<1x64xf32> to vector<4x64xf32>
    %139 = arith.addf %137, %138 : vector<4x64xf32>
    %cst_67 = arith.constant 0.000000e+00 : f32
    %140 = vector.broadcast %cst_67 : f32 to vector<4x64xf32>
    %141 = arith.maximumf %139, %140 : vector<4x64xf32>
    %cst_68 = arith.constant dense<0.000000e+00> : vector<4x32xf32>
    %142 = tpu.matmul %141, %135, %cst_68 {dimension_numbers = #tpu.dot_dimension_numbers<[1], [0], [0], [1], [0, 0, 1, 1], [], []>} : vector<4x64xf32>, vector<64x32xf32>, vector<4x32xf32> -> vector<4x32xf32>
    %143 = vector.broadcast %136 : vector<1x32xf32> to vector<4x32xf32>
    %144 = arith.addf %142, %143 : vector<4x32xf32>
    %145 = arith.addf %132, %144 : vector<4x32xf32>
    %c0_69 = arith.constant 0 : index
    %c0_70 = arith.constant 0 : index
    %146 = vector.load %arg19[%c0_69, %c0_70] : memref<1x32xf32, #tpu.memory_space<vmem>>, vector<1x32xf32>
    %c0_71 = arith.constant 0 : index
    %c0_72 = arith.constant 0 : index
    %147 = vector.load %arg20[%c0_71, %c0_72] : memref<1x32xf32, #tpu.memory_space<vmem>>, vector<1x32xf32>
    %cst_73 = arith.constant dense<0.000000e+00> : vector<4xf32>
    %148 = vector.multi_reduction <add>, %145, %cst_73 [1] : vector<4x32xf32> to vector<4xf32>
    %149 = vector.shape_cast %148 : vector<4xf32> to vector<4x1xf32>
    %cst_74 = arith.constant 3.200000e+01 : f32
    %150 = vector.broadcast %cst_74 : f32 to vector<4x1xf32>
    %151 = arith.divf %149, %150 : vector<4x1xf32>
    %152 = vector.broadcast %151 : vector<4x1xf32> to vector<4x32xf32>
    %153 = arith.subf %145, %152 : vector<4x32xf32>
    %154 = arith.mulf %153, %153 : vector<4x32xf32>
    %cst_75 = arith.constant dense<0.000000e+00> : vector<4xf32>
    %155 = vector.multi_reduction <add>, %154, %cst_75 [1] : vector<4x32xf32> to vector<4xf32>
    %156 = vector.shape_cast %155 : vector<4xf32> to vector<4x1xf32>
    %cst_76 = arith.constant 3.200000e+01 : f32
    %157 = vector.broadcast %cst_76 : f32 to vector<4x1xf32>
    %158 = arith.divf %156, %157 : vector<4x1xf32>
    %cst_77 = arith.constant 9.99999974E-6 : f32
    %159 = vector.broadcast %cst_77 : f32 to vector<4x1xf32>
    %160 = arith.addf %158, %159 : vector<4x1xf32>
    %161 = math.rsqrt %160 : vector<4x1xf32>
    %162 = vector.broadcast %161 : vector<4x1xf32> to vector<4x32xf32>
    %163 = arith.mulf %153, %162 : vector<4x32xf32>
    %164 = vector.broadcast %146 : vector<1x32xf32> to vector<4x32xf32>
    %165 = arith.mulf %163, %164 : vector<4x32xf32>
    %166 = vector.broadcast %147 : vector<1x32xf32> to vector<4x32xf32>
    %167 = arith.addf %165, %166 : vector<4x32xf32>
    %c0_78 = arith.constant 0 : index
    %c0_79 = arith.constant 0 : index
    %c0_80 = arith.constant 0 : index
    %168 = vector.load %arg21[%c0_78, %c0_79, %c0_80] : memref<1x4x32xf32, #tpu.memory_space<vmem>>, vector<1x4x32xf32>
    %169 = vector.shape_cast %168 : vector<1x4x32xf32> to vector<4x32xf32>
    %170 = vector.shape_cast %167 : vector<4x32xf32> to vector<1x4x32xf32>
    tpu.vector_store %arg21[%c0_78, %c0_79, %c0_80], %170 {strides = array<i32>} : memref<1x4x32xf32, #tpu.memory_space<vmem>>, vector<1x4x32xf32>,
    return
  }
  func.func @transform_0(%arg0: i32) -> (i32, i32, i32) {
    %c0_i32 = arith.constant 0 : i32
    %c0_i32_0 = arith.constant 0 : i32
    %c0_i32_1 = arith.constant 0 : i32
    return %arg0, %c0_i32, %c0_i32_0 : i32, i32, i32
  }
  func.func @transform_1(%arg0: i32) -> (i32, i32, i32) {
    %c0_i32 = arith.constant 0 : i32
    %c0_i32_0 = arith.constant 0 : i32
    %c0_i32_1 = arith.constant 0 : i32
    return %arg0, %c0_i32, %c0_i32_0 : i32, i32, i32
  }
  func.func @transform_2(%arg0: i32) -> (i32, i32) {
    %c0_i32 = arith.constant 0 : i32
    %c0_i32_0 = arith.constant 0 : i32
    %c0_i32_1 = arith.constant 0 : i32
    return %c0_i32, %c0_i32_0 : i32, i32
  }
  func.func @transform_3(%arg0: i32) -> (i32, i32) {
    %c0_i32 = arith.constant 0 : i32
    %c0_i32_0 = arith.constant 0 : i32
    %c0_i32_1 = arith.constant 0 : i32
    return %c0_i32, %c0_i32_0 : i32, i32
  }
  func.func @transform_4(%arg0: i32) -> (i32, i32) {
    %c0_i32 = arith.constant 0 : i32
    %c0_i32_0 = arith.constant 0 : i32
    %c0_i32_1 = arith.constant 0 : i32
    return %c0_i32, %c0_i32_0 : i32, i32
  }
  func.func @transform_5(%arg0: i32) -> (i32, i32) {
    %c0_i32 = arith.constant 0 : i32
    %c0_i32_0 = arith.constant 0 : i32
    %c0_i32_1 = arith.constant 0 : i32
    return %c0_i32, %c0_i32_0 : i32, i32
  }
  func.func @transform_6(%arg0: i32) -> (i32, i32) {
    %c0_i32 = arith.constant 0 : i32
    %c0_i32_0 = arith.constant 0 : i32
    %c0_i32_1 = arith.constant 0 : i32
    return %c0_i32, %c0_i32_0 : i32, i32
  }
  func.func @transform_7(%arg0: i32) -> (i32, i32) {
    %c0_i32 = arith.constant 0 : i32
    %c0_i32_0 = arith.constant 0 : i32
    %c0_i32_1 = arith.constant 0 : i32
    return %c0_i32, %c0_i32_0 : i32, i32
  }
  func.func @transform_8(%arg0: i32) -> (i32, i32) {
    %c0_i32 = arith.constant 0 : i32
    %c0_i32_0 = arith.constant 0 : i32
    %c0_i32_1 = arith.constant 0 : i32
    return %c0_i32, %c0_i32_0 : i32, i32
  }
  func.func @transform_9(%arg0: i32) -> (i32, i32) {
    %c0_i32 = arith.constant 0 : i32
    %c0_i32_0 = arith.constant 0 : i32
    %c0_i32_1 = arith.constant 0 : i32
    return %c0_i32, %c0_i32_0 : i32, i32
  }
  func.func @transform_10(%arg0: i32) -> (i32, i32) {
    %c0_i32 = arith.constant 0 : i32
    %c0_i32_0 = arith.constant 0 : i32
    %c0_i32_1 = arith.constant 0 : i32
    return %c0_i32, %c0_i32_0 : i32, i32
  }
  func.func @transform_11(%arg0: i32) -> (i32, i32) {
    %c0_i32 = arith.constant 0 : i32
    %c0_i32_0 = arith.constant 0 : i32
    %c0_i32_1 = arith.constant 0 : i32
    return %c0_i32, %c0_i32_0 : i32, i32
  }
  func.func @transform_12(%arg0: i32) -> (i32, i32) {
    %c0_i32 = arith.constant 0 : i32
    %c0_i32_0 = arith.constant 0 : i32
    %c0_i32_1 = arith.constant 0 : i32
    return %c0_i32, %c0_i32_0 : i32, i32
  }
  func.func @transform_13(%arg0: i32) -> (i32, i32) {
    %c0_i32 = arith.constant 0 : i32
    %c0_i32_0 = arith.constant 0 : i32
    %c0_i32_1 = arith.constant 0 : i32
    return %c0_i32, %c0_i32_0 : i32, i32
  }
  func.func @transform_14(%arg0: i32) -> (i32, i32) {
    %c0_i32 = arith.constant 0 : i32
    %c0_i32_0 = arith.constant 0 : i32
    %c0_i32_1 = arith.constant 0 : i32
    return %c0_i32, %c0_i32_0 : i32, i32
  }
  func.func @transform_15(%arg0: i32) -> (i32, i32) {
    %c0_i32 = arith.constant 0 : i32
    %c0_i32_0 = arith.constant 0 : i32
    %c0_i32_1 = arith.constant 0 : i32
    return %c0_i32, %c0_i32_0 : i32, i32
  }
  func.func @transform_16(%arg0: i32) -> (i32, i32) {
    %c0_i32 = arith.constant 0 : i32
    %c0_i32_0 = arith.constant 0 : i32
    %c0_i32_1 = arith.constant 0 : i32
    return %c0_i32, %c0_i32_0 : i32, i32
  }
  func.func @transform_17(%arg0: i32) -> (i32, i32) {
    %c0_i32 = arith.constant 0 : i32
    %c0_i32_0 = arith.constant 0 : i32
    %c0_i32_1 = arith.constant 0 : i32
    return %c0_i32, %c0_i32_0 : i32, i32
  }
  func.func @transform_18(%arg0: i32) -> (i32, i32) {
    %c0_i32 = arith.constant 0 : i32
    %c0_i32_0 = arith.constant 0 : i32
    %c0_i32_1 = arith.constant 0 : i32
    return %c0_i32, %c0_i32_0 : i32, i32
  }
  func.func @transform_19(%arg0: i32) -> (i32, i32) {
    %c0_i32 = arith.constant 0 : i32
    %c0_i32_0 = arith.constant 0 : i32
    %c0_i32_1 = arith.constant 0 : i32
    return %c0_i32, %c0_i32_0 : i32, i32
  }
  func.func @transform_20(%arg0: i32) -> (i32, i32, i32) {
    %c0_i32 = arith.constant 0 : i32
    %c0_i32_0 = arith.constant 0 : i32
    %c0_i32_1 = arith.constant 0 : i32
    return %arg0, %c0_i32, %c0_i32_0 : i32, i32, i32
  }
}

</mosaic_0001>

<llo_original>
// kernel: autoencoder_forward.11
$region0: #{autoencoder_forward.11}
  #allocation0 [shape = 'u32[]', space=smem, size = 0x4, offset = 0x4, fixed_abs, tag = 'smem constant byte address 0x4 - core index']
  #allocation1 [shape = 'u32[144,128]{1,0:T(1,128)}', space=vmem, size = 0x12000, scoped, tag = 'internal scratch']
  %s0 = inlined_call_operand.vmem [shape: f32[2,4,32], index: 0, kind: input, shape index: {}]
  %s1 = inlined_call_operand.vmem [shape: f32[32,192], index: 1, kind: input, shape index: {}]
  %s2 = inlined_call_operand.vmem [shape: f32[1,192], index: 2, kind: input, shape index: {}]
  %s3 = inlined_call_operand.vmem [shape: f32[2,4,192], index: 3, kind: output, shape index: {}]
  %s4 = sld [smem:[#allocation0]]
  $region45: #{autoencoder_forward.11} parent=0
    _
  %s6 = ssub.s32 1, %s4
  %s7 = scalar_select 0, %s6, %s4
  loop: start=0, step=1, limit=4
  $region2: #{autoencoder_forward.11} parent=0 // loop_pre_header
    _
  $region3: #{autoencoder_forward.11} parent=0 // loop_header
    %s9 = sphi 0, %s13
    %p10 = scmp.ge.s32.totalorder %s9, 4
    %s19 = sphi 0, %s21
    %s22 = sphi 0, %s19
    %s23 = sphi 0, %s22
    %s39 = sphi 0, %s23
    %s43 = sphi 0, %s43
    %s45 = sphi 0, %s43
    %s46 = sphi 0, %s45
    %s60 = sphi 0, %s46
    %s64 = sphi 0, %s64
    %s66 = sphi 0, %s64
    %s67 = sphi 0, %s66
    %s81 = sphi 0, %s67
    %s87 = sphi 0, %s89
    %s90 = sphi 0, %s87
    %s91 = sphi 0, %s90
    %s107 = sphi 0, %s91
  $region4: #{autoencoder_forward.11} parent=0 // loop_header_branch
    %12 = sbr.rel (%p10) target = $region8
  $region5: #{autoencoder_forward.11} parent=0 // loop_body
    %s14 = ssub.s32 %s9, 1
    %s15 = ssub.s32 %s9, 2
    %s16 = sadd.s32 %s9, 1
    %s17 = ssub.s32 %s9, %s16
    %p18 = scmp.eq.s32.totalorder %s17, 0
    %s20 = sadd.s32 %s19, 1
    %s21 = scalar_select %p18, %s19, %s20
    %p24 = pneg %p18
    %p25 = scmp.eq.s32.totalorder %s9, 1
    %p26 = por %p24, %p25
    %p27 = scmp.ne.s32.totalorder %s19, %s22
    %p28 = scmp.eq.s32.totalorder %s9, 0
    %p29 = por %p27, %p28
    %p30 = scmp.ne.s32.totalorder %s19, %s22
    %p31 = scmp.eq.s32.totalorder %s14, 1
    %p32 = por %p30, %p31
    %p33 = scmp.ne.s32.totalorder %s22, %s23
    %p34 = scmp.eq.s32.totalorder %s14, 0
    %p35 = por %p33, %p34
    %p36 = scmp.ne.s32.totalorder %s22, %s23
    %p37 = scmp.eq.s32.totalorder %s15, 1
    %p38 = por %p36, %p37
    %p40 = scmp.ne.s32.totalorder %s23, %s39
    %p41 = scmp.eq.s32.totalorder %s15, 0
    %p42 = por %p40, %p41
    %s44 = sadd.s32 %s43, 1
    %p47 = scmp.eq.s32.totalorder %s9, 1
    %p48 = scmp.ne.s32.totalorder %s43, %s45
    %p49 = scmp.eq.s32.totalorder %s9, 0
    %p50 = por %p48, %p49
    %p51 = scmp.ne.s32.totalorder %s43, %s45
    %p52 = scmp.eq.s32.totalorder %s14, 1
    %p53 = por %p51, %p52
    %p54 = scmp.ne.s32.totalorder %s45, %s46
    %p55 = scmp.eq.s32.totalorder %s14, 0
    %p56 = por %p54, %p55
    %p57 = scmp.ne.s32.totalorder %s45, %s46
    %p58 = scmp.eq.s32.totalorder %s15, 1
    %p59 = por %p57, %p58
    %p61 = scmp.ne.s32.totalorder %s46, %s60
    %p62 = scmp.eq.s32.totalorder %s15, 0
    %p63 = por %p61, %p62
    %s65 = sadd.s32 %s64, 1
    %p68 = scmp.eq.s32.totalorder %s9, 1
    %p69 = scmp.ne.s32.totalorder %s64, %s66
    %p70 = scmp.eq.s32.totalorder %s9, 0
    %p71 = por %p69, %p70
    %p72 = scmp.ne.s32.totalorder %s64, %s66
    %p73 = scmp.eq.s32.totalorder %s14, 1
    %p74 = por %p72, %p73
    %p75 = scmp.ne.s32.totalorder %s66, %s67
    %p76 = scmp.eq.s32.totalorder %s14, 0
    %p77 = por %p75, %p76
    %p78 = scmp.ne.s32.totalorder %s66, %s67
    %p79 = scmp.eq.s32.totalorder %s15, 1
    %p80 = por %p78, %p79
    %p82 = scmp.ne.s32.totalorder %s67, %s81
    %p83 = scmp.eq.s32.totalorder %s15, 0
    %p84 = por %p82, %p83
    %s85 = ssub.s32 %s9, %s16
    %p86 = scmp.eq.s32.totalorder %s85, 0
    %s88 = sadd.s32 %s87, 1
    %s89 = scalar_select %p86, %s87, %s88
    %p92 = pneg %p86
    %p93 = scmp.eq.s32.totalorder %s9, 1
    %p94 = por %p92, %p93
    %p95 = scmp.ne.s32.totalorder %s87, %s90
    %p96 = scmp.eq.s32.totalorder %s9, 0
    %p97 = por %p95, %p96
    %p98 = scmp.ne.s32.totalorder %s87, %s90
    %p99 = scmp.eq.s32.totalorder %s14, 1
    %p100 = por %p98, %p99
    %p101 = scmp.ne.s32.totalorder %s90, %s91
    %p102 = scmp.eq.s32.totalorder %s14, 0
    %p103 = por %p101, %p102
    %p104 = scmp.ne.s32.totalorder %s90, %s91
    %p105 = scmp.eq.s32.totalorder %s15, 1
    %p106 = por %p104, %p105
    %p108 = scmp.ne.s32.totalorder %s91, %s107
    %p109 = scmp.eq.s32.totalorder %s15, 0
    %p110 = por %p108, %p109
    %p111 = scmp.le.s32.totalorder 1, %s9
    %p112 = scmp.lt.s32.totalorder %s9, 3
    %p113 = pnand %p111, %p112
    %p114 = pneg %p113
    // Predicated region
    $region9: #{autoencoder_forward.11} parent=5 // pred_check
      _
    $region10: #{autoencoder_forward.11} parent=5 // pred_check_branch
      %116 = sbr.rel (%p113) target = $region12
    $region11: #{autoencoder_forward.11} parent=5 // pred_region
      %s117 = ssub.s32 %s9, 1
      // Predicated region
      $region13: #{autoencoder_forward.11} parent=11 // pred_check
        %p118 = pneg %p56
      $region14: #{autoencoder_forward.11} parent=11 // pred_check_branch
        %120 = sbr.rel (%p118) target = $region16
      $region15: #{autoencoder_forward.11} parent=11 // pred_region
        _
      $region16: #{autoencoder_forward.11} parent=11 // pred_fallthru
        _
      // Predicated region
      $region17: #{autoencoder_forward.11} parent=11 // pred_check
        %p121 = pneg %p77
      $region18: #{autoencoder_forward.11} parent=11 // pred_check_branch
        %123 = sbr.rel (%p121) target = $region20
      $region19: #{autoencoder_forward.11} parent=11 // pred_region
        _
      $region20: #{autoencoder_forward.11} parent=11 // pred_fallthru
        _
    $region12: #{autoencoder_forward.11} parent=5 // pred_fallthru
      _
    %p124 = scmp.lt.s32.totalorder %s9, 2
    // Predicated region
    $region21: #{autoencoder_forward.11} parent=5 // pred_check
      %p125 = pneg %p124
    $region22: #{autoencoder_forward.11} parent=5 // pred_check_branch
      %127 = sbr.rel (%p125) target = $region24
    $region23: #{autoencoder_forward.11} parent=5 // pred_region
      // Predicated region
      $region25: #{autoencoder_forward.11} parent=23 // pred_check
        %p128 = pneg %p29
      $region26: #{autoencoder_forward.11} parent=23 // pred_check_branch
        %130 = sbr.rel (%p128) target = $region28
      $region27: #{autoencoder_forward.11} parent=23 // pred_region
        %p131 = scmp.lt.s32.totalorder %s9, 1
        %s132 = scalar_select %p131, %s9, 1
        %s133 = smul.addr %s132, 4
        %s134 = scalar_lea.vmem %s0, %s133
      $region28: #{autoencoder_forward.11} parent=23 // pred_fallthru
        _
    $region24: #{autoencoder_forward.11} parent=5 // pred_fallthru
      _
    %p135 = scmp.le.s32.totalorder 1, %s9
    %p136 = scmp.lt.s32.totalorder %s9, 3
    %p137 = pnand %p135, %p136
    %p138 = pneg %p137
    // Predicated region
    $region29: #{autoencoder_forward.11} parent=5 // pred_check
      _
    $region30: #{autoencoder_forward.11} parent=5 // pred_check_branch
      %140 = sbr.rel (%p137) target = $region32
    $region31: #{autoencoder_forward.11} parent=5 // pred_region
      %s141 = ssub.s32 %s9, 1
      %p142 = scmp.lt.s32.totalorder %s14, 1
      %s143 = scalar_select %p142, %s14, 1
      %s144 = smul.addr %s143, 4
      %s145 = scalar_lea.vmem %s0, %s144
      %p146 = pneg %p35
      %p147 = pneg %p32
      %p148 = pneg %p56
      %p149 = pneg %p53
      %p150 = pneg %p77
      %p151 = pneg %p74
      %p152 = pneg %p103
      %p153 = pneg %p100
      %p154 = scmp.lt.s32.totalorder %s14, 1
      %s155 = scalar_select %p154, %s14, 1
      %s156 = smul.addr %s155, 2
      %s157 = smul.addr %s156, 4
      %s158 = scalar_lea.vmem %s3, %s157
      %p159 = scmp.lt.s32.totalorder %s14, 1
      %s160 = scalar_select %p159, %s14, 1
      %s161 = smul.addr %s160, 4
      %s162 = scalar_lea.vmem %s0, %s161
      %p163 = scmp.lt.s32.totalorder %s14, 1
      %s164 = scalar_select %p163, %s14, 1
      %s165 = smul.addr %s164, 2
      %s166 = smul.addr %s165, 4
      %s167 = scalar_lea.vmem %s3, %s166
      %v168 = vld [vmem:[%s162] sm:$0xf]
      %v169 = vld [vmem:[%s1] sm:$0xff]
      %v170 = vld [vmem:[%s1 + $0x8] sm:$0xff]
      %v171 = vld [vmem:[%s1 + $0x10] sm:$0xff]
      %v172 = vld [vmem:[%s1 + $0x18] sm:$0xff]
      %v173 = vld [vmem:[%s1 + $0x20] sm:$0xff]
      %v174 = vld [vmem:[%s1 + $0x28] sm:$0xff]
      %v175 = vld [vmem:[%s1 + $0x30] sm:$0xff]
      %v176 = vld [vmem:[%s1 + $0x38] sm:$0xff]
      %v177 = vld [vmem:[%s2] sm:$0x3]
      %v179 = vlaneseq
      %v180 = vshrl.u32 %v179, 7
      %v181 = vsub.s32 0, %v180
      %v182 = vrot.slane %v177, %v181
      %v183 = vlaneseq
      %v184 = vshrl.u32 %v183, 7
      %v185 = vsub.s32 1, %v184
      %v186 = vrot.slane %v177, %v185
      %vm189 = vcmask 261120
      %v191 = vsel %vm189, %v168, 0
      %193 = vmatprep.subr.mxu0 0.0
      %194 = vmatpush1.msra.mxu0 0.0
      %195 = vmatprep.subr.mxu0 0.0
      %196 = vmatpush1.msra.mxu0 0.0
      %197 = vmatprep.subr.mxu0 0.0
      %198 = vmatpush1.msra.mxu0 0.0
      %199 = vmatprep.subr.mxu0 0.0
      %200 = vmatpush1.msra.mxu0 0.0
      %201 = vmatprep.subr.mxu0 0.0
      %202 = vmatpush1.msra.mxu0 0.0
      %203 = vmatprep.subr.mxu0 0.0
      %204 = vmatpush1.msra.mxu0 0.0
      %205 = vmatprep.subr.mxu0 0.0
      %206 = vmatpush1.msra.mxu0 0.0
      %207 = vmatprep.subr.mxu0 0.0
      %208 = vmatpush1.msra.mxu0 0.0
      %209 = vmatprep.subr.mxu0 0.0
      %210 = vmatpush1.msra.mxu0 0.0
      %211 = vmatprep.subr.mxu0 0.0
      %212 = vmatpush1.msra.mxu0 0.0
      %213 = vmatprep.subr.mxu0 0.0
      %214 = vmatpush1.msra.mxu0 0.0
      %215 = vmatprep.subr.mxu0 0.0
      %216 = vmatpush1.msra.mxu0 0.0
      %217 = vmatprep.subr.mxu0 %v176
      %218 = vmatpush1.msra.mxu0 %v175
      %219 = vmatprep.subr.mxu0 %v174
      %220 = vmatpush1.msra.mxu0 %v173
      %221 = vmatprep.subr.mxu0 %v172
      %222 = vmatpush1.msra.mxu0 %v171
      %223 = vmatprep.subr.mxu0 %v170
      %224 = vmatpush1.msra.mxu0 %v169
      %225 = vmatprep.subr.mxu0 0.0
      %226 = vmatpush2.msra.mxu0 0.0
      %227 = vmatprep.subr.mxu0 0.0
      %228 = vmatpush2.msra.mxu0 0.0
      %229 = vmatprep.subr.mxu0 0.0
      %230 = vmatpush2.msra.mxu0 0.0
      %231 = vmatprep.subr.mxu0 0.0
      %232 = vmatpush2.msra.mxu0 0.0
      %233 = vmatprep.subr.mxu0 0.0
      %234 = vmatpush2.msra.mxu0 0.0
      %235 = vmatprep.subr.mxu0 0.0
      %236 = vmatpush2.msra.mxu0 0.0
      %237 = vmatprep.subr.mxu0 0.0
      %238 = vmatpush2.msra.mxu0 0.0
      %239 = vmatprep.subr.mxu0 0.0
      %240 = vmatpush2.msra.mxu0 0.0
      %241 = vmatprep.subr.mxu0 0.0
      %242 = vmatpush2.msra.mxu0 0.0
      %243 = vmatprep.subr.mxu0 0.0
      %244 = vmatpush2.msra.mxu0 0.0
      %245 = vmatprep.subr.mxu0 0.0
      %246 = vmatpush2.msra.mxu0 0.0
      %247 = vmatprep.subr.mxu0 0.0
      %248 = vmatpush2.msra.mxu0 0.0
      %249 = vmatprep.subr.mxu0 0.0
      %250 = vmatpush2.msra.mxu0 0.0
      %251 = vmatprep.subr.mxu0 0.0
      %252 = vmatpush2.msra.mxu0 0.0
      %253 = vmatprep.subr.mxu0 0.0
      %254 = vmatpush2.msra.mxu0 0.0
      %255 = vmatprep.subr.mxu0 0.0
      %256 = vmatpush2.msra.mxu0 0.0
      %257 = vmatprep.mubr.f32.mxu0 0.0
      %258 = vmatmul.mubr.f32.gmra.mxu0 %v191
      %v259 = vpop.f32.mrf.mxu0
      %v260 = vadd.f32 %v182, %v259
      %v261 = vpop.f32.mrf.mxu0
      %v262 = vadd.f32 %v186, %v261
      %263 = vdwg.mxu0
      %v266 = vcombine.low %v260, %v262
      %vm268 = vcmask 1043456
      %vm269 = vcmask 523268
      %vm270 = vmor %vm269, %vm268
      %271 = vst.msk [vmem:[%s167] sm:$0xff] %vm270, %v266
      %p272 = scmp.lt.s32.totalorder %s14, 1
      %s273 = scalar_select %p272, %s14, 1
      %s274 = smul.addr %s273, 2
      %s275 = smul.addr %s274, 4
      %s276 = scalar_lea.vmem %s3, %s275
      // Predicated region
      $region33: #{autoencoder_forward.11} parent=31 // pred_check
        %p277 = pneg %p100
      $region34: #{autoencoder_forward.11} parent=31 // pred_check_branch
        %279 = sbr.rel (%p277) target = $region36
      $region35: #{autoencoder_forward.11} parent=31 // pred_region
        _
      $region36: #{autoencoder_forward.11} parent=31 // pred_fallthru
        _
    $region32: #{autoencoder_forward.11} parent=5 // pred_fallthru
      _
    %p280 = scmp.le.s32.totalorder 2, %s9
    // Predicated region
    $region37: #{autoencoder_forward.11} parent=5 // pred_check
      %p281 = pneg %p280
    $region38: #{autoencoder_forward.11} parent=5 // pred_check_branch
      %283 = sbr.rel (%p281) target = $region40
    $region39: #{autoencoder_forward.11} parent=5 // pred_region
      %s284 = ssub.s32 %s9, 2
      // Predicated region
      $region41: #{autoencoder_forward.11} parent=39 // pred_check
        %p285 = pneg %p106
      $region42: #{autoencoder_forward.11} parent=39 // pred_check_branch
        %287 = sbr.rel (%p285) target = $region44
      $region43: #{autoencoder_forward.11} parent=39 // pred_region
        %p288 = scmp.lt.s32.totalorder %s15, 1
        %s289 = scalar_select %p288, %s15, 1
        %s290 = smul.addr %s289, 2
        %s291 = smul.addr %s290, 4
        %s292 = scalar_lea.vmem %s3, %s291
      $region44: #{autoencoder_forward.11} parent=39 // pred_fallthru
        _
    $region40: #{autoencoder_forward.11} parent=5 // pred_fallthru
      _
  $region6: #{autoencoder_forward.11} parent=0 // loop_footer
    %s13 = sadd.s32 1, %s9
  $region7: #{autoencoder_forward.11} parent=0 // loop_footer_branch
    %8 = sbr.rel target = $region3
  $region8: #{autoencoder_forward.11} parent=0 // loop_exit
    _

// kernel: autoencoder_forward.6
$region0: #{autoencoder_forward.6}
  #allocation0 [shape = 'u32[]', space=smem, size = 0x4, offset = 0x4, fixed_abs, tag = 'smem constant byte address 0x4 - core index']
  #allocation1 [shape = 'u32[144,128]{1,0:T(1,128)}', space=vmem, size = 0x12000, scoped, tag = 'internal scratch']
  %s0 = inlined_call_operand.vmem [shape: f32[2,4,192], index: 0, kind: input, shape index: {}]
  %s1 = inlined_call_operand.vmem [shape: f32[192,32], index: 1, kind: input, shape index: {}]
  %s2 = inlined_call_operand.vmem [shape: f32[1,32], index: 2, kind: input, shape index: {}]
  %s3 = inlined_call_operand.vmem [shape: f32[1,32], index: 3, kind: input, shape index: {}]
  %s4 = inlined_call_operand.vmem [shape: f32[5,32], index: 4, kind: input, shape index: {}]
  %s5 = inlined_call_operand.vmem [shape: f32[2,5,32], index: 5, kind: output, shape index: {}]
  %s6 = sld [smem:[#allocation0]]
  $region53: #{autoencoder_forward.6} parent=0
    _
  %s8 = ssub.s32 1, %s6
  %s9 = scalar_select 0, %s8, %s6
  loop: start=0, step=1, limit=4
  $region2: #{autoencoder_forward.6} parent=0 // loop_pre_header
    _
  $region3: #{autoencoder_forward.6} parent=0 // loop_header
    %s11 = sphi 0, %s15
    %p12 = scmp.ge.s32.totalorder %s11, 4
    %s21 = sphi 0, %s23
    %s24 = sphi 0, %s21
    %s25 = sphi 0, %s24
    %s41 = sphi 0, %s25
    %s45 = sphi 0, %s45
    %s47 = sphi 0, %s45
    %s48 = sphi 0, %s47
    %s62 = sphi 0, %s48
    %s66 = sphi 0, %s66
    %s68 = sphi 0, %s66
    %s69 = sphi 0, %s68
    %s83 = sphi 0, %s69
    %s87 = sphi 0, %s87
    %s89 = sphi 0, %s87
    %s90 = sphi 0, %s89
    %s104 = sphi 0, %s90
    %s108 = sphi 0, %s108
    %s110 = sphi 0, %s108
    %s111 = sphi 0, %s110
    %s125 = sphi 0, %s111
    %s131 = sphi 0, %s133
    %s134 = sphi 0, %s131
    %s135 = sphi 0, %s134
    %s151 = sphi 0, %s135
  $region4: #{autoencoder_forward.6} parent=0 // loop_header_branch
    %14 = sbr.rel (%p12) target = $region8
  $region5: #{autoencoder_forward.6} parent=0 // loop_body
    %s16 = ssub.s32 %s11, 1
    %s17 = ssub.s32 %s11, 2
    %s18 = sadd.s32 %s11, 1
    %s19 = ssub.s32 %s11, %s18
    %p20 = scmp.eq.s32.totalorder %s19, 0
    %s22 = sadd.s32 %s21, 1
    %s23 = scalar_select %p20, %s21, %s22
    %p26 = pneg %p20
    %p27 = scmp.eq.s32.totalorder %s11, 1
    %p28 = por %p26, %p27
    %p29 = scmp.ne.s32.totalorder %s21, %s24
    %p30 = scmp.eq.s32.totalorder %s11, 0
    %p31 = por %p29, %p30
    %p32 = scmp.ne.s32.totalorder %s21, %s24
    %p33 = scmp.eq.s32.totalorder %s16, 1
    %p34 = por %p32, %p33
    %p35 = scmp.ne.s32.totalorder %s24, %s25
    %p36 = scmp.eq.s32.totalorder %s16, 0
    %p37 = por %p35, %p36
    %p38 = scmp.ne.s32.totalorder %s24, %s25
    %p39 = scmp.eq.s32.totalorder %s17, 1
    %p40 = por %p38, %p39
    %p42 = scmp.ne.s32.totalorder %s25, %s41
    %p43 = scmp.eq.s32.totalorder %s17, 0
    %p44 = por %p42, %p43
    %s46 = sadd.s32 %s45, 1
    %p49 = scmp.eq.s32.totalorder %s11, 1
    %p50 = scmp.ne.s32.totalorder %s45, %s47
    %p51 = scmp.eq.s32.totalorder %s11, 0
    %p52 = por %p50, %p51
    %p53 = scmp.ne.s32.totalorder %s45, %s47
    %p54 = scmp.eq.s32.totalorder %s16, 1
    %p55 = por %p53, %p54
    %p56 = scmp.ne.s32.totalorder %s47, %s48
    %p57 = scmp.eq.s32.totalorder %s16, 0
    %p58 = por %p56, %p57
    %p59 = scmp.ne.s32.totalorder %s47, %s48
    %p60 = scmp.eq.s32.totalorder %s17, 1
    %p61 = por %p59, %p60
    %p63 = scmp.ne.s32.totalorder %s48, %s62
    %p64 = scmp.eq.s32.totalorder %s17, 0
    %p65 = por %p63, %p64
    %s67 = sadd.s32 %s66, 1
    %p70 = scmp.eq.s32.totalorder %s11, 1
    %p71 = scmp.ne.s32.totalorder %s66, %s68
    %p72 = scmp.eq.s32.totalorder %s11, 0
    %p73 = por %p71, %p72
    %p74 = scmp.ne.s32.totalorder %s66, %s68
    %p75 = scmp.eq.s32.totalorder %s16, 1
    %p76 = por %p74, %p75
    %p77 = scmp.ne.s32.totalorder %s68, %s69
    %p78 = scmp.eq.s32.totalorder %s16, 0
    %p79 = por %p77, %p78
    %p80 = scmp.ne.s32.totalorder %s68, %s69
    %p81 = scmp.eq.s32.totalorder %s17, 1
    %p82 = por %p80, %p81
    %p84 = scmp.ne.s32.totalorder %s69, %s83
    %p85 = scmp.eq.s32.totalorder %s17, 0
    %p86 = por %p84, %p85
    %s88 = sadd.s32 %s87, 1
    %p91 = scmp.eq.s32.totalorder %s11, 1
    %p92 = scmp.ne.s32.totalorder %s87, %s89
    %p93 = scmp.eq.s32.totalorder %s11, 0
    %p94 = por %p92, %p93
    %p95 = scmp.ne.s32.totalorder %s87, %s89
    %p96 = scmp.eq.s32.totalorder %s16, 1
    %p97 = por %p95, %p96
    %p98 = scmp.ne.s32.totalorder %s89, %s90
    %p99 = scmp.eq.s32.totalorder %s16, 0
    %p100 = por %p98, %p99
    %p101 = scmp.ne.s32.totalorder %s89, %s90
    %p102 = scmp.eq.s32.totalorder %s17, 1
    %p103 = por %p101, %p102
    %p105 = scmp.ne.s32.totalorder %s90, %s104
    %p106 = scmp.eq.s32.totalorder %s17, 0
    %p107 = por %p105, %p106
    %s109 = sadd.s32 %s108, 1
    %p112 = scmp.eq.s32.totalorder %s11, 1
    %p113 = scmp.ne.s32.totalorder %s108, %s110
    %p114 = scmp.eq.s32.totalorder %s11, 0
    %p115 = por %p113, %p114
    %p116 = scmp.ne.s32.totalorder %s108, %s110
    %p117 = scmp.eq.s32.totalorder %s16, 1
    %p118 = por %p116, %p117
    %p119 = scmp.ne.s32.totalorder %s110, %s111
    %p120 = scmp.eq.s32.totalorder %s16, 0
    %p121 = por %p119, %p120
    %p122 = scmp.ne.s32.totalorder %s110, %s111
    %p123 = scmp.eq.s32.totalorder %s17, 1
    %p124 = por %p122, %p123
    %p126 = scmp.ne.s32.totalorder %s111, %s125
    %p127 = scmp.eq.s32.totalorder %s17, 0
    %p128 = por %p126, %p127
    %s129 = ssub.s32 %s11, %s18
    %p130 = scmp.eq.s32.totalorder %s129, 0
    %s132 = sadd.s32 %s131, 1
    %s133 = scalar_select %p130, %s131, %s132
    %p136 = pneg %p130
    %p137 = scmp.eq.s32.totalorder %s11, 1
    %p138 = por %p136, %p137
    %p139 = scmp.ne.s32.totalorder %s131, %s134
    %p140 = scmp.eq.s32.totalorder %s11, 0
    %p141 = por %p139, %p140
    %p142 = scmp.ne.s32.totalorder %s131, %s134
    %p143 = scmp.eq.s32.totalorder %s16, 1
    %p144 = por %p142, %p143
    %p145 = scmp.ne.s32.totalorder %s134, %s135
    %p146 = scmp.eq.s32.totalorder %s16, 0
    %p147 = por %p145, %p146
    %p148 = scmp.ne.s32.totalorder %s134, %s135
    %p149 = scmp.eq.s32.totalorder %s17, 1
    %p150 = por %p148, %p149
    %p152 = scmp.ne.s32.totalorder %s135, %s151
    %p153 = scmp.eq.s32.totalorder %s17, 0
    %p154 = por %p152, %p153
    %p155 = scmp.le.s32.totalorder 1, %s11
    %p156 = scmp.lt.s32.totalorder %s11, 3
    %p157 = pnand %p155, %p156
    %p158 = pneg %p157
    // Predicated region
    $region9: #{autoencoder_forward.6} parent=5 // pred_check
      _
    $region10: #{autoencoder_forward.6} parent=5 // pred_check_branch
      %160 = sbr.rel (%p157) target = $region12
    $region11: #{autoencoder_forward.6} parent=5 // pred_region
      %s161 = ssub.s32 %s11, 1
      // Predicated region
      $region13: #{autoencoder_forward.6} parent=11 // pred_check
        %p162 = pneg %p58
      $region14: #{autoencoder_forward.6} parent=11 // pred_check_branch
        %164 = sbr.rel (%p162) target = $region16
      $region15: #{autoencoder_forward.6} parent=11 // pred_region
        _
      $region16: #{autoencoder_forward.6} parent=11 // pred_fallthru
        _
      // Predicated region
      $region17: #{autoencoder_forward.6} parent=11 // pred_check
        %p165 = pneg %p79
      $region18: #{autoencoder_forward.6} parent=11 // pred_check_branch
        %167 = sbr.rel (%p165) target = $region20
      $region19: #{autoencoder_forward.6} parent=11 // pred_region
        _
      $region20: #{autoencoder_forward.6} parent=11 // pred_fallthru
        _
      // Predicated region
      $region21: #{autoencoder_forward.6} parent=11 // pred_check
        %p168 = pneg %p100
      $region22: #{autoencoder_forward.6} parent=11 // pred_check_branch
        %170 = sbr.rel (%p168) target = $region24
      $region23: #{autoencoder_forward.6} parent=11 // pred_region
        _
      $region24: #{autoencoder_forward.6} parent=11 // pred_fallthru
        _
      // Predicated region
      $region25: #{autoencoder_forward.6} parent=11 // pred_check
        %p171 = pneg %p121
      $region26: #{autoencoder_forward.6} parent=11 // pred_check_branch
        %173 = sbr.rel (%p171) target = $region28
      $region27: #{autoencoder_forward.6} parent=11 // pred_region
        _
      $region28: #{autoencoder_forward.6} parent=11 // pred_fallthru
        _
    $region12: #{autoencoder_forward.6} parent=5 // pred_fallthru
      _
    %p174 = scmp.lt.s32.totalorder %s11, 2
    // Predicated region
    $region29: #{autoencoder_forward.6} parent=5 // pred_check
      %p175 = pneg %p174
    $region30: #{autoencoder_forward.6} parent=5 // pred_check_branch
      %177 = sbr.rel (%p175) target = $region32
    $region31: #{autoencoder_forward.6} parent=5 // pred_region
      // Predicated region
      $region33: #{autoencoder_forward.6} parent=31 // pred_check
        %p178 = pneg %p31
      $region34: #{autoencoder_forward.6} parent=31 // pred_check_branch
        %180 = sbr.rel (%p178) target = $region36
      $region35: #{autoencoder_forward.6} parent=31 // pred_region
        %p181 = scmp.lt.s32.totalorder %s11, 1
        %s182 = scalar_select %p181, %s11, 1
        %s183 = smul.addr %s182, 2
        %s184 = smul.addr %s183, 4
        %s185 = scalar_lea.vmem %s0, %s184
      $region36: #{autoencoder_forward.6} parent=31 // pred_fallthru
        _
    $region32: #{autoencoder_forward.6} parent=5 // pred_fallthru
      _
    %p186 = scmp.le.s32.totalorder 1, %s11
    %p187 = scmp.lt.s32.totalorder %s11, 3
    %p188 = pnand %p186, %p187
    %p189 = pneg %p188
    // Predicated region
    $region37: #{autoencoder_forward.6} parent=5 // pred_check
      _
    $region38: #{autoencoder_forward.6} parent=5 // pred_check_branch
      %191 = sbr.rel (%p188) target = $region40
    $region39: #{autoencoder_forward.6} parent=5 // pred_region
      %s192 = ssub.s32 %s11, 1
      %p193 = scmp.lt.s32.totalorder %s16, 1
      %s194 = scalar_select %p193, %s16, 1
      %s195 = smul.addr %s194, 2
      %s196 = smul.addr %s195, 4
      %s197 = scalar_lea.vmem %s0, %s196
      %p198 = pneg %p37
      %p199 = pneg %p34
      %p200 = pneg %p58
      %p201 = pneg %p55
      %p202 = pneg %p79
      %p203 = pneg %p76
      %p204 = pneg %p100
      %p205 = pneg %p97
      %p206 = pneg %p121
      %p207 = pneg %p118
      %p208 = pneg %p147
      %p209 = pneg %p144
      %p210 = scmp.lt.s32.totalorder %s16, 1
      %s211 = scalar_select %p210, %s16, 1
      %s212 = smul.addr %s211, 8
      %s213 = scalar_lea.vmem %s5, %s212
      %p214 = scmp.lt.s32.totalorder %s16, 1
      %s215 = scalar_select %p214, %s16, 1
      %s216 = smul.addr %s215, 2
      %s217 = smul.addr %s216, 4
      %s218 = scalar_lea.vmem %s0, %s217
      %p219 = scmp.lt.s32.totalorder %s16, 1
      %s220 = scalar_select %p219, %s16, 1
      %s221 = smul.addr %s220, 8
      %s222 = scalar_lea.vmem %s5, %s221
      %v223 = vld [vmem:[%s218] sm:$0xff]
      %v224 = vld [vmem:[%s1] sm:$0xff]
      %v225 = vld [vmem:[%s1 + $0x8] sm:$0xff]
      %v226 = vld [vmem:[%s1 + $0x10] sm:$0xff]
      %v227 = vld [vmem:[%s1 + $0x18] sm:$0xff]
      %v228 = vld [vmem:[%s1 + $0x20] sm:$0xff]
      %v229 = vld [vmem:[%s1 + $0x28] sm:$0xff]
      %v230 = vld [vmem:[%s1 + $0x30] sm:$0xff]
      %v231 = vld [vmem:[%s1 + $0x38] sm:$0xff]
      %v232 = vld [vmem:[%s1 + $0x40] sm:$0xff]
      %v233 = vld [vmem:[%s1 + $0x48] sm:$0xff]
      %v234 = vld [vmem:[%s1 + $0x50] sm:$0xff]
      %v235 = vld [vmem:[%s1 + $0x58] sm:$0xff]
      %v236 = vld [vmem:[%s1 + $0x60] sm:$0xff]
      %v237 = vld [vmem:[%s1 + $0x68] sm:$0xff]
      %v238 = vld [vmem:[%s1 + $0x70] sm:$0xff]
      %v239 = vld [vmem:[%s1 + $0x78] sm:$0xff]
      %v240 = vld [vmem:[%s1 + $0x80] sm:$0xff]
      %v241 = vld [vmem:[%s1 + $0x88] sm:$0xff]
      %v242 = vld [vmem:[%s1 + $0x90] sm:$0xff]
      %v243 = vld [vmem:[%s1 + $0x98] sm:$0xff]
      %v244 = vld [vmem:[%s1 + $0xa0] sm:$0xff]
      %v245 = vld [vmem:[%s1 + $0xa8] sm:$0xff]
      %v246 = vld [vmem:[%s1 + $0xb0] sm:$0xff]
      %v247 = vld [vmem:[%s1 + $0xb8] sm:$0xff]
      %v248 = vld [vmem:[%s2] sm:$0x1]
      %v250 = vlaneseq
      %v251 = vshrl.u32 %v250, 7
      %v252 = vsub.s32 0, %v251
      %v253 = vrot.slane %v248, %v252
      %v256 = vcombine.high %v223, %v223
      %vm257 = vcmask 523264
      %v258 = vsel %vm257, %v256, 0
      %260 = vmatprep.subr.mxu0 0.0
      %261 = vmatpush1.msra.mxu0 %v239
      %262 = vmatprep.subr.mxu0 0.0
      %263 = vmatpush1.msra.mxu0 %v238
      %264 = vmatprep.subr.mxu0 0.0
      %265 = vmatpush1.msra.mxu0 %v237
      %266 = vmatprep.subr.mxu0 0.0
      %267 = vmatpush1.msra.mxu0 %v236
      %268 = vmatprep.subr.mxu0 0.0
      %269 = vmatpush1.msra.mxu0 %v235
      %270 = vmatprep.subr.mxu0 0.0
      %271 = vmatpush1.msra.mxu0 %v234
      %272 = vmatprep.subr.mxu0 0.0
      %273 = vmatpush1.msra.mxu0 %v233
      %274 = vmatprep.subr.mxu0 0.0
      %275 = vmatpush1.msra.mxu0 %v232
      %276 = vmatprep.subr.mxu0 0.0
      %277 = vmatpush1.msra.mxu0 %v231
      %278 = vmatprep.subr.mxu0 0.0
      %279 = vmatpush1.msra.mxu0 %v230
      %280 = vmatprep.subr.mxu0 0.0
      %281 = vmatpush1.msra.mxu0 %v229
      %282 = vmatprep.subr.mxu0 0.0
      %283 = vmatpush1.msra.mxu0 %v228
      %284 = vmatprep.subr.mxu0 0.0
      %285 = vmatpush1.msra.mxu0 %v227
      %286 = vmatprep.subr.mxu0 0.0
      %287 = vmatpush1.msra.mxu0 %v226
      %288 = vmatprep.subr.mxu0 0.0
      %289 = vmatpush1.msra.mxu0 %v225
      %290 = vmatprep.subr.mxu0 0.0
      %291 = vmatpush1.msra.mxu0 %v224
      %292 = vmatprep.subr.mxu0 0.0
      %293 = vmatpush2.msra.mxu0 0.0
      %294 = vmatprep.subr.mxu0 0.0
      %295 = vmatpush2.msra.mxu0 0.0
      %296 = vmatprep.subr.mxu0 0.0
      %297 = vmatpush2.msra.mxu0 0.0
      %298 = vmatprep.subr.mxu0 0.0
      %299 = vmatpush2.msra.mxu0 0.0
      %300 = vmatprep.subr.mxu0 0.0
      %301 = vmatpush2.msra.mxu0 0.0
      %302 = vmatprep.subr.mxu0 0.0
      %303 = vmatpush2.msra.mxu0 0.0
      %304 = vmatprep.subr.mxu0 0.0
      %305 = vmatpush2.msra.mxu0 0.0
      %306 = vmatprep.subr.mxu0 0.0
      %307 = vmatpush2.msra.mxu0 0.0
      %308 = vmatprep.subr.mxu0 0.0
      %309 = vmatpush2.msra.mxu0 %v247
      %310 = vmatprep.subr.mxu0 0.0
      %311 = vmatpush2.msra.mxu0 %v246
      %312 = vmatprep.subr.mxu0 0.0
      %313 = vmatpush2.msra.mxu0 %v245
      %314 = vmatprep.subr.mxu0 0.0
      %315 = vmatpush2.msra.mxu0 %v244
      %316 = vmatprep.subr.mxu0 0.0
      %317 = vmatpush2.msra.mxu0 %v243
      %318 = vmatprep.subr.mxu0 0.0
      %319 = vmatpush2.msra.mxu0 %v242
      %320 = vmatprep.subr.mxu0 0.0
      %321 = vmatpush2.msra.mxu0 %v241
      %322 = vmatprep.subr.mxu0 0.0
      %323 = vmatpush2.msra.mxu0 %v240
      %324 = vmatprep.mubr.f32.mxu0 %v258
      %325 = vmatmul.mubr.f32.gmra.mxu0 %v223
      %v326 = vpop.f32.mrf.mxu0
      %v327 = vadd.f32 %v253, %v326
      %v328 = vpop.f32.mrf.mxu0
      %329 = vdwg.mxu0
      %v330 = vld [vmem:[%s3] sm:$0x1]
      %v332 = vrot.slane %v327, 7
      %vm334 = vcmask 1040384
      %v335 = vsel %vm334, %v330, %v332
      %v336 = vld [vmem:[%s4] sm:$0x1f]
      %v337 = vadd.f32 %v335, %v336
      %vm338 = vcmask 258048
      %339 = vst.msk [vmem:[%s222] sm:$0x1f] %vm338, %v337
      %p340 = scmp.lt.s32.totalorder %s16, 1
      %s341 = scalar_select %p340, %s16, 1
      %s342 = smul.addr %s341, 8
      %s343 = scalar_lea.vmem %s5, %s342
      // Predicated region
      $region41: #{autoencoder_forward.6} parent=39 // pred_check
        %p344 = pneg %p144
      $region42: #{autoencoder_forward.6} parent=39 // pred_check_branch
        %346 = sbr.rel (%p344) target = $region44
      $region43: #{autoencoder_forward.6} parent=39 // pred_region
        _
      $region44: #{autoencoder_forward.6} parent=39 // pred_fallthru
        _
    $region40: #{autoencoder_forward.6} parent=5 // pred_fallthru
      _
    %p347 = scmp.le.s32.totalorder 2, %s11
    // Predicated region
    $region45: #{autoencoder_forward.6} parent=5 // pred_check
      %p348 = pneg %p347
    $region46: #{autoencoder_forward.6} parent=5 // pred_check_branch
      %350 = sbr.rel (%p348) target = $region48
    $region47: #{autoencoder_forward.6} parent=5 // pred_region
      %s351 = ssub.s32 %s11, 2
      // Predicated region
      $region49: #{autoencoder_forward.6} parent=47 // pred_check
        %p352 = pneg %p150
      $region50: #{autoencoder_forward.6} parent=47 // pred_check_branch
        %354 = sbr.rel (%p352) target = $region52
      $region51: #{autoencoder_forward.6} parent=47 // pred_region
        %p355 = scmp.lt.s32.totalorder %s17, 1
        %s356 = scalar_select %p355, %s17, 1
        %s357 = smul.addr %s356, 8
        %s358 = scalar_lea.vmem %s5, %s357
      $region52: #{autoencoder_forward.6} parent=47 // pred_fallthru
        _
    $region48: #{autoencoder_forward.6} parent=5 // pred_fallthru
      _
  $region6: #{autoencoder_forward.6} parent=0 // loop_footer
    %s15 = sadd.s32 1, %s11
  $region7: #{autoencoder_forward.6} parent=0 // loop_footer_branch
    %10 = sbr.rel target = $region3
  $region8: #{autoencoder_forward.6} parent=0 // loop_exit
    _

// kernel: autoencoder_forward.7
$region0: #{autoencoder_forward.7}
  #allocation0 [shape = 'u32[]', space=smem, size = 0x4, offset = 0x4, fixed_abs, tag = 'smem constant byte address 0x4 - core index']
  #allocation1 [shape = 'u32[144,128]{1,0:T(1,128)}', space=vmem, size = 0x12000, scoped, tag = 'internal scratch']
  %s0 = inlined_call_operand.vmem [shape: f32[2,5,32], index: 0, kind: input, shape index: {}]
  %s1 = inlined_call_operand.vmem [shape: f32[32,96], index: 1, kind: input, shape index: {}]
  %s2 = inlined_call_operand.vmem [shape: f32[1,96], index: 2, kind: input, shape index: {}]
  %s3 = inlined_call_operand.vmem [shape: f32[32,32], index: 3, kind: input, shape index: {}]
  %s4 = inlined_call_operand.vmem [shape: f32[1,32], index: 4, kind: input, shape index: {}]
  %s5 = inlined_call_operand.vmem [shape: f32[32,64], index: 5, kind: input, shape index: {}]
  %s6 = inlined_call_operand.vmem [shape: f32[1,64], index: 6, kind: input, shape index: {}]
  %s7 = inlined_call_operand.vmem [shape: f32[64,32], index: 7, kind: input, shape index: {}]
  %s8 = inlined_call_operand.vmem [shape: f32[1,32], index: 8, kind: input, shape index: {}]
  %s9 = inlined_call_operand.vmem [shape: f32[1,32], index: 9, kind: input, shape index: {}]
  %s10 = inlined_call_operand.vmem [shape: f32[1,32], index: 10, kind: input, shape index: {}]
  %s11 = inlined_call_operand.vmem [shape: f32[1,32], index: 11, kind: input, shape index: {}]
  %s12 = inlined_call_operand.vmem [shape: f32[1,32], index: 12, kind: input, shape index: {}]
  %s13 = inlined_call_operand.vmem [shape: f32[2,5,32], index: 13, kind: output, shape index: {}]
  %s14 = sld [smem:[#allocation0]]
  $region85: #{autoencoder_forward.7} parent=0
    _
  %s16 = ssub.s32 1, %s14
  %s17 = scalar_select 0, %s16, %s14
  loop: start=0, step=1, limit=4
  $region2: #{autoencoder_forward.7} parent=0 // loop_pre_header
    _
  $region3: #{autoencoder_forward.7} parent=0 // loop_header
    %s19 = sphi 0, %s23
    %p20 = scmp.ge.s32.totalorder %s19, 4
    %s29 = sphi 0, %s31
    %s32 = sphi 0, %s29
    %s33 = sphi 0, %s32
    %s49 = sphi 0, %s33
    %s53 = sphi 0, %s53
    %s55 = sphi 0, %s53
    %s56 = sphi 0, %s55
    %s70 = sphi 0, %s56
    %s74 = sphi 0, %s74
    %s76 = sphi 0, %s74
    %s77 = sphi 0, %s76
    %s91 = sphi 0, %s77
    %s95 = sphi 0, %s95
    %s97 = sphi 0, %s95
    %s98 = sphi 0, %s97
    %s112 = sphi 0, %s98
    %s116 = sphi 0, %s116
    %s118 = sphi 0, %s116
    %s119 = sphi 0, %s118
    %s133 = sphi 0, %s119
    %s137 = sphi 0, %s137
    %s139 = sphi 0, %s137
    %s140 = sphi 0, %s139
    %s154 = sphi 0, %s140
    %s158 = sphi 0, %s158
    %s160 = sphi 0, %s158
    %s161 = sphi 0, %s160
    %s175 = sphi 0, %s161
    %s179 = sphi 0, %s179
    %s181 = sphi 0, %s179
    %s182 = sphi 0, %s181
    %s196 = sphi 0, %s182
    %s200 = sphi 0, %s200
    %s202 = sphi 0, %s200
    %s203 = sphi 0, %s202
    %s217 = sphi 0, %s203
    %s221 = sphi 0, %s221
    %s223 = sphi 0, %s221
    %s224 = sphi 0, %s223
    %s238 = sphi 0, %s224
    %s242 = sphi 0, %s242
    %s244 = sphi 0, %s242
    %s245 = sphi 0, %s244
    %s259 = sphi 0, %s245
    %s263 = sphi 0, %s263
    %s265 = sphi 0, %s263
    %s266 = sphi 0, %s265
    %s280 = sphi 0, %s266
    %s284 = sphi 0, %s284
    %s286 = sphi 0, %s284
    %s287 = sphi 0, %s286
    %s301 = sphi 0, %s287
    %s307 = sphi 0, %s309
    %s310 = sphi 0, %s307
    %s311 = sphi 0, %s310
    %s327 = sphi 0, %s311
  $region4: #{autoencoder_forward.7} parent=0 // loop_header_branch
    %22 = sbr.rel (%p20) target = $region8
  $region5: #{autoencoder_forward.7} parent=0 // loop_body
    %s24 = ssub.s32 %s19, 1
    %s25 = ssub.s32 %s19, 2
    %s26 = sadd.s32 %s19, 1
    %s27 = ssub.s32 %s19, %s26
    %p28 = scmp.eq.s32.totalorder %s27, 0
    %s30 = sadd.s32 %s29, 1
    %s31 = scalar_select %p28, %s29, %s30
    %p34 = pneg %p28
    %p35 = scmp.eq.s32.totalorder %s19, 1
    %p36 = por %p34, %p35
    %p37 = scmp.ne.s32.totalorder %s29, %s32
    %p38 = scmp.eq.s32.totalorder %s19, 0
    %p39 = por %p37, %p38
    %p40 = scmp.ne.s32.totalorder %s29, %s32
    %p41 = scmp.eq.s32.totalorder %s24, 1
    %p42 = por %p40, %p41
    %p43 = scmp.ne.s32.totalorder %s32, %s33
    %p44 = scmp.eq.s32.totalorder %s24, 0
    %p45 = por %p43, %p44
    %p46 = scmp.ne.s32.totalorder %s32, %s33
    %p47 = scmp.eq.s32.totalorder %s25, 1
    %p48 = por %p46, %p47
    %p50 = scmp.ne.s32.totalorder %s33, %s49
    %p51 = scmp.eq.s32.totalorder %s25, 0
    %p52 = por %p50, %p51
    %s54 = sadd.s32 %s53, 1
    %p57 = scmp.eq.s32.totalorder %s19, 1
    %p58 = scmp.ne.s32.totalorder %s53, %s55
    %p59 = scmp.eq.s32.totalorder %s19, 0
    %p60 = por %p58, %p59
    %p61 = scmp.ne.s32.totalorder %s53, %s55
    %p62 = scmp.eq.s32.totalorder %s24, 1
    %p63 = por %p61, %p62
    %p64 = scmp.ne.s32.totalorder %s55, %s56
    %p65 = scmp.eq.s32.totalorder %s24, 0
    %p66 = por %p64, %p65
    %p67 = scmp.ne.s32.totalorder %s55, %s56
    %p68 = scmp.eq.s32.totalorder %s25, 1
    %p69 = por %p67, %p68
    %p71 = scmp.ne.s32.totalorder %s56, %s70
    %p72 = scmp.eq.s32.totalorder %s25, 0
    %p73 = por %p71, %p72
    %s75 = sadd.s32 %s74, 1
    %p78 = scmp.eq.s32.totalorder %s19, 1
    %p79 = scmp.ne.s32.totalorder %s74, %s76
    %p80 = scmp.eq.s32.totalorder %s19, 0
    %p81 = por %p79, %p80
    %p82 = scmp.ne.s32.totalorder %s74, %s76
    %p83 = scmp.eq.s32.totalorder %s24, 1
    %p84 = por %p82, %p83
    %p85 = scmp.ne.s32.totalorder %s76, %s77
    %p86 = scmp.eq.s32.totalorder %s24, 0
    %p87 = por %p85, %p86
    %p88 = scmp.ne.s32.totalorder %s76, %s77
    %p89 = scmp.eq.s32.totalorder %s25, 1
    %p90 = por %p88, %p89
    %p92 = scmp.ne.s32.totalorder %s77, %s91
    %p93 = scmp.eq.s32.totalorder %s25, 0
    %p94 = por %p92, %p93
    %s96 = sadd.s32 %s95, 1
    %p99 = scmp.eq.s32.totalorder %s19, 1
    %p100 = scmp.ne.s32.totalorder %s95, %s97
    %p101 = scmp.eq.s32.totalorder %s19, 0
    %p102 = por %p100, %p101
    %p103 = scmp.ne.s32.totalorder %s95, %s97
    %p104 = scmp.eq.s32.totalorder %s24, 1
    %p105 = por %p103, %p104
    %p106 = scmp.ne.s32.totalorder %s97, %s98
    %p107 = scmp.eq.s32.totalorder %s24, 0
    %p108 = por %p106, %p107
    %p109 = scmp.ne.s32.totalorder %s97, %s98
    %p110 = scmp.eq.s32.totalorder %s25, 1
    %p111 = por %p109, %p110
    %p113 = scmp.ne.s32.totalorder %s98, %s112
    %p114 = scmp.eq.s32.totalorder %s25, 0
    %p115 = por %p113, %p114
    %s117 = sadd.s32 %s116, 1
    %p120 = scmp.eq.s32.totalorder %s19, 1
    %p121 = scmp.ne.s32.totalorder %s116, %s118
    %p122 = scmp.eq.s32.totalorder %s19, 0
    %p123 = por %p121, %p122
    %p124 = scmp.ne.s32.totalorder %s116, %s118
    %p125 = scmp.eq.s32.totalorder %s24, 1
    %p126 = por %p124, %p125
    %p127 = scmp.ne.s32.totalorder %s118, %s119
    %p128 = scmp.eq.s32.totalorder %s24, 0
    %p129 = por %p127, %p128
    %p130 = scmp.ne.s32.totalorder %s118, %s119
    %p131 = scmp.eq.s32.totalorder %s25, 1
    %p132 = por %p130, %p131
    %p134 = scmp.ne.s32.totalorder %s119, %s133
    %p135 = scmp.eq.s32.totalorder %s25, 0
    %p136 = por %p134, %p135
    %s138 = sadd.s32 %s137, 1
    %p141 = scmp.eq.s32.totalorder %s19, 1
    %p142 = scmp.ne.s32.totalorder %s137, %s139
    %p143 = scmp.eq.s32.totalorder %s19, 0
    %p144 = por %p142, %p143
    %p145 = scmp.ne.s32.totalorder %s137, %s139
    %p146 = scmp.eq.s32.totalorder %s24, 1
    %p147 = por %p145, %p146
    %p148 = scmp.ne.s32.totalorder %s139, %s140
    %p149 = scmp.eq.s32.totalorder %s24, 0
    %p150 = por %p148, %p149
    %p151 = scmp.ne.s32.totalorder %s139, %s140
    %p152 = scmp.eq.s32.totalorder %s25, 1
    %p153 = por %p151, %p152
    %p155 = scmp.ne.s32.totalorder %s140, %s154
    %p156 = scmp.eq.s32.totalorder %s25, 0
    %p157 = por %p155, %p156
    %s159 = sadd.s32 %s158, 1
    %p162 = scmp.eq.s32.totalorder %s19, 1
    %p163 = scmp.ne.s32.totalorder %s158, %s160
    %p164 = scmp.eq.s32.totalorder %s19, 0
    %p165 = por %p163, %p164
    %p166 = scmp.ne.s32.totalorder %s158, %s160
    %p167 = scmp.eq.s32.totalorder %s24, 1
    %p168 = por %p166, %p167
    %p169 = scmp.ne.s32.totalorder %s160, %s161
    %p170 = scmp.eq.s32.totalorder %s24, 0
    %p171 = por %p169, %p170
    %p172 = scmp.ne.s32.totalorder %s160, %s161
    %p173 = scmp.eq.s32.totalorder %s25, 1
    %p174 = por %p172, %p173
    %p176 = scmp.ne.s32.totalorder %s161, %s175
    %p177 = scmp.eq.s32.totalorder %s25, 0
    %p178 = por %p176, %p177
    %s180 = sadd.s32 %s179, 1
    %p183 = scmp.eq.s32.totalorder %s19, 1
    %p184 = scmp.ne.s32.totalorder %s179, %s181
    %p185 = scmp.eq.s32.totalorder %s19, 0
    %p186 = por %p184, %p185
    %p187 = scmp.ne.s32.totalorder %s179, %s181
    %p188 = scmp.eq.s32.totalorder %s24, 1
    %p189 = por %p187, %p188
    %p190 = scmp.ne.s32.totalorder %s181, %s182
    %p191 = scmp.eq.s32.totalorder %s24, 0
    %p192 = por %p190, %p191
    %p193 = scmp.ne.s32.totalorder %s181, %s182
    %p194 = scmp.eq.s32.totalorder %s25, 1
    %p195 = por %p193, %p194
    %p197 = scmp.ne.s32.totalorder %s182, %s196
    %p198 = scmp.eq.s32.totalorder %s25, 0
    %p199 = por %p197, %p198
    %s201 = sadd.s32 %s200, 1
    %p204 = scmp.eq.s32.totalorder %s19, 1
    %p205 = scmp.ne.s32.totalorder %s200, %s202
    %p206 = scmp.eq.s32.totalorder %s19, 0
    %p207 = por %p205, %p206
    %p208 = scmp.ne.s32.totalorder %s200, %s202
    %p209 = scmp.eq.s32.totalorder %s24, 1
    %p210 = por %p208, %p209
    %p211 = scmp.ne.s32.totalorder %s202, %s203
    %p212 = scmp.eq.s32.totalorder %s24, 0
    %p213 = por %p211, %p212
    %p214 = scmp.ne.s32.totalorder %s202, %s203
    %p215 = scmp.eq.s32.totalorder %s25, 1
    %p216 = por %p214, %p215
    %p218 = scmp.ne.s32.totalorder %s203, %s217
    %p219 = scmp.eq.s32.totalorder %s25, 0
    %p220 = por %p218, %p219
    %s222 = sadd.s32 %s221, 1
    %p225 = scmp.eq.s32.totalorder %s19, 1
    %p226 = scmp.ne.s32.totalorder %s221, %s223
    %p227 = scmp.eq.s32.totalorder %s19, 0
    %p228 = por %p226, %p227
    %p229 = scmp.ne.s32.totalorder %s221, %s223
    %p230 = scmp.eq.s32.totalorder %s24, 1
    %p231 = por %p229, %p230
    %p232 = scmp.ne.s32.totalorder %s223, %s224
    %p233 = scmp.eq.s32.totalorder %s24, 0
    %p234 = por %p232, %p233
    %p235 = scmp.ne.s32.totalorder %s223, %s224
    %p236 = scmp.eq.s32.totalorder %s25, 1
    %p237 = por %p235, %p236
    %p239 = scmp.ne.s32.totalorder %s224, %s238
    %p240 = scmp.eq.s32.totalorder %s25, 0
    %p241 = por %p239, %p240
    %s243 = sadd.s32 %s242, 1
    %p246 = scmp.eq.s32.totalorder %s19, 1
    %p247 = scmp.ne.s32.totalorder %s242, %s244
    %p248 = scmp.eq.s32.totalorder %s19, 0
    %p249 = por %p247, %p248
    %p250 = scmp.ne.s32.totalorder %s242, %s244
    %p251 = scmp.eq.s32.totalorder %s24, 1
    %p252 = por %p250, %p251
    %p253 = scmp.ne.s32.totalorder %s244, %s245
    %p254 = scmp.eq.s32.totalorder %s24, 0
    %p255 = por %p253, %p254
    %p256 = scmp.ne.s32.totalorder %s244, %s245
    %p257 = scmp.eq.s32.totalorder %s25, 1
    %p258 = por %p256, %p257
    %p260 = scmp.ne.s32.totalorder %s245, %s259
    %p261 = scmp.eq.s32.totalorder %s25, 0
    %p262 = por %p260, %p261
    %s264 = sadd.s32 %s263, 1
    %p267 = scmp.eq.s32.totalorder %s19, 1
    %p268 = scmp.ne.s32.totalorder %s263, %s265
    %p269 = scmp.eq.s32.totalorder %s19, 0
    %p270 = por %p268, %p269
    %p271 = scmp.ne.s32.totalorder %s263, %s265
    %p272 = scmp.eq.s32.totalorder %s24, 1
    %p273 = por %p271, %p272
    %p274 = scmp.ne.s32.totalorder %s265, %s266
    %p275 = scmp.eq.s32.totalorder %s24, 0
    %p276 = por %p274, %p275
    %p277 = scmp.ne.s32.totalorder %s265, %s266
    %p278 = scmp.eq.s32.totalorder %s25, 1
    %p279 = por %p277, %p278
    %p281 = scmp.ne.s32.totalorder %s266, %s280
    %p282 = scmp.eq.s32.totalorder %s25, 0
    %p283 = por %p281, %p282
    %s285 = sadd.s32 %s284, 1
    %p288 = scmp.eq.s32.totalorder %s19, 1
    %p289 = scmp.ne.s32.totalorder %s284, %s286
    %p290 = scmp.eq.s32.totalorder %s19, 0
    %p291 = por %p289, %p290
    %p292 = scmp.ne.s32.totalorder %s284, %s286
    %p293 = scmp.eq.s32.totalorder %s24, 1
    %p294 = por %p292, %p293
    %p295 = scmp.ne.s32.totalorder %s286, %s287
    %p296 = scmp.eq.s32.totalorder %s24, 0
    %p297 = por %p295, %p296
    %p298 = scmp.ne.s32.totalorder %s286, %s287
    %p299 = scmp.eq.s32.totalorder %s25, 1
    %p300 = por %p298, %p299
    %p302 = scmp.ne.s32.totalorder %s287, %s301
    %p303 = scmp.eq.s32.totalorder %s25, 0
    %p304 = por %p302, %p303
    %s305 = ssub.s32 %s19, %s26
    %p306 = scmp.eq.s32.totalorder %s305, 0
    %s308 = sadd.s32 %s307, 1
    %s309 = scalar_select %p306, %s307, %s308
    %p312 = pneg %p306
    %p313 = scmp.eq.s32.totalorder %s19, 1
    %p314 = por %p312, %p313
    %p315 = scmp.ne.s32.totalorder %s307, %s310
    %p316 = scmp.eq.s32.totalorder %s19, 0
    %p317 = por %p315, %p316
    %p318 = scmp.ne.s32.totalorder %s307, %s310
    %p319 = scmp.eq.s32.totalorder %s24, 1
    %p320 = por %p318, %p319
    %p321 = scmp.ne.s32.totalorder %s310, %s311
    %p322 = scmp.eq.s32.totalorder %s24, 0
    %p323 = por %p321, %p322
    %p324 = scmp.ne.s32.totalorder %s310, %s311
    %p325 = scmp.eq.s32.totalorder %s25, 1
    %p326 = por %p324, %p325
    %p328 = scmp.ne.s32.totalorder %s311, %s327
    %p329 = scmp.eq.s32.totalorder %s25, 0
    %p330 = por %p328, %p329
    %p331 = scmp.le.s32.totalorder 1, %s19
    %p332 = scmp.lt.s32.totalorder %s19, 3
    %p333 = pnand %p331, %p332
    %p334 = pneg %p333
    // Predicated region
    $region9: #{autoencoder_forward.7} parent=5 // pred_check
      _
    $region10: #{autoencoder_forward.7} parent=5 // pred_check_branch
      %336 = sbr.rel (%p333) target = $region12
    $region11: #{autoencoder_forward.7} parent=5 // pred_region
      %s337 = ssub.s32 %s19, 1
      // Predicated region
      $region13: #{autoencoder_forward.7} parent=11 // pred_check
        %p338 = pneg %p66
      $region14: #{autoencoder_forward.7} parent=11 // pred_check_branch
        %340 = sbr.rel (%p338) target = $region16
      $region15: #{autoencoder_forward.7} parent=11 // pred_region
        _
      $region16: #{autoencoder_forward.7} parent=11 // pred_fallthru
        _
      // Predicated region
      $region17: #{autoencoder_forward.7} parent=11 // pred_check
        %p341 = pneg %p87
      $region18: #{autoencoder_forward.7} parent=11 // pred_check_branch
        %343 = sbr.rel (%p341) target = $region20
      $region19: #{autoencoder_forward.7} parent=11 // pred_region
        _
      $region20: #{autoencoder_forward.7} parent=11 // pred_fallthru
        _
      // Predicated region
      $region21: #{autoencoder_forward.7} parent=11 // pred_check
        %p344 = pneg %p108
      $region22: #{autoencoder_forward.7} parent=11 // pred_check_branch
        %346 = sbr.rel (%p344) target = $region24
      $region23: #{autoencoder_forward.7} parent=11 // pred_region
        _
      $region24: #{autoencoder_forward.7} parent=11 // pred_fallthru
        _
      // Predicated region
      $region25: #{autoencoder_forward.7} parent=11 // pred_check
        %p347 = pneg %p129
      $region26: #{autoencoder_forward.7} parent=11 // pred_check_branch
        %349 = sbr.rel (%p347) target = $region28
      $region27: #{autoencoder_forward.7} parent=11 // pred_region
        _
      $region28: #{autoencoder_forward.7} parent=11 // pred_fallthru
        _
      // Predicated region
      $region29: #{autoencoder_forward.7} parent=11 // pred_check
        %p350 = pneg %p150
      $region30: #{autoencoder_forward.7} parent=11 // pred_check_branch
        %352 = sbr.rel (%p350) target = $region32
      $region31: #{autoencoder_forward.7} parent=11 // pred_region
        _
      $region32: #{autoencoder_forward.7} parent=11 // pred_fallthru
        _
      // Predicated region
      $region33: #{autoencoder_forward.7} parent=11 // pred_check
        %p353 = pneg %p171
      $region34: #{autoencoder_forward.7} parent=11 // pred_check_branch
        %355 = sbr.rel (%p353) target = $region36
      $region35: #{autoencoder_forward.7} parent=11 // pred_region
        _
      $region36: #{autoencoder_forward.7} parent=11 // pred_fallthru
        _
      // Predicated region
      $region37: #{autoencoder_forward.7} parent=11 // pred_check
        %p356 = pneg %p192
      $region38: #{autoencoder_forward.7} parent=11 // pred_check_branch
        %358 = sbr.rel (%p356) target = $region40
      $region39: #{autoencoder_forward.7} parent=11 // pred_region
        _
      $region40: #{autoencoder_forward.7} parent=11 // pred_fallthru
        _
      // Predicated region
      $region41: #{autoencoder_forward.7} parent=11 // pred_check
        %p359 = pneg %p213
      $region42: #{autoencoder_forward.7} parent=11 // pred_check_branch
        %361 = sbr.rel (%p359) target = $region44
      $region43: #{autoencoder_forward.7} parent=11 // pred_region
        _
      $region44: #{autoencoder_forward.7} parent=11 // pred_fallthru
        _
      // Predicated region
      $region45: #{autoencoder_forward.7} parent=11 // pred_check
        %p362 = pneg %p234
      $region46: #{autoencoder_forward.7} parent=11 // pred_check_branch
        %364 = sbr.rel (%p362) target = $region48
      $region47: #{autoencoder_forward.7} parent=11 // pred_region
        _
      $region48: #{autoencoder_forward.7} parent=11 // pred_fallthru
        _
      // Predicated region
      $region49: #{autoencoder_forward.7} parent=11 // pred_check
        %p365 = pneg %p255
      $region50: #{autoencoder_forward.7} parent=11 // pred_check_branch
        %367 = sbr.rel (%p365) target = $region52
      $region51: #{autoencoder_forward.7} parent=11 // pred_region
        _
      $region52: #{autoencoder_forward.7} parent=11 // pred_fallthru
        _
      // Predicated region
      $region53: #{autoencoder_forward.7} parent=11 // pred_check
        %p368 = pneg %p276
      $region54: #{autoencoder_forward.7} parent=11 // pred_check_branch
        %370 = sbr.rel (%p368) target = $region56
      $region55: #{autoencoder_forward.7} parent=11 // pred_region
        _
      $region56: #{autoencoder_forward.7} parent=11 // pred_fallthru
        _
      // Predicated region
      $region57: #{autoencoder_forward.7} parent=11 // pred_check
        %p371 = pneg %p297
      $region58: #{autoencoder_forward.7} parent=11 // pred_check_branch
        %373 = sbr.rel (%p371) target = $region60
      $region59: #{autoencoder_forward.7} parent=11 // pred_region
        _
      $region60: #{autoencoder_forward.7} parent=11 // pred_fallthru
        _
    $region12: #{autoencoder_forward.7} parent=5 // pred_fallthru
      _
    %p374 = scmp.lt.s32.totalorder %s19, 2
    // Predicated region
    $region61: #{autoencoder_forward.7} parent=5 // pred_check
      %p375 = pneg %p374
    $region62: #{autoencoder_forward.7} parent=5 // pred_check_branch
      %377 = sbr.rel (%p375) target = $region64
    $region63: #{autoencoder_forward.7} parent=5 // pred_region
      // Predicated region
      $region65: #{autoencoder_forward.7} parent=63 // pred_check
        %p378 = pneg %p39
      $region66: #{autoencoder_forward.7} parent=63 // pred_check_branch
        %380 = sbr.rel (%p378) target = $region68
      $region67: #{autoencoder_forward.7} parent=63 // pred_region
        %p381 = scmp.lt.s32.totalorder %s19, 1
        %s382 = scalar_select %p381, %s19, 1
        %s383 = smul.addr %s382, 8
        %s384 = scalar_lea.vmem %s0, %s383
      $region68: #{autoencoder_forward.7} parent=63 // pred_fallthru
        _
    $region64: #{autoencoder_forward.7} parent=5 // pred_fallthru
      _
    %p385 = scmp.le.s32.totalorder 1, %s19
    %p386 = scmp.lt.s32.totalorder %s19, 3
    %p387 = pnand %p385, %p386
    %p388 = pneg %p387
    // Predicated region
    $region69: #{autoencoder_forward.7} parent=5 // pred_check
      _
    $region70: #{autoencoder_forward.7} parent=5 // pred_check_branch
      %390 = sbr.rel (%p387) target = $region72
    $region71: #{autoencoder_forward.7} parent=5 // pred_region
      %s391 = ssub.s32 %s19, 1
      %p392 = scmp.lt.s32.totalorder %s24, 1
      %s393 = scalar_select %p392, %s24, 1
      %s394 = smul.addr %s393, 8
      %s395 = scalar_lea.vmem %s0, %s394
      %p396 = pneg %p45
      %p397 = pneg %p42
      %p398 = pneg %p66
      %p399 = pneg %p63
      %p400 = pneg %p87
      %p401 = pneg %p84
      %p402 = pneg %p108
      %p403 = pneg %p105
      %p404 = pneg %p129
      %p405 = pneg %p126
      %p406 = pneg %p150
      %p407 = pneg %p147
      %p408 = pneg %p171
      %p409 = pneg %p168
      %p410 = pneg %p192
      %p411 = pneg %p189
      %p412 = pneg %p213
      %p413 = pneg %p210
      %p414 = pneg %p234
      %p415 = pneg %p231
      %p416 = pneg %p255
      %p417 = pneg %p252
      %p418 = pneg %p276
      %p419 = pneg %p273
      %p420 = pneg %p297
      %p421 = pneg %p294
      %p422 = pneg %p323
      %p423 = pneg %p320
      %p424 = scmp.lt.s32.totalorder %s24, 1
      %s425 = scalar_select %p424, %s24, 1
      %s426 = smul.addr %s425, 8
      %s427 = scalar_lea.vmem %s13, %s426
      %p428 = scmp.lt.s32.totalorder %s24, 1
      %s429 = scalar_select %p428, %s24, 1
      %s430 = smul.addr %s429, 8
      %s431 = scalar_lea.vmem %s0, %s430
      %p432 = scmp.lt.s32.totalorder %s24, 1
      %s433 = scalar_select %p432, %s24, 1
      %s434 = smul.addr %s433, 8
      %s435 = scalar_lea.vmem %s13, %s434
      %v436 = vld [vmem:[%s431] sm:$0x1f]
      %v437 = vld [vmem:[%s1] sm:$0xff]
      %v438 = vld [vmem:[%s1 + $0x8] sm:$0xff]
      %v439 = vld [vmem:[%s1 + $0x10] sm:$0xff]
      %v440 = vld [vmem:[%s1 + $0x18] sm:$0xff]
      %v441 = vld [vmem:[%s2] sm:$0x1]
      %v442 = vld [vmem:[%s3] sm:$0xff]
      %v443 = vld [vmem:[%s3 + $0x8] sm:$0xff]
      %v444 = vld [vmem:[%s3 + $0x10] sm:$0xff]
      %v445 = vld [vmem:[%s3 + $0x18] sm:$0xff]
      %v446 = vld [vmem:[%s4] sm:$0x1]
      %v448 = vlaneseq
      %v449 = vshrl.u32 %v448, 7
      %v450 = vsub.s32 0, %v449
      %v451 = vrot.slane %v441, %v450
      %vm453 = vcmask 261120
      %v455 = vsel %vm453, %v436, 0
      %457 = vmatprep.subr.mxu0 0.0
      %458 = vmatpush1.msra.mxu0 0.0
      %459 = vmatprep.subr.mxu0 0.0
      %460 = vmatpush1.msra.mxu0 0.0
      %461 = vmatprep.subr.mxu0 0.0
      %462 = vmatpush1.msra.mxu0 0.0
      %463 = vmatprep.subr.mxu0 0.0
      %464 = vmatpush1.msra.mxu0 0.0
      %465 = vmatprep.subr.mxu0 0.0
      %466 = vmatpush1.msra.mxu0 0.0
      %467 = vmatprep.subr.mxu0 0.0
      %468 = vmatpush1.msra.mxu0 0.0
      %469 = vmatprep.subr.mxu0 0.0
      %470 = vmatpush1.msra.mxu0 0.0
      %471 = vmatprep.subr.mxu0 0.0
      %472 = vmatpush1.msra.mxu0 0.0
      %473 = vmatprep.subr.mxu0 0.0
      %474 = vmatpush1.msra.mxu0 0.0
      %475 = vmatprep.subr.mxu0 0.0
      %476 = vmatpush1.msra.mxu0 0.0
      %477 = vmatprep.subr.mxu0 0.0
      %478 = vmatpush1.msra.mxu0 0.0
      %479 = vmatprep.subr.mxu0 0.0
      %480 = vmatpush1.msra.mxu0 0.0
      %481 = vmatprep.subr.mxu0 0.0
      %482 = vmatpush1.msra.mxu0 %v440
      %483 = vmatprep.subr.mxu0 0.0
      %484 = vmatpush1.msra.mxu0 %v439
      %485 = vmatprep.subr.mxu0 0.0
      %486 = vmatpush1.msra.mxu0 %v438
      %487 = vmatprep.subr.mxu0 0.0
      %488 = vmatpush1.msra.mxu0 %v437
      %489 = vmatprep.subr.mxu0 0.0
      %490 = vmatpush2.msra.mxu0 0.0
      %491 = vmatprep.subr.mxu0 0.0
      %492 = vmatpush2.msra.mxu0 0.0
      %493 = vmatprep.subr.mxu0 0.0
      %494 = vmatpush2.msra.mxu0 0.0
      %495 = vmatprep.subr.mxu0 0.0
      %496 = vmatpush2.msra.mxu0 0.0
      %497 = vmatprep.subr.mxu0 0.0
      %498 = vmatpush2.msra.mxu0 0.0
      %499 = vmatprep.subr.mxu0 0.0
      %500 = vmatpush2.msra.mxu0 0.0
      %501 = vmatprep.subr.mxu0 0.0
      %502 = vmatpush2.msra.mxu0 0.0
      %503 = vmatprep.subr.mxu0 0.0
      %504 = vmatpush2.msra.mxu0 0.0
      %505 = vmatprep.subr.mxu0 0.0
      %506 = vmatpush2.msra.mxu0 0.0
      %507 = vmatprep.subr.mxu0 0.0
      %508 = vmatpush2.msra.mxu0 0.0
      %509 = vmatprep.subr.mxu0 0.0
      %510 = vmatpush2.msra.mxu0 0.0
      %511 = vmatprep.subr.mxu0 0.0
      %512 = vmatpush2.msra.mxu0 0.0
      %513 = vmatprep.subr.mxu0 0.0
      %514 = vmatpush2.msra.mxu0 0.0
      %515 = vmatprep.subr.mxu0 0.0
      %516 = vmatpush2.msra.mxu0 0.0
      %517 = vmatprep.subr.mxu0 0.0
      %518 = vmatpush2.msra.mxu0 0.0
      %519 = vmatprep.subr.mxu0 0.0
      %520 = vmatpush2.msra.mxu0 0.0
      %521 = vmatprep.mubr.f32.mxu0 0.0
      %522 = vmatmul.mubr.f32.gmra.mxu0 %v455
      %v523 = vpop.f32.mrf.mxu0
      %v524 = vadd.f32 %v451, %v523
      %v525 = vpop.f32.mrf.mxu0
      %526 = vdwg.mxu0
      %528 = vrot.lane.b32.xlu0 %v524, 96
      %v529 = vpop.permute.xlu0 %528
      %vm530 = vcmask 64512
      %v531 = vsel %vm530, %v524, 0
      %v533 = vsel %vm530, %v529, 0
      %535 = vmatprep.subr.mxu0 0.0
      %536 = vmatpush1.xpose.msra.mxu0 0.0
      %537 = vmatprep.subr.mxu0 0.0
      %538 = vmatpush1.xpose.msra.mxu0 0.0
      %539 = vmatprep.subr.mxu0 0.0
      %540 = vmatpush1.xpose.msra.mxu0 0.0
      %541 = vmatprep.subr.mxu0 0.0
      %542 = vmatpush1.xpose.msra.mxu0 0.0
      %543 = vmatprep.subr.mxu0 0.0
      %544 = vmatpush1.xpose.msra.mxu0 0.0
      %545 = vmatprep.subr.mxu0 0.0
      %546 = vmatpush1.xpose.msra.mxu0 0.0
      %547 = vmatprep.subr.mxu0 0.0
      %548 = vmatpush1.xpose.msra.mxu0 0.0
      %549 = vmatprep.subr.mxu0 0.0
      %550 = vmatpush1.xpose.msra.mxu0 0.0
      %551 = vmatprep.subr.mxu0 0.0
      %552 = vmatpush1.xpose.msra.mxu0 0.0
      %553 = vmatprep.subr.mxu0 0.0
      %554 = vmatpush1.xpose.msra.mxu0 0.0
      %555 = vmatprep.subr.mxu0 0.0
      %556 = vmatpush1.xpose.msra.mxu0 0.0
      %557 = vmatprep.subr.mxu0 0.0
      %558 = vmatpush1.xpose.msra.mxu0 0.0
      %559 = vmatprep.subr.mxu0 0.0
      %560 = vmatpush1.xpose.msra.mxu0 0.0
      %561 = vmatprep.subr.mxu0 0.0
      %562 = vmatpush1.xpose.msra.mxu0 0.0
      %563 = vmatprep.subr.mxu0 0.0
      %564 = vmatpush1.xpose.msra.mxu0 0.0
      %565 = vmatprep.subr.mxu0 0.0
      %566 = vmatpush1.xpose.msra.mxu0 %v533
      %567 = vmatprep.subr.mxu0 0.0
      %568 = vmatpush2.xpose.msra.mxu0 0.0
      %569 = vmatprep.subr.mxu0 0.0
      %570 = vmatpush2.xpose.msra.mxu0 0.0
      %571 = vmatprep.subr.mxu0 0.0
      %572 = vmatpush2.xpose.msra.mxu0 0.0
      %573 = vmatprep.subr.mxu0 0.0
      %574 = vmatpush2.xpose.msra.mxu0 0.0
      %575 = vmatprep.subr.mxu0 0.0
      %576 = vmatpush2.xpose.msra.mxu0 0.0
      %577 = vmatprep.subr.mxu0 0.0
      %578 = vmatpush2.xpose.msra.mxu0 0.0
      %579 = vmatprep.subr.mxu0 0.0
      %580 = vmatpush2.xpose.msra.mxu0 0.0
      %581 = vmatprep.subr.mxu0 0.0
      %582 = vmatpush2.xpose.msra.mxu0 0.0
      %583 = vmatprep.subr.mxu0 0.0
      %584 = vmatpush2.xpose.msra.mxu0 0.0
      %585 = vmatprep.subr.mxu0 0.0
      %586 = vmatpush2.xpose.msra.mxu0 0.0
      %587 = vmatprep.subr.mxu0 0.0
      %588 = vmatpush2.xpose.msra.mxu0 0.0
      %589 = vmatprep.subr.mxu0 0.0
      %590 = vmatpush2.xpose.msra.mxu0 0.0
      %591 = vmatprep.subr.mxu0 0.0
      %592 = vmatpush2.xpose.msra.mxu0 0.0
      %593 = vmatprep.subr.mxu0 0.0
      %594 = vmatpush2.xpose.msra.mxu0 0.0
      %595 = vmatprep.subr.mxu0 0.0
      %596 = vmatpush2.xpose.msra.mxu0 0.0
      %597 = vmatprep.subr.mxu0 0.0
      %598 = vmatpush2.xpose.msra.mxu0 0.0
      %599 = vmatprep.mubr.f32.mxu0 0.0
      %600 = vmatmul.mubr.f32.gmra.mxu0 %v531
      %v601 = vpop.f32.mrf.mxu0
      %v602 = vadd.f32 0.0, %v601
      %v603 = vpop.f32.mrf.mxu0
      %604 = vdwg.mxu0
      %vm605 = vcmask 36864
      %v606 = vsel %vm605, %v602, -inf
      %607 = vmax.xlane.f32.xlu0 %v606
      %v608 = vpop.xlane.xlu0 %607
      %v609 = vsub.f32 %v602, %v608
      %v610 = vmul.f32 %v609, 1.442695
      %v611 = vpow.pop %v610
      %v612 = vsel %vm605, %v611, 0.0
      %613 = vadd.xlane.f32.xlu0 %v612
      %v614 = vpop.xlane.xlu0 %613
      %v615 = vrcp.pop %v614
      %v616 = vmul.f32 %v611, %v615
      %617 = vrot.lane.b32.xlu0 %v524, 64
      %v618 = vpop.permute.xlu0 %617
      %vm619 = vcmask 39936
      %v621 = vsel %vm619, %v616, 0
      %vm623 = vcmask 1044480
      %v624 = vsel %vm623, %v618, 0
      %626 = vmatprep.subr.mxu0 0.0
      %627 = vmatpush1.msra.mxu0 0.0
      %628 = vmatprep.subr.mxu0 0.0
      %629 = vmatpush1.msra.mxu0 0.0
      %630 = vmatprep.subr.mxu0 0.0
      %631 = vmatpush1.msra.mxu0 0.0
      %632 = vmatprep.subr.mxu0 0.0
      %633 = vmatpush1.msra.mxu0 0.0
      %634 = vmatprep.subr.mxu0 0.0
      %635 = vmatpush1.msra.mxu0 0.0
      %636 = vmatprep.subr.mxu0 0.0
      %637 = vmatpush1.msra.mxu0 0.0
      %638 = vmatprep.subr.mxu0 0.0
      %639 = vmatpush1.msra.mxu0 0.0
      %640 = vmatprep.subr.mxu0 0.0
      %641 = vmatpush1.msra.mxu0 0.0
      %642 = vmatprep.subr.mxu0 0.0
      %643 = vmatpush1.msra.mxu0 0.0
      %644 = vmatprep.subr.mxu0 0.0
      %645 = vmatpush1.msra.mxu0 0.0
      %646 = vmatprep.subr.mxu0 0.0
      %647 = vmatpush1.msra.mxu0 0.0
      %648 = vmatprep.subr.mxu0 0.0
      %649 = vmatpush1.msra.mxu0 0.0
      %650 = vmatprep.subr.mxu0 0.0
      %651 = vmatpush1.msra.mxu0 0.0
      %652 = vmatprep.subr.mxu0 0.0
      %653 = vmatpush1.msra.mxu0 0.0
      %654 = vmatprep.subr.mxu0 0.0
      %655 = vmatpush1.msra.mxu0 0.0
      %656 = vmatprep.subr.mxu0 0.0
      %657 = vmatpush1.msra.mxu0 %v624
      %658 = vmatprep.subr.mxu0 0.0
      %659 = vmatpush2.msra.mxu0 0.0
      %660 = vmatprep.subr.mxu0 0.0
      %661 = vmatpush2.msra.mxu0 0.0
      %662 = vmatprep.subr.mxu0 0.0
      %663 = vmatpush2.msra.mxu0 0.0
      %664 = vmatprep.subr.mxu0 0.0
      %665 = vmatpush2.msra.mxu0 0.0
      %666 = vmatprep.subr.mxu0 0.0
      %667 = vmatpush2.msra.mxu0 0.0
      %668 = vmatprep.subr.mxu0 0.0
      %669 = vmatpush2.msra.mxu0 0.0
      %670 = vmatprep.subr.mxu0 0.0
      %671 = vmatpush2.msra.mxu0 0.0
      %672 = vmatprep.subr.mxu0 0.0
      %673 = vmatpush2.msra.mxu0 0.0
      %674 = vmatprep.subr.mxu0 0.0
      %675 = vmatpush2.msra.mxu0 0.0
      %676 = vmatprep.subr.mxu0 0.0
      %677 = vmatpush2.msra.mxu0 0.0
      %678 = vmatprep.subr.mxu0 0.0
      %679 = vmatpush2.msra.mxu0 0.0
      %680 = vmatprep.subr.mxu0 0.0
      %681 = vmatpush2.msra.mxu0 0.0
      %682 = vmatprep.subr.mxu0 0.0
      %683 = vmatpush2.msra.mxu0 0.0
      %684 = vmatprep.subr.mxu0 0.0
      %685 = vmatpush2.msra.mxu0 0.0
      %686 = vmatprep.subr.mxu0 0.0
      %687 = vmatpush2.msra.mxu0 0.0
      %688 = vmatprep.subr.mxu0 0.0
      %689 = vmatpush2.msra.mxu0 0.0
      %690 = vmatprep.mubr.f32.mxu0 0.0
      %691 = vmatmul.mubr.f32.gmra.mxu0 %v621
      %v692 = vpop.f32.mrf.mxu0
      %v693 = vadd.f32 0.0, %v692
      %v694 = vpop.f32.mrf.mxu0
      %695 = vdwg.mxu0
      %696 = vrot.lane.b32.xlu0 %v524, 120
      %v697 = vpop.permute.xlu0 %696
      %698 = vrot.lane.b32.xlu0 %v524, 88
      %v699 = vpop.permute.xlu0 %698
      %v700 = vsel %vm530, %v697, 0
      %v702 = vsel %vm530, %v699, 0
      %704 = vmatprep.subr.mxu0 0.0
      %705 = vmatpush1.xpose.msra.mxu0 0.0
      %706 = vmatprep.subr.mxu0 0.0
      %707 = vmatpush1.xpose.msra.mxu0 0.0
      %708 = vmatprep.subr.mxu0 0.0
      %709 = vmatpush1.xpose.msra.mxu0 0.0
      %710 = vmatprep.subr.mxu0 0.0
      %711 = vmatpush1.xpose.msra.mxu0 0.0
      %712 = vmatprep.subr.mxu0 0.0
      %713 = vmatpush1.xpose.msra.mxu0 0.0
      %714 = vmatprep.subr.mxu0 0.0
      %715 = vmatpush1.xpose.msra.mxu0 0.0
      %716 = vmatprep.subr.mxu0 0.0
      %717 = vmatpush1.xpose.msra.mxu0 0.0
      %718 = vmatprep.subr.mxu0 0.0
      %719 = vmatpush1.xpose.msra.mxu0 0.0
      %720 = vmatprep.subr.mxu0 0.0
      %721 = vmatpush1.xpose.msra.mxu0 0.0
      %722 = vmatprep.subr.mxu0 0.0
      %723 = vmatpush1.xpose.msra.mxu0 0.0
      %724 = vmatprep.subr.mxu0 0.0
      %725 = vmatpush1.xpose.msra.mxu0 0.0
      %726 = vmatprep.subr.mxu0 0.0
      %727 = vmatpush1.xpose.msra.mxu0 0.0
      %728 = vmatprep.subr.mxu0 0.0
      %729 = vmatpush1.xpose.msra.mxu0 0.0
      %730 = vmatprep.subr.mxu0 0.0
      %731 = vmatpush1.xpose.msra.mxu0 0.0
      %732 = vmatprep.subr.mxu0 0.0
      %733 = vmatpush1.xpose.msra.mxu0 0.0
      %734 = vmatprep.subr.mxu0 0.0
      %735 = vmatpush1.xpose.msra.mxu0 %v702
      %736 = vmatprep.subr.mxu0 0.0
      %737 = vmatpush2.xpose.msra.mxu0 0.0
      %738 = vmatprep.subr.mxu0 0.0
      %739 = vmatpush2.xpose.msra.mxu0 0.0
      %740 = vmatprep.subr.mxu0 0.0
      %741 = vmatpush2.xpose.msra.mxu0 0.0
      %742 = vmatprep.subr.mxu0 0.0
      %743 = vmatpush2.xpose.msra.mxu0 0.0
      %744 = vmatprep.subr.mxu0 0.0
      %745 = vmatpush2.xpose.msra.mxu0 0.0
      %746 = vmatprep.subr.mxu0 0.0
      %747 = vmatpush2.xpose.msra.mxu0 0.0
      %748 = vmatprep.subr.mxu0 0.0
      %749 = vmatpush2.xpose.msra.mxu0 0.0
      %750 = vmatprep.subr.mxu0 0.0
      %751 = vmatpush2.xpose.msra.mxu0 0.0
      %752 = vmatprep.subr.mxu0 0.0
      %753 = vmatpush2.xpose.msra.mxu0 0.0
      %754 = vmatprep.subr.mxu0 0.0
      %755 = vmatpush2.xpose.msra.mxu0 0.0
      %756 = vmatprep.subr.mxu0 0.0
      %757 = vmatpush2.xpose.msra.mxu0 0.0
      %758 = vmatprep.subr.mxu0 0.0
      %759 = vmatpush2.xpose.msra.mxu0 0.0
      %760 = vmatprep.subr.mxu0 0.0
      %761 = vmatpush2.xpose.msra.mxu0 0.0
      %762 = vmatprep.subr.mxu0 0.0
      %763 = vmatpush2.xpose.msra.mxu0 0.0
      %764 = vmatprep.subr.mxu0 0.0
      %765 = vmatpush2.xpose.msra.mxu0 0.0
      %766 = vmatprep.subr.mxu0 0.0
      %767 = vmatpush2.xpose.msra.mxu0 0.0
      %768 = vmatprep.mubr.f32.mxu0 0.0
      %769 = vmatmul.mubr.f32.gmra.mxu0 %v700
      %v770 = vpop.f32.mrf.mxu0
      %v771 = vadd.f32 0.0, %v770
      %v772 = vpop.f32.mrf.mxu0
      %773 = vdwg.mxu0
      %v774 = vsel %vm605, %v771, -inf
      %775 = vmax.xlane.f32.xlu0 %v774
      %v776 = vpop.xlane.xlu0 %775
      %v777 = vsub.f32 %v771, %v776
      %v778 = vmul.f32 %v777, 1.442695
      %v779 = vpow.pop %v778
      %v780 = vsel %vm605, %v779, 0.0
      %781 = vadd.xlane.f32.xlu0 %v780
      %v782 = vpop.xlane.xlu0 %781
      %v783 = vrcp.pop %v782
      %v784 = vmul.f32 %v779, %v783
      %785 = vrot.lane.b32.xlu0 %v524, 56
      %v786 = vpop.permute.xlu0 %785
      %v788 = vsel %vm619, %v784, 0
      %v790 = vsel %vm623, %v786, 0
      %792 = vmatprep.subr.mxu0 0.0
      %793 = vmatpush1.msra.mxu0 0.0
      %794 = vmatprep.subr.mxu0 0.0
      %795 = vmatpush1.msra.mxu0 0.0
      %796 = vmatprep.subr.mxu0 0.0
      %797 = vmatpush1.msra.mxu0 0.0
      %798 = vmatprep.subr.mxu0 0.0
      %799 = vmatpush1.msra.mxu0 0.0
      %800 = vmatprep.subr.mxu0 0.0
      %801 = vmatpush1.msra.mxu0 0.0
      %802 = vmatprep.subr.mxu0 0.0
      %803 = vmatpush1.msra.mxu0 0.0
      %804 = vmatprep.subr.mxu0 0.0
      %805 = vmatpush1.msra.mxu0 0.0
      %806 = vmatprep.subr.mxu0 0.0
      %807 = vmatpush1.msra.mxu0 0.0
      %808 = vmatprep.subr.mxu0 0.0
      %809 = vmatpush1.msra.mxu0 0.0
      %810 = vmatprep.subr.mxu0 0.0
      %811 = vmatpush1.msra.mxu0 0.0
      %812 = vmatprep.subr.mxu0 0.0
      %813 = vmatpush1.msra.mxu0 0.0
      %814 = vmatprep.subr.mxu0 0.0
      %815 = vmatpush1.msra.mxu0 0.0
      %816 = vmatprep.subr.mxu0 0.0
      %817 = vmatpush1.msra.mxu0 0.0
      %818 = vmatprep.subr.mxu0 0.0
      %819 = vmatpush1.msra.mxu0 0.0
      %820 = vmatprep.subr.mxu0 0.0
      %821 = vmatpush1.msra.mxu0 0.0
      %822 = vmatprep.subr.mxu0 0.0
      %823 = vmatpush1.msra.mxu0 %v790
      %824 = vmatprep.subr.mxu0 0.0
      %825 = vmatpush2.msra.mxu0 0.0
      %826 = vmatprep.subr.mxu0 0.0
      %827 = vmatpush2.msra.mxu0 0.0
      %828 = vmatprep.subr.mxu0 0.0
      %829 = vmatpush2.msra.mxu0 0.0
      %830 = vmatprep.subr.mxu0 0.0
      %831 = vmatpush2.msra.mxu0 0.0
      %832 = vmatprep.subr.mxu0 0.0
      %833 = vmatpush2.msra.mxu0 0.0
      %834 = vmatprep.subr.mxu0 0.0
      %835 = vmatpush2.msra.mxu0 0.0
      %836 = vmatprep.subr.mxu0 0.0
      %837 = vmatpush2.msra.mxu0 0.0
      %838 = vmatprep.subr.mxu0 0.0
      %839 = vmatpush2.msra.mxu0 0.0
      %840 = vmatprep.subr.mxu0 0.0
      %841 = vmatpush2.msra.mxu0 0.0
      %842 = vmatprep.subr.mxu0 0.0
      %843 = vmatpush2.msra.mxu0 0.0
      %844 = vmatprep.subr.mxu0 0.0
      %845 = vmatpush2.msra.mxu0 0.0
      %846 = vmatprep.subr.mxu0 0.0
      %847 = vmatpush2.msra.mxu0 0.0
      %848 = vmatprep.subr.mxu0 0.0
      %849 = vmatpush2.msra.mxu0 0.0
      %850 = vmatprep.subr.mxu0 0.0
      %851 = vmatpush2.msra.mxu0 0.0
      %852 = vmatprep.subr.mxu0 0.0
      %853 = vmatpush2.msra.mxu0 0.0
      %854 = vmatprep.subr.mxu0 0.0
      %855 = vmatpush2.msra.mxu0 0.0
      %856 = vmatprep.mubr.f32.mxu0 0.0
      %857 = vmatmul.mubr.f32.gmra.mxu0 %v788
      %v858 = vpop.f32.mrf.mxu0
      %v859 = vadd.f32 0.0, %v858
      %v860 = vpop.f32.mrf.mxu0
      %861 = vdwg.mxu0
      %862 = vrot.lane.b32.xlu0 %v524, 112
      %v863 = vpop.permute.xlu0 %862
      %864 = vrot.lane.b32.xlu0 %v524, 80
      %v865 = vpop.permute.xlu0 %864
      %v866 = vsel %vm530, %v863, 0
      %v868 = vsel %vm530, %v865, 0
      %870 = vmatprep.subr.mxu0 0.0
      %871 = vmatpush1.xpose.msra.mxu0 0.0
      %872 = vmatprep.subr.mxu0 0.0
      %873 = vmatpush1.xpose.msra.mxu0 0.0
      %874 = vmatprep.subr.mxu0 0.0
      %875 = vmatpush1.xpose.msra.mxu0 0.0
      %876 = vmatprep.subr.mxu0 0.0
      %877 = vmatpush1.xpose.msra.mxu0 0.0
      %878 = vmatprep.subr.mxu0 0.0
      %879 = vmatpush1.xpose.msra.mxu0 0.0
      %880 = vmatprep.subr.mxu0 0.0
      %881 = vmatpush1.xpose.msra.mxu0 0.0
      %882 = vmatprep.subr.mxu0 0.0
      %883 = vmatpush1.xpose.msra.mxu0 0.0
      %884 = vmatprep.subr.mxu0 0.0
      %885 = vmatpush1.xpose.msra.mxu0 0.0
      %886 = vmatprep.subr.mxu0 0.0
      %887 = vmatpush1.xpose.msra.mxu0 0.0
      %888 = vmatprep.subr.mxu0 0.0
      %889 = vmatpush1.xpose.msra.mxu0 0.0
      %890 = vmatprep.subr.mxu0 0.0
      %891 = vmatpush1.xpose.msra.mxu0 0.0
      %892 = vmatprep.subr.mxu0 0.0
      %893 = vmatpush1.xpose.msra.mxu0 0.0
      %894 = vmatprep.subr.mxu0 0.0
      %895 = vmatpush1.xpose.msra.mxu0 0.0
      %896 = vmatprep.subr.mxu0 0.0
      %897 = vmatpush1.xpose.msra.mxu0 0.0
      %898 = vmatprep.subr.mxu0 0.0
      %899 = vmatpush1.xpose.msra.mxu0 0.0
      %900 = vmatprep.subr.mxu0 0.0
      %901 = vmatpush1.xpose.msra.mxu0 %v868
      %902 = vmatprep.subr.mxu0 0.0
      %903 = vmatpush2.xpose.msra.mxu0 0.0
      %904 = vmatprep.subr.mxu0 0.0
      %905 = vmatpush2.xpose.msra.mxu0 0.0
      %906 = vmatprep.subr.mxu0 0.0
      %907 = vmatpush2.xpose.msra.mxu0 0.0
      %908 = vmatprep.subr.mxu0 0.0
      %909 = vmatpush2.xpose.msra.mxu0 0.0
      %910 = vmatprep.subr.mxu0 0.0
      %911 = vmatpush2.xpose.msra.mxu0 0.0
      %912 = vmatprep.subr.mxu0 0.0
      %913 = vmatpush2.xpose.msra.mxu0 0.0
      %914 = vmatprep.subr.mxu0 0.0
      %915 = vmatpush2.xpose.msra.mxu0 0.0
      %916 = vmatprep.subr.mxu0 0.0
      %917 = vmatpush2.xpose.msra.mxu0 0.0
      %918 = vmatprep.subr.mxu0 0.0
      %919 = vmatpush2.xpose.msra.mxu0 0.0
      %920 = vmatprep.subr.mxu0 0.0
      %921 = vmatpush2.xpose.msra.mxu0 0.0
      %922 = vmatprep.subr.mxu0 0.0
      %923 = vmatpush2.xpose.msra.mxu0 0.0
      %924 = vmatprep.subr.mxu0 0.0
      %925 = vmatpush2.xpose.msra.mxu0 0.0
      %926 = vmatprep.subr.mxu0 0.0
      %927 = vmatpush2.xpose.msra.mxu0 0.0
      %928 = vmatprep.subr.mxu0 0.0
      %929 = vmatpush2.xpose.msra.mxu0 0.0
      %930 = vmatprep.subr.mxu0 0.0
      %931 = vmatpush2.xpose.msra.mxu0 0.0
      %932 = vmatprep.subr.mxu0 0.0
      %933 = vmatpush2.xpose.msra.mxu0 0.0
      %934 = vmatprep.mubr.f32.mxu0 0.0
      %935 = vmatmul.mubr.f32.gmra.mxu0 %v866
      %v936 = vpop.f32.mrf.mxu0
      %v937 = vadd.f32 0.0, %v936
      %v938 = vpop.f32.mrf.mxu0
      %939 = vdwg.mxu0
      %v940 = vsel %vm605, %v937, -inf
      %941 = vmax.xlane.f32.xlu0 %v940
      %v942 = vpop.xlane.xlu0 %941
      %v943 = vsub.f32 %v937, %v942
      %v944 = vmul.f32 %v943, 1.442695
      %v945 = vpow.pop %v944
      %v946 = vsel %vm605, %v945, 0.0
      %947 = vadd.xlane.f32.xlu0 %v946
      %v948 = vpop.xlane.xlu0 %947
      %v949 = vrcp.pop %v948
      %v950 = vmul.f32 %v945, %v949
      %951 = vrot.lane.b32.xlu0 %v524, 48
      %v952 = vpop.permute.xlu0 %951
      %v954 = vsel %vm619, %v950, 0
      %v956 = vsel %vm623, %v952, 0
      %958 = vmatprep.subr.mxu0 0.0
      %959 = vmatpush1.msra.mxu0 0.0
      %960 = vmatprep.subr.mxu0 0.0
      %961 = vmatpush1.msra.mxu0 0.0
      %962 = vmatprep.subr.mxu0 0.0
      %963 = vmatpush1.msra.mxu0 0.0
      %964 = vmatprep.subr.mxu0 0.0
      %965 = vmatpush1.msra.mxu0 0.0
      %966 = vmatprep.subr.mxu0 0.0
      %967 = vmatpush1.msra.mxu0 0.0
      %968 = vmatprep.subr.mxu0 0.0
      %969 = vmatpush1.msra.mxu0 0.0
      %970 = vmatprep.subr.mxu0 0.0
      %971 = vmatpush1.msra.mxu0 0.0
      %972 = vmatprep.subr.mxu0 0.0
      %973 = vmatpush1.msra.mxu0 0.0
      %974 = vmatprep.subr.mxu0 0.0
      %975 = vmatpush1.msra.mxu0 0.0
      %976 = vmatprep.subr.mxu0 0.0
      %977 = vmatpush1.msra.mxu0 0.0
      %978 = vmatprep.subr.mxu0 0.0
      %979 = vmatpush1.msra.mxu0 0.0
      %980 = vmatprep.subr.mxu0 0.0
      %981 = vmatpush1.msra.mxu0 0.0
      %982 = vmatprep.subr.mxu0 0.0
      %983 = vmatpush1.msra.mxu0 0.0
      %984 = vmatprep.subr.mxu0 0.0
      %985 = vmatpush1.msra.mxu0 0.0
      %986 = vmatprep.subr.mxu0 0.0
      %987 = vmatpush1.msra.mxu0 0.0
      %988 = vmatprep.subr.mxu0 0.0
      %989 = vmatpush1.msra.mxu0 %v956
      %990 = vmatprep.subr.mxu0 0.0
      %991 = vmatpush2.msra.mxu0 0.0
      %992 = vmatprep.subr.mxu0 0.0
      %993 = vmatpush2.msra.mxu0 0.0
      %994 = vmatprep.subr.mxu0 0.0
      %995 = vmatpush2.msra.mxu0 0.0
      %996 = vmatprep.subr.mxu0 0.0
      %997 = vmatpush2.msra.mxu0 0.0
      %998 = vmatprep.subr.mxu0 0.0
      %999 = vmatpush2.msra.mxu0 0.0
      %1000 = vmatprep.subr.mxu0 0.0
      %1001 = vmatpush2.msra.mxu0 0.0
      %1002 = vmatprep.subr.mxu0 0.0
      %1003 = vmatpush2.msra.mxu0 0.0
      %1004 = vmatprep.subr.mxu0 0.0
      %1005 = vmatpush2.msra.mxu0 0.0
      %1006 = vmatprep.subr.mxu0 0.0
      %1007 = vmatpush2.msra.mxu0 0.0
      %1008 = vmatprep.subr.mxu0 0.0
      %1009 = vmatpush2.msra.mxu0 0.0
      %1010 = vmatprep.subr.mxu0 0.0
      %1011 = vmatpush2.msra.mxu0 0.0
      %1012 = vmatprep.subr.mxu0 0.0
      %1013 = vmatpush2.msra.mxu0 0.0
      %1014 = vmatprep.subr.mxu0 0.0
      %1015 = vmatpush2.msra.mxu0 0.0
      %1016 = vmatprep.subr.mxu0 0.0
      %1017 = vmatpush2.msra.mxu0 0.0
      %1018 = vmatprep.subr.mxu0 0.0
      %1019 = vmatpush2.msra.mxu0 0.0
      %1020 = vmatprep.subr.mxu0 0.0
      %1021 = vmatpush2.msra.mxu0 0.0
      %1022 = vmatprep.mubr.f32.mxu0 0.0
      %1023 = vmatmul.mubr.f32.gmra.mxu0 %v954
      %v1024 = vpop.f32.mrf.mxu0
      %v1025 = vadd.f32 0.0, %v1024
      %v1026 = vpop.f32.mrf.mxu0
      %1027 = vdwg.mxu0
      %1028 = vrot.lane.b32.xlu0 %v524, 104
      %v1029 = vpop.permute.xlu0 %1028
      %1030 = vrot.lane.b32.xlu0 %v524, 72
      %v1031 = vpop.permute.xlu0 %1030
      %v1032 = vsel %vm530, %v1029, 0
      %v1034 = vsel %vm530, %v1031, 0
      %1036 = vmatprep.subr.mxu0 0.0
      %1037 = vmatpush1.xpose.msra.mxu0 0.0
      %1038 = vmatprep.subr.mxu0 0.0
      %1039 = vmatpush1.xpose.msra.mxu0 0.0
      %1040 = vmatprep.subr.mxu0 0.0
      %1041 = vmatpush1.xpose.msra.mxu0 0.0
      %1042 = vmatprep.subr.mxu0 0.0
      %1043 = vmatpush1.xpose.msra.mxu0 0.0
      %1044 = vmatprep.subr.mxu0 0.0
      %1045 = vmatpush1.xpose.msra.mxu0 0.0
      %1046 = vmatprep.subr.mxu0 0.0
      %1047 = vmatpush1.xpose.msra.mxu0 0.0
      %1048 = vmatprep.subr.mxu0 0.0
      %1049 = vmatpush1.xpose.msra.mxu0 0.0
      %1050 = vmatprep.subr.mxu0 0.0
      %1051 = vmatpush1.xpose.msra.mxu0 0.0
      %1052 = vmatprep.subr.mxu0 0.0
      %1053 = vmatpush1.xpose.msra.mxu0 0.0
      %1054 = vmatprep.subr.mxu0 0.0
      %1055 = vmatpush1.xpose.msra.mxu0 0.0
      %1056 = vmatprep.subr.mxu0 0.0
      %1057 = vmatpush1.xpose.msra.mxu0 0.0
      %1058 = vmatprep.subr.mxu0 0.0
      %1059 = vmatpush1.xpose.msra.mxu0 0.0
      %1060 = vmatprep.subr.mxu0 0.0
      %1061 = vmatpush1.xpose.msra.mxu0 0.0
      %1062 = vmatprep.subr.mxu0 0.0
      %1063 = vmatpush1.xpose.msra.mxu0 0.0
      %1064 = vmatprep.subr.mxu0 0.0
      %1065 = vmatpush1.xpose.msra.mxu0 0.0
      %1066 = vmatprep.subr.mxu0 0.0
      %1067 = vmatpush1.xpose.msra.mxu0 %v1034
      %1068 = vmatprep.subr.mxu0 0.0
      %1069 = vmatpush2.xpose.msra.mxu0 0.0
      %1070 = vmatprep.subr.mxu0 0.0
      %1071 = vmatpush2.xpose.msra.mxu0 0.0
      %1072 = vmatprep.subr.mxu0 0.0
      %1073 = vmatpush2.xpose.msra.mxu0 0.0
      %1074 = vmatprep.subr.mxu0 0.0
      %1075 = vmatpush2.xpose.msra.mxu0 0.0
      %1076 = vmatprep.subr.mxu0 0.0
      %1077 = vmatpush2.xpose.msra.mxu0 0.0
      %1078 = vmatprep.subr.mxu0 0.0
      %1079 = vmatpush2.xpose.msra.mxu0 0.0
      %1080 = vmatprep.subr.mxu0 0.0
      %1081 = vmatpush2.xpose.msra.mxu0 0.0
      %1082 = vmatprep.subr.mxu0 0.0
      %1083 = vmatpush2.xpose.msra.mxu0 0.0
      %1084 = vmatprep.subr.mxu0 0.0
      %1085 = vmatpush2.xpose.msra.mxu0 0.0
      %1086 = vmatprep.subr.mxu0 0.0
      %1087 = vmatpush2.xpose.msra.mxu0 0.0
      %1088 = vmatprep.subr.mxu0 0.0
      %1089 = vmatpush2.xpose.msra.mxu0 0.0
      %1090 = vmatprep.subr.mxu0 0.0
      %1091 = vmatpush2.xpose.msra.mxu0 0.0
      %1092 = vmatprep.subr.mxu0 0.0
      %1093 = vmatpush2.xpose.msra.mxu0 0.0
      %1094 = vmatprep.subr.mxu0 0.0
      %1095 = vmatpush2.xpose.msra.mxu0 0.0
      %1096 = vmatprep.subr.mxu0 0.0
      %1097 = vmatpush2.xpose.msra.mxu0 0.0
      %1098 = vmatprep.subr.mxu0 0.0
      %1099 = vmatpush2.xpose.msra.mxu0 0.0
      %1100 = vmatprep.mubr.f32.mxu0 0.0
      %1101 = vmatmul.mubr.f32.gmra.mxu0 %v1032
      %v1102 = vpop.f32.mrf.mxu0
      %v1103 = vadd.f32 0.0, %v1102
      %v1104 = vpop.f32.mrf.mxu0
      %1105 = vdwg.mxu0
      %v1106 = vsel %vm605, %v1103, -inf
      %1107 = vmax.xlane.f32.xlu0 %v1106
      %v1108 = vpop.xlane.xlu0 %1107
      %v1109 = vsub.f32 %v1103, %v1108
      %v1110 = vmul.f32 %v1109, 1.442695
      %v1111 = vpow.pop %v1110
      %v1112 = vsel %vm605, %v1111, 0.0
      %1113 = vadd.xlane.f32.xlu0 %v1112
      %v1114 = vpop.xlane.xlu0 %1113
      %v1115 = vrcp.pop %v1114
      %v1116 = vmul.f32 %v1111, %v1115
      %1117 = vrot.lane.b32.xlu0 %v524, 40
      %v1118 = vpop.permute.xlu0 %1117
      %v1120 = vsel %vm619, %v1116, 0
      %v1122 = vsel %vm623, %v1118, 0
      %1124 = vmatprep.subr.mxu0 0.0
      %1125 = vmatpush1.msra.mxu0 0.0
      %1126 = vmatprep.subr.mxu0 0.0
      %1127 = vmatpush1.msra.mxu0 0.0
      %1128 = vmatprep.subr.mxu0 0.0
      %1129 = vmatpush1.msra.mxu0 0.0
      %1130 = vmatprep.subr.mxu0 0.0
      %1131 = vmatpush1.msra.mxu0 0.0
      %1132 = vmatprep.subr.mxu0 0.0
      %1133 = vmatpush1.msra.mxu0 0.0
      %1134 = vmatprep.subr.mxu0 0.0
      %1135 = vmatpush1.msra.mxu0 0.0
      %1136 = vmatprep.subr.mxu0 0.0
      %1137 = vmatpush1.msra.mxu0 0.0
      %1138 = vmatprep.subr.mxu0 0.0
      %1139 = vmatpush1.msra.mxu0 0.0
      %1140 = vmatprep.subr.mxu0 0.0
      %1141 = vmatpush1.msra.mxu0 0.0
      %1142 = vmatprep.subr.mxu0 0.0
      %1143 = vmatpush1.msra.mxu0 0.0
      %1144 = vmatprep.subr.mxu0 0.0
      %1145 = vmatpush1.msra.mxu0 0.0
      %1146 = vmatprep.subr.mxu0 0.0
      %1147 = vmatpush1.msra.mxu0 0.0
      %1148 = vmatprep.subr.mxu0 0.0
      %1149 = vmatpush1.msra.mxu0 0.0
      %1150 = vmatprep.subr.mxu0 0.0
      %1151 = vmatpush1.msra.mxu0 0.0
      %1152 = vmatprep.subr.mxu0 0.0
      %1153 = vmatpush1.msra.mxu0 0.0
      %1154 = vmatprep.subr.mxu0 0.0
      %1155 = vmatpush1.msra.mxu0 %v1122
      %1156 = vmatprep.subr.mxu0 0.0
      %1157 = vmatpush2.msra.mxu0 0.0
      %1158 = vmatprep.subr.mxu0 0.0
      %1159 = vmatpush2.msra.mxu0 0.0
      %1160 = vmatprep.subr.mxu0 0.0
      %1161 = vmatpush2.msra.mxu0 0.0
      %1162 = vmatprep.subr.mxu0 0.0
      %1163 = vmatpush2.msra.mxu0 0.0
      %1164 = vmatprep.subr.mxu0 0.0
      %1165 = vmatpush2.msra.mxu0 0.0
      %1166 = vmatprep.subr.mxu0 0.0
      %1167 = vmatpush2.msra.mxu0 0.0
      %1168 = vmatprep.subr.mxu0 0.0
      %1169 = vmatpush2.msra.mxu0 0.0
      %1170 = vmatprep.subr.mxu0 0.0
      %1171 = vmatpush2.msra.mxu0 0.0
      %1172 = vmatprep.subr.mxu0 0.0
      %1173 = vmatpush2.msra.mxu0 0.0
      %1174 = vmatprep.subr.mxu0 0.0
      %1175 = vmatpush2.msra.mxu0 0.0
      %1176 = vmatprep.subr.mxu0 0.0
      %1177 = vmatpush2.msra.mxu0 0.0
      %1178 = vmatprep.subr.mxu0 0.0
      %1179 = vmatpush2.msra.mxu0 0.0
      %1180 = vmatprep.subr.mxu0 0.0
      %1181 = vmatpush2.msra.mxu0 0.0
      %1182 = vmatprep.subr.mxu0 0.0
      %1183 = vmatpush2.msra.mxu0 0.0
      %1184 = vmatprep.subr.mxu0 0.0
      %1185 = vmatpush2.msra.mxu0 0.0
      %1186 = vmatprep.subr.mxu0 0.0
      %1187 = vmatpush2.msra.mxu0 0.0
      %1188 = vmatprep.mubr.f32.mxu0 0.0
      %1189 = vmatmul.mubr.f32.gmra.mxu0 %v1120
      %v1190 = vpop.f32.mrf.mxu0
      %v1191 = vadd.f32 0.0, %v1190
      %v1192 = vpop.f32.mrf.mxu0
      %1193 = vdwg.mxu0
      %1195 = vrot.lane.b32.xlu0 %v859, 8
      %v1196 = vpop.permute.xlu0 %1195
      %1199 = vrot.lane.b32.xlu0 %v1025, 16
      %v1200 = vpop.permute.xlu0 %1199
      %1203 = vrot.lane.b32.xlu0 %v1191, 24
      %v1204 = vpop.permute.xlu0 %1203
      %v1206 = vsel %vm530, %v693, %v1196
      %vm1207 = vcmask 130048
      %v1208 = vsel %vm1207, %v1206, %v1200
      %vm1209 = vcmask 195584
      %v1210 = vsel %vm1209, %v1208, %v1204
      %v1212 = vlaneseq
      %v1213 = vshrl.u32 %v1212, 7
      %v1214 = vsub.s32 0, %v1213
      %v1215 = vrot.slane %v446, %v1214
      %v1218 = vsel %vm453, %v1210, 0
      %1220 = vmatprep.subr.mxu0 0.0
      %1221 = vmatpush1.msra.mxu0 0.0
      %1222 = vmatprep.subr.mxu0 0.0
      %1223 = vmatpush1.msra.mxu0 0.0
      %1224 = vmatprep.subr.mxu0 0.0
      %1225 = vmatpush1.msra.mxu0 0.0
      %1226 = vmatprep.subr.mxu0 0.0
      %1227 = vmatpush1.msra.mxu0 0.0
      %1228 = vmatprep.subr.mxu0 0.0
      %1229 = vmatpush1.msra.mxu0 0.0
      %1230 = vmatprep.subr.mxu0 0.0
      %1231 = vmatpush1.msra.mxu0 0.0
      %1232 = vmatprep.subr.mxu0 0.0
      %1233 = vmatpush1.msra.mxu0 0.0
      %1234 = vmatprep.subr.mxu0 0.0
      %1235 = vmatpush1.msra.mxu0 0.0
      %1236 = vmatprep.subr.mxu0 0.0
      %1237 = vmatpush1.msra.mxu0 0.0
      %1238 = vmatprep.subr.mxu0 0.0
      %1239 = vmatpush1.msra.mxu0 0.0
      %1240 = vmatprep.subr.mxu0 0.0
      %1241 = vmatpush1.msra.mxu0 0.0
      %1242 = vmatprep.subr.mxu0 0.0
      %1243 = vmatpush1.msra.mxu0 0.0
      %1244 = vmatprep.subr.mxu0 0.0
      %1245 = vmatpush1.msra.mxu0 %v445
      %1246 = vmatprep.subr.mxu0 0.0
      %1247 = vmatpush1.msra.mxu0 %v444
      %1248 = vmatprep.subr.mxu0 0.0
      %1249 = vmatpush1.msra.mxu0 %v443
      %1250 = vmatprep.subr.mxu0 0.0
      %1251 = vmatpush1.msra.mxu0 %v442
      %1252 = vmatprep.subr.mxu0 0.0
      %1253 = vmatpush2.msra.mxu0 0.0
      %1254 = vmatprep.subr.mxu0 0.0
      %1255 = vmatpush2.msra.mxu0 0.0
      %1256 = vmatprep.subr.mxu0 0.0
      %1257 = vmatpush2.msra.mxu0 0.0
      %1258 = vmatprep.subr.mxu0 0.0
      %1259 = vmatpush2.msra.mxu0 0.0
      %1260 = vmatprep.subr.mxu0 0.0
      %1261 = vmatpush2.msra.mxu0 0.0
      %1262 = vmatprep.subr.mxu0 0.0
      %1263 = vmatpush2.msra.mxu0 0.0
      %1264 = vmatprep.subr.mxu0 0.0
      %1265 = vmatpush2.msra.mxu0 0.0
      %1266 = vmatprep.subr.mxu0 0.0
      %1267 = vmatpush2.msra.mxu0 0.0
      %1268 = vmatprep.subr.mxu0 0.0
      %1269 = vmatpush2.msra.mxu0 0.0
      %1270 = vmatprep.subr.mxu0 0.0
      %1271 = vmatpush2.msra.mxu0 0.0
      %1272 = vmatprep.subr.mxu0 0.0
      %1273 = vmatpush2.msra.mxu0 0.0
      %1274 = vmatprep.subr.mxu0 0.0
      %1275 = vmatpush2.msra.mxu0 0.0
      %1276 = vmatprep.subr.mxu0 0.0
      %1277 = vmatpush2.msra.mxu0 0.0
      %1278 = vmatprep.subr.mxu0 0.0
      %1279 = vmatpush2.msra.mxu0 0.0
      %1280 = vmatprep.subr.mxu0 0.0
      %1281 = vmatpush2.msra.mxu0 0.0
      %1282 = vmatprep.subr.mxu0 0.0
      %1283 = vmatpush2.msra.mxu0 0.0
      %1284 = vmatprep.mubr.f32.mxu0 0.0
      %1285 = vmatmul.mubr.f32.gmra.mxu0 %v1218
      %v1286 = vpop.f32.mrf.mxu0
      %v1287 = vadd.f32 %v1215, %v1286
      %v1288 = vpop.f32.mrf.mxu0
      %1289 = vdwg.mxu0
      %v1290 = vadd.f32 %v436, %v1287
      %v1291 = vld [vmem:[%s9] sm:$0x1]
      %v1292 = vld [vmem:[%s10] sm:$0x1]
      %vm1293 = vcmask 258048
      %v1294 = vsel %vm1293, %v1290, 0.0
      %1295 = vadd.xlane.f32.xlu0 %v1294
      %v1296 = vpop.xlane.xlu0 %1295
      %v1297 = vrcp.pop 32.0
      %v1298 = vmul.f32 %v1296, %v1297
      %v1299 = vsub.f32 %v1290, %v1298
      %v1300 = vmul.f32 %v1299, %v1299
      %v1301 = vsel %vm1293, %v1300, 0.0
      %1302 = vadd.xlane.f32.xlu0 %v1301
      %v1303 = vpop.xlane.xlu0 %1302
      %v1304 = vmul.f32 %v1303, %v1297
      %v1305 = vadd.f32 %v1304, 1e-05
      %v1306 = vrsqrt.pop %v1305
      %v1307 = vmul.f32 %v1299, %v1306
      %v1309 = vlaneseq
      %v1310 = vshrl.u32 %v1309, 7
      %v1311 = vsub.s32 0, %v1310
      %v1312 = vrot.slane %v1291, %v1311
      %v1314 = vmul.f32 %v1307, %v1312
      %v1316 = vlaneseq
      %v1317 = vshrl.u32 %v1316, 7
      %v1318 = vsub.s32 0, %v1317
      %v1319 = vrot.slane %v1292, %v1318
      %v1321 = vadd.f32 %v1314, %v1319
      %v1322 = vld [vmem:[%s5] sm:$0xff]
      %v1323 = vld [vmem:[%s5 + $0x8] sm:$0xff]
      %v1324 = vld [vmem:[%s5 + $0x10] sm:$0xff]
      %v1325 = vld [vmem:[%s5 + $0x18] sm:$0xff]
      %v1326 = vld [vmem:[%s6] sm:$0x1]
      %v1327 = vld [vmem:[%s7] sm:$0xff]
      %v1328 = vld [vmem:[%s7 + $0x8] sm:$0xff]
      %v1329 = vld [vmem:[%s7 + $0x10] sm:$0xff]
      %v1330 = vld [vmem:[%s7 + $0x18] sm:$0xff]
      %v1331 = vld [vmem:[%s7 + $0x20] sm:$0xff]
      %v1332 = vld [vmem:[%s7 + $0x28] sm:$0xff]
      %v1333 = vld [vmem:[%s7 + $0x30] sm:$0xff]
      %v1334 = vld [vmem:[%s7 + $0x38] sm:$0xff]
      %v1335 = vld [vmem:[%s8] sm:$0x1]
      %v1337 = vlaneseq
      %v1338 = vshrl.u32 %v1337, 7
      %v1339 = vsub.s32 0, %v1338
      %v1340 = vrot.slane %v1326, %v1339
      %v1343 = vsel %vm453, %v1321, 0
      %1345 = vmatprep.subr.mxu0 0.0
      %1346 = vmatpush1.msra.mxu0 0.0
      %1347 = vmatprep.subr.mxu0 0.0
      %1348 = vmatpush1.msra.mxu0 0.0
      %1349 = vmatprep.subr.mxu0 0.0
      %1350 = vmatpush1.msra.mxu0 0.0
      %1351 = vmatprep.subr.mxu0 0.0
      %1352 = vmatpush1.msra.mxu0 0.0
      %1353 = vmatprep.subr.mxu0 0.0
      %1354 = vmatpush1.msra.mxu0 0.0
      %1355 = vmatprep.subr.mxu0 0.0
      %1356 = vmatpush1.msra.mxu0 0.0
      %1357 = vmatprep.subr.mxu0 0.0
      %1358 = vmatpush1.msra.mxu0 0.0
      %1359 = vmatprep.subr.mxu0 0.0
      %1360 = vmatpush1.msra.mxu0 0.0
      %1361 = vmatprep.subr.mxu0 0.0
      %1362 = vmatpush1.msra.mxu0 0.0
      %1363 = vmatprep.subr.mxu0 0.0
      %1364 = vmatpush1.msra.mxu0 0.0
      %1365 = vmatprep.subr.mxu0 0.0
      %1366 = vmatpush1.msra.mxu0 0.0
      %1367 = vmatprep.subr.mxu0 0.0
      %1368 = vmatpush1.msra.mxu0 0.0
      %1369 = vmatprep.subr.mxu0 0.0
      %1370 = vmatpush1.msra.mxu0 %v1325
      %1371 = vmatprep.subr.mxu0 0.0
      %1372 = vmatpush1.msra.mxu0 %v1324
      %1373 = vmatprep.subr.mxu0 0.0
      %1374 = vmatpush1.msra.mxu0 %v1323
      %1375 = vmatprep.subr.mxu0 0.0
      %1376 = vmatpush1.msra.mxu0 %v1322
      %1377 = vmatprep.subr.mxu0 0.0
      %1378 = vmatpush2.msra.mxu0 0.0
      %1379 = vmatprep.subr.mxu0 0.0
      %1380 = vmatpush2.msra.mxu0 0.0
      %1381 = vmatprep.subr.mxu0 0.0
      %1382 = vmatpush2.msra.mxu0 0.0
      %1383 = vmatprep.subr.mxu0 0.0
      %1384 = vmatpush2.msra.mxu0 0.0
      %1385 = vmatprep.subr.mxu0 0.0
      %1386 = vmatpush2.msra.mxu0 0.0
      %1387 = vmatprep.subr.mxu0 0.0
      %1388 = vmatpush2.msra.mxu0 0.0
      %1389 = vmatprep.subr.mxu0 0.0
      %1390 = vmatpush2.msra.mxu0 0.0
      %1391 = vmatprep.subr.mxu0 0.0
      %1392 = vmatpush2.msra.mxu0 0.0
      %1393 = vmatprep.subr.mxu0 0.0
      %1394 = vmatpush2.msra.mxu0 0.0
      %1395 = vmatprep.subr.mxu0 0.0
      %1396 = vmatpush2.msra.mxu0 0.0
      %1397 = vmatprep.subr.mxu0 0.0
      %1398 = vmatpush2.msra.mxu0 0.0
      %1399 = vmatprep.subr.mxu0 0.0
      %1400 = vmatpush2.msra.mxu0 0.0
      %1401 = vmatprep.subr.mxu0 0.0
      %1402 = vmatpush2.msra.mxu0 0.0
      %1403 = vmatprep.subr.mxu0 0.0
      %1404 = vmatpush2.msra.mxu0 0.0
      %1405 = vmatprep.subr.mxu0 0.0
      %1406 = vmatpush2.msra.mxu0 0.0
      %1407 = vmatprep.subr.mxu0 0.0
      %1408 = vmatpush2.msra.mxu0 0.0
      %1409 = vmatprep.mubr.f32.mxu0 0.0
      %1410 = vmatmul.mubr.f32.gmra.mxu0 %v1343
      %v1411 = vpop.f32.mrf.mxu0
      %v1412 = vadd.f32 %v1340, %v1411
      %v1413 = vpop.f32.mrf.mxu0
      %1414 = vdwg.mxu0
      %v1415 = vmax.f32 %v1412, 0.0
      %v1417 = vlaneseq
      %v1418 = vshrl.u32 %v1417, 7
      %v1419 = vsub.s32 0, %v1418
      %v1420 = vrot.slane %v1335, %v1419
      %vm1422 = vcmask 523264
      %v1424 = vsel %vm1422, %v1415, 0
      %1426 = vmatprep.subr.mxu0 0.0
      %1427 = vmatpush1.msra.mxu0 0.0
      %1428 = vmatprep.subr.mxu0 0.0
      %1429 = vmatpush1.msra.mxu0 0.0
      %1430 = vmatprep.subr.mxu0 0.0
      %1431 = vmatpush1.msra.mxu0 0.0
      %1432 = vmatprep.subr.mxu0 0.0
      %1433 = vmatpush1.msra.mxu0 0.0
      %1434 = vmatprep.subr.mxu0 0.0
      %1435 = vmatpush1.msra.mxu0 0.0
      %1436 = vmatprep.subr.mxu0 0.0
      %1437 = vmatpush1.msra.mxu0 0.0
      %1438 = vmatprep.subr.mxu0 0.0
      %1439 = vmatpush1.msra.mxu0 0.0
      %1440 = vmatprep.subr.mxu0 0.0
      %1441 = vmatpush1.msra.mxu0 0.0
      %1442 = vmatprep.subr.mxu0 0.0
      %1443 = vmatpush1.msra.mxu0 %v1334
      %1444 = vmatprep.subr.mxu0 0.0
      %1445 = vmatpush1.msra.mxu0 %v1333
      %1446 = vmatprep.subr.mxu0 0.0
      %1447 = vmatpush1.msra.mxu0 %v1332
      %1448 = vmatprep.subr.mxu0 0.0
      %1449 = vmatpush1.msra.mxu0 %v1331
      %1450 = vmatprep.subr.mxu0 0.0
      %1451 = vmatpush1.msra.mxu0 %v1330
      %1452 = vmatprep.subr.mxu0 0.0
      %1453 = vmatpush1.msra.mxu0 %v1329
      %1454 = vmatprep.subr.mxu0 0.0
      %1455 = vmatpush1.msra.mxu0 %v1328
      %1456 = vmatprep.subr.mxu0 0.0
      %1457 = vmatpush1.msra.mxu0 %v1327
      %1458 = vmatprep.subr.mxu0 0.0
      %1459 = vmatpush2.msra.mxu0 0.0
      %1460 = vmatprep.subr.mxu0 0.0
      %1461 = vmatpush2.msra.mxu0 0.0
      %1462 = vmatprep.subr.mxu0 0.0
      %1463 = vmatpush2.msra.mxu0 0.0
      %1464 = vmatprep.subr.mxu0 0.0
      %1465 = vmatpush2.msra.mxu0 0.0
      %1466 = vmatprep.subr.mxu0 0.0
      %1467 = vmatpush2.msra.mxu0 0.0
      %1468 = vmatprep.subr.mxu0 0.0
      %1469 = vmatpush2.msra.mxu0 0.0
      %1470 = vmatprep.subr.mxu0 0.0
      %1471 = vmatpush2.msra.mxu0 0.0
      %1472 = vmatprep.subr.mxu0 0.0
      %1473 = vmatpush2.msra.mxu0 0.0
      %1474 = vmatprep.subr.mxu0 0.0
      %1475 = vmatpush2.msra.mxu0 0.0
      %1476 = vmatprep.subr.mxu0 0.0
      %1477 = vmatpush2.msra.mxu0 0.0
      %1478 = vmatprep.subr.mxu0 0.0
      %1479 = vmatpush2.msra.mxu0 0.0
      %1480 = vmatprep.subr.mxu0 0.0
      %1481 = vmatpush2.msra.mxu0 0.0
      %1482 = vmatprep.subr.mxu0 0.0
      %1483 = vmatpush2.msra.mxu0 0.0
      %1484 = vmatprep.subr.mxu0 0.0
      %1485 = vmatpush2.msra.mxu0 0.0
      %1486 = vmatprep.subr.mxu0 0.0
      %1487 = vmatpush2.msra.mxu0 0.0
      %1488 = vmatprep.subr.mxu0 0.0
      %1489 = vmatpush2.msra.mxu0 0.0
      %1490 = vmatprep.mubr.f32.mxu0 0.0
      %1491 = vmatmul.mubr.f32.gmra.mxu0 %v1424
      %v1492 = vpop.f32.mrf.mxu0
      %v1493 = vadd.f32 %v1420, %v1492
      %v1494 = vpop.f32.mrf.mxu0
      %1495 = vdwg.mxu0
      %v1496 = vadd.f32 %v1321, %v1493
      %v1497 = vld [vmem:[%s11] sm:$0x1]
      %v1498 = vld [vmem:[%s12] sm:$0x1]
      %v1499 = vsel %vm1293, %v1496, 0.0
      %1500 = vadd.xlane.f32.xlu0 %v1499
      %v1501 = vpop.xlane.xlu0 %1500
      %v1502 = vmul.f32 %v1501, %v1297
      %v1503 = vsub.f32 %v1496, %v1502
      %v1504 = vmul.f32 %v1503, %v1503
      %v1505 = vsel %vm1293, %v1504, 0.0
      %1506 = vadd.xlane.f32.xlu0 %v1505
      %v1507 = vpop.xlane.xlu0 %1506
      %v1508 = vmul.f32 %v1507, %v1297
      %v1509 = vadd.f32 %v1508, 1e-05
      %v1510 = vrsqrt.pop %v1509
      %v1511 = vmul.f32 %v1503, %v1510
      %v1513 = vlaneseq
      %v1514 = vshrl.u32 %v1513, 7
      %v1515 = vsub.s32 0, %v1514
      %v1516 = vrot.slane %v1497, %v1515
      %v1518 = vmul.f32 %v1511, %v1516
      %v1520 = vlaneseq
      %v1521 = vshrl.u32 %v1520, 7
      %v1522 = vsub.s32 0, %v1521
      %v1523 = vrot.slane %v1498, %v1522
      %v1525 = vadd.f32 %v1518, %v1523
      %1526 = vst.msk [vmem:[%s435] sm:$0x1f] %vm1293, %v1525
      %p1527 = scmp.lt.s32.totalorder %s24, 1
      %s1528 = scalar_select %p1527, %s24, 1
      %s1529 = smul.addr %s1528, 8
      %s1530 = scalar_lea.vmem %s13, %s1529
      // Predicated region
      $region73: #{autoencoder_forward.7} parent=71 // pred_check
        %p1531 = pneg %p320
      $region74: #{autoencoder_forward.7} parent=71 // pred_check_branch
        %1533 = sbr.rel (%p1531) target = $region76
      $region75: #{autoencoder_forward.7} parent=71 // pred_region
        _
      $region76: #{autoencoder_forward.7} parent=71 // pred_fallthru
        _
    $region72: #{autoencoder_forward.7} parent=5 // pred_fallthru
      _
    %p1534 = scmp.le.s32.totalorder 2, %s19
    // Predicated region
    $region77: #{autoencoder_forward.7} parent=5 // pred_check
      %p1535 = pneg %p1534
    $region78: #{autoencoder_forward.7} parent=5 // pred_check_branch
      %1537 = sbr.rel (%p1535) target = $region80
    $region79: #{autoencoder_forward.7} parent=5 // pred_region
      %s1538 = ssub.s32 %s19, 2
      // Predicated region
      $region81: #{autoencoder_forward.7} parent=79 // pred_check
        %p1539 = pneg %p326
      $region82: #{autoencoder_forward.7} parent=79 // pred_check_branch
        %1541 = sbr.rel (%p1539) target = $region84
      $region83: #{autoencoder_forward.7} parent=79 // pred_region
        %p1542 = scmp.lt.s32.totalorder %s25, 1
        %s1543 = scalar_select %p1542, %s25, 1
        %s1544 = smul.addr %s1543, 8
        %s1545 = scalar_lea.vmem %s13, %s1544
      $region84: #{autoencoder_forward.7} parent=79 // pred_fallthru
        _
    $region80: #{autoencoder_forward.7} parent=5 // pred_fallthru
      _
  $region6: #{autoencoder_forward.7} parent=0 // loop_footer
    %s23 = sadd.s32 1, %s19
  $region7: #{autoencoder_forward.7} parent=0 // loop_footer_branch
    %18 = sbr.rel target = $region3
  $region8: #{autoencoder_forward.7} parent=0 // loop_exit
    _

// kernel: autoencoder_forward.9
$region0: #{autoencoder_forward.9}
  #allocation0 [shape = 'u32[]', space=smem, size = 0x4, offset = 0x4, fixed_abs, tag = 'smem constant byte address 0x4 - core index']
  #allocation1 [shape = 'u32[144,128]{1,0:T(1,128)}', space=vmem, size = 0x12000, scoped, tag = 'internal scratch']
  %s0 = inlined_call_operand.vmem [shape: f32[2,4,32], index: 0, kind: input, shape index: {}]
  %s1 = inlined_call_operand.vmem [shape: f32[2,1,32], index: 1, kind: input, shape index: {}]
  %s2 = inlined_call_operand.vmem [shape: f32[32,96], index: 2, kind: input, shape index: {}]
  %s3 = inlined_call_operand.vmem [shape: f32[1,96], index: 3, kind: input, shape index: {}]
  %s4 = inlined_call_operand.vmem [shape: f32[32,32], index: 4, kind: input, shape index: {}]
  %s5 = inlined_call_operand.vmem [shape: f32[1,32], index: 5, kind: input, shape index: {}]
  %s6 = inlined_call_operand.vmem [shape: f32[32,32], index: 6, kind: input, shape index: {}]
  %s7 = inlined_call_operand.vmem [shape: f32[1,32], index: 7, kind: input, shape index: {}]
  %s8 = inlined_call_operand.vmem [shape: f32[32,32], index: 8, kind: input, shape index: {}]
  %s9 = inlined_call_operand.vmem [shape: f32[1,32], index: 9, kind: input, shape index: {}]
  %s10 = inlined_call_operand.vmem [shape: f32[32,64], index: 10, kind: input, shape index: {}]
  %s11 = inlined_call_operand.vmem [shape: f32[1,64], index: 11, kind: input, shape index: {}]
  %s12 = inlined_call_operand.vmem [shape: f32[64,32], index: 12, kind: input, shape index: {}]
  %s13 = inlined_call_operand.vmem [shape: f32[1,32], index: 13, kind: input, shape index: {}]
  %s14 = inlined_call_operand.vmem [shape: f32[1,32], index: 14, kind: input, shape index: {}]
  %s15 = inlined_call_operand.vmem [shape: f32[1,32], index: 15, kind: input, shape index: {}]
  %s16 = inlined_call_operand.vmem [shape: f32[1,32], index: 16, kind: input, shape index: {}]
  %s17 = inlined_call_operand.vmem [shape: f32[1,32], index: 17, kind: input, shape index: {}]
  %s18 = inlined_call_operand.vmem [shape: f32[1,32], index: 18, kind: input, shape index: {}]
  %s19 = inlined_call_operand.vmem [shape: f32[1,32], index: 19, kind: input, shape index: {}]
  %s20 = inlined_call_operand.vmem [shape: f32[2,4,32], index: 20, kind: output, shape index: {}]
  %s21 = sld [smem:[#allocation0]]
  $region113: #{autoencoder_forward.9} parent=0
    _
  %s23 = ssub.s32 1, %s21
  %s24 = scalar_select 0, %s23, %s21
  loop: start=0, step=1, limit=4
  $region2: #{autoencoder_forward.9} parent=0 // loop_pre_header
    _
  $region3: #{autoencoder_forward.9} parent=0 // loop_header
    %s26 = sphi 0, %s30
    %p27 = scmp.ge.s32.totalorder %s26, 4
    %s36 = sphi 0, %s38
    %s39 = sphi 0, %s36
    %s40 = sphi 0, %s39
    %s56 = sphi 0, %s40
    %s62 = sphi 0, %s64
    %s65 = sphi 0, %s62
    %s66 = sphi 0, %s65
    %s82 = sphi 0, %s66
    %s86 = sphi 0, %s86
    %s88 = sphi 0, %s86
    %s89 = sphi 0, %s88
    %s103 = sphi 0, %s89
    %s107 = sphi 0, %s107
    %s109 = sphi 0, %s107
    %s110 = sphi 0, %s109
    %s124 = sphi 0, %s110
    %s128 = sphi 0, %s128
    %s130 = sphi 0, %s128
    %s131 = sphi 0, %s130
    %s145 = sphi 0, %s131
    %s149 = sphi 0, %s149
    %s151 = sphi 0, %s149
    %s152 = sphi 0, %s151
    %s166 = sphi 0, %s152
    %s170 = sphi 0, %s170
    %s172 = sphi 0, %s170
    %s173 = sphi 0, %s172
    %s187 = sphi 0, %s173
    %s191 = sphi 0, %s191
    %s193 = sphi 0, %s191
    %s194 = sphi 0, %s193
    %s208 = sphi 0, %s194
    %s212 = sphi 0, %s212
    %s214 = sphi 0, %s212
    %s215 = sphi 0, %s214
    %s229 = sphi 0, %s215
    %s233 = sphi 0, %s233
    %s235 = sphi 0, %s233
    %s236 = sphi 0, %s235
    %s250 = sphi 0, %s236
    %s254 = sphi 0, %s254
    %s256 = sphi 0, %s254
    %s257 = sphi 0, %s256
    %s271 = sphi 0, %s257
    %s275 = sphi 0, %s275
    %s277 = sphi 0, %s275
    %s278 = sphi 0, %s277
    %s292 = sphi 0, %s278
    %s296 = sphi 0, %s296
    %s298 = sphi 0, %s296
    %s299 = sphi 0, %s298
    %s313 = sphi 0, %s299
    %s317 = sphi 0, %s317
    %s319 = sphi 0, %s317
    %s320 = sphi 0, %s319
    %s334 = sphi 0, %s320
    %s338 = sphi 0, %s338
    %s340 = sphi 0, %s338
    %s341 = sphi 0, %s340
    %s355 = sphi 0, %s341
    %s359 = sphi 0, %s359
    %s361 = sphi 0, %s359
    %s362 = sphi 0, %s361
    %s376 = sphi 0, %s362
    %s380 = sphi 0, %s380
    %s382 = sphi 0, %s380
    %s383 = sphi 0, %s382
    %s397 = sphi 0, %s383
    %s401 = sphi 0, %s401
    %s403 = sphi 0, %s401
    %s404 = sphi 0, %s403
    %s418 = sphi 0, %s404
    %s422 = sphi 0, %s422
    %s424 = sphi 0, %s422
    %s425 = sphi 0, %s424
    %s439 = sphi 0, %s425
    %s443 = sphi 0, %s443
    %s445 = sphi 0, %s443
    %s446 = sphi 0, %s445
    %s460 = sphi 0, %s446
    %s466 = sphi 0, %s468
    %s469 = sphi 0, %s466
    %s470 = sphi 0, %s469
    %s486 = sphi 0, %s470
  $region4: #{autoencoder_forward.9} parent=0 // loop_header_branch
    %29 = sbr.rel (%p27) target = $region8
  $region5: #{autoencoder_forward.9} parent=0 // loop_body
    %s31 = ssub.s32 %s26, 1
    %s32 = ssub.s32 %s26, 2
    %s33 = sadd.s32 %s26, 1
    %s34 = ssub.s32 %s26, %s33
    %p35 = scmp.eq.s32.totalorder %s34, 0
    %s37 = sadd.s32 %s36, 1
    %s38 = scalar_select %p35, %s36, %s37
    %p41 = pneg %p35
    %p42 = scmp.eq.s32.totalorder %s26, 1
    %p43 = por %p41, %p42
    %p44 = scmp.ne.s32.totalorder %s36, %s39
    %p45 = scmp.eq.s32.totalorder %s26, 0
    %p46 = por %p44, %p45
    %p47 = scmp.ne.s32.totalorder %s36, %s39
    %p48 = scmp.eq.s32.totalorder %s31, 1
    %p49 = por %p47, %p48
    %p50 = scmp.ne.s32.totalorder %s39, %s40
    %p51 = scmp.eq.s32.totalorder %s31, 0
    %p52 = por %p50, %p51
    %p53 = scmp.ne.s32.totalorder %s39, %s40
    %p54 = scmp.eq.s32.totalorder %s32, 1
    %p55 = por %p53, %p54
    %p57 = scmp.ne.s32.totalorder %s40, %s56
    %p58 = scmp.eq.s32.totalorder %s32, 0
    %p59 = por %p57, %p58
    %s60 = ssub.s32 %s26, %s33
    %p61 = scmp.eq.s32.totalorder %s60, 0
    %s63 = sadd.s32 %s62, 1
    %s64 = scalar_select %p61, %s62, %s63
    %p67 = pneg %p61
    %p68 = scmp.eq.s32.totalorder %s26, 1
    %p69 = por %p67, %p68
    %p70 = scmp.ne.s32.totalorder %s62, %s65
    %p71 = scmp.eq.s32.totalorder %s26, 0
    %p72 = por %p70, %p71
    %p73 = scmp.ne.s32.totalorder %s62, %s65
    %p74 = scmp.eq.s32.totalorder %s31, 1
    %p75 = por %p73, %p74
    %p76 = scmp.ne.s32.totalorder %s65, %s66
    %p77 = scmp.eq.s32.totalorder %s31, 0
    %p78 = por %p76, %p77
    %p79 = scmp.ne.s32.totalorder %s65, %s66
    %p80 = scmp.eq.s32.totalorder %s32, 1
    %p81 = por %p79, %p80
    %p83 = scmp.ne.s32.totalorder %s66, %s82
    %p84 = scmp.eq.s32.totalorder %s32, 0
    %p85 = por %p83, %p84
    %s87 = sadd.s32 %s86, 1
    %p90 = scmp.eq.s32.totalorder %s26, 1
    %p91 = scmp.ne.s32.totalorder %s86, %s88
    %p92 = scmp.eq.s32.totalorder %s26, 0
    %p93 = por %p91, %p92
    %p94 = scmp.ne.s32.totalorder %s86, %s88
    %p95 = scmp.eq.s32.totalorder %s31, 1
    %p96 = por %p94, %p95
    %p97 = scmp.ne.s32.totalorder %s88, %s89
    %p98 = scmp.eq.s32.totalorder %s31, 0
    %p99 = por %p97, %p98
    %p100 = scmp.ne.s32.totalorder %s88, %s89
    %p101 = scmp.eq.s32.totalorder %s32, 1
    %p102 = por %p100, %p101
    %p104 = scmp.ne.s32.totalorder %s89, %s103
    %p105 = scmp.eq.s32.totalorder %s32, 0
    %p106 = por %p104, %p105
    %s108 = sadd.s32 %s107, 1
    %p111 = scmp.eq.s32.totalorder %s26, 1
    %p112 = scmp.ne.s32.totalorder %s107, %s109
    %p113 = scmp.eq.s32.totalorder %s26, 0
    %p114 = por %p112, %p113
    %p115 = scmp.ne.s32.totalorder %s107, %s109
    %p116 = scmp.eq.s32.totalorder %s31, 1
    %p117 = por %p115, %p116
    %p118 = scmp.ne.s32.totalorder %s109, %s110
    %p119 = scmp.eq.s32.totalorder %s31, 0
    %p120 = por %p118, %p119
    %p121 = scmp.ne.s32.totalorder %s109, %s110
    %p122 = scmp.eq.s32.totalorder %s32, 1
    %p123 = por %p121, %p122
    %p125 = scmp.ne.s32.totalorder %s110, %s124
    %p126 = scmp.eq.s32.totalorder %s32, 0
    %p127 = por %p125, %p126
    %s129 = sadd.s32 %s128, 1
    %p132 = scmp.eq.s32.totalorder %s26, 1
    %p133 = scmp.ne.s32.totalorder %s128, %s130
    %p134 = scmp.eq.s32.totalorder %s26, 0
    %p135 = por %p133, %p134
    %p136 = scmp.ne.s32.totalorder %s128, %s130
    %p137 = scmp.eq.s32.totalorder %s31, 1
    %p138 = por %p136, %p137
    %p139 = scmp.ne.s32.totalorder %s130, %s131
    %p140 = scmp.eq.s32.totalorder %s31, 0
    %p141 = por %p139, %p140
    %p142 = scmp.ne.s32.totalorder %s130, %s131
    %p143 = scmp.eq.s32.totalorder %s32, 1
    %p144 = por %p142, %p143
    %p146 = scmp.ne.s32.totalorder %s131, %s145
    %p147 = scmp.eq.s32.totalorder %s32, 0
    %p148 = por %p146, %p147
    %s150 = sadd.s32 %s149, 1
    %p153 = scmp.eq.s32.totalorder %s26, 1
    %p154 = scmp.ne.s32.totalorder %s149, %s151
    %p155 = scmp.eq.s32.totalorder %s26, 0
    %p156 = por %p154, %p155
    %p157 = scmp.ne.s32.totalorder %s149, %s151
    %p158 = scmp.eq.s32.totalorder %s31, 1
    %p159 = por %p157, %p158
    %p160 = scmp.ne.s32.totalorder %s151, %s152
    %p161 = scmp.eq.s32.totalorder %s31, 0
    %p162 = por %p160, %p161
    %p163 = scmp.ne.s32.totalorder %s151, %s152
    %p164 = scmp.eq.s32.totalorder %s32, 1
    %p165 = por %p163, %p164
    %p167 = scmp.ne.s32.totalorder %s152, %s166
    %p168 = scmp.eq.s32.totalorder %s32, 0
    %p169 = por %p167, %p168
    %s171 = sadd.s32 %s170, 1
    %p174 = scmp.eq.s32.totalorder %s26, 1
    %p175 = scmp.ne.s32.totalorder %s170, %s172
    %p176 = scmp.eq.s32.totalorder %s26, 0
    %p177 = por %p175, %p176
    %p178 = scmp.ne.s32.totalorder %s170, %s172
    %p179 = scmp.eq.s32.totalorder %s31, 1
    %p180 = por %p178, %p179
    %p181 = scmp.ne.s32.totalorder %s172, %s173
    %p182 = scmp.eq.s32.totalorder %s31, 0
    %p183 = por %p181, %p182
    %p184 = scmp.ne.s32.totalorder %s172, %s173
    %p185 = scmp.eq.s32.totalorder %s32, 1
    %p186 = por %p184, %p185
    %p188 = scmp.ne.s32.totalorder %s173, %s187
    %p189 = scmp.eq.s32.totalorder %s32, 0
    %p190 = por %p188, %p189
    %s192 = sadd.s32 %s191, 1
    %p195 = scmp.eq.s32.totalorder %s26, 1
    %p196 = scmp.ne.s32.totalorder %s191, %s193
    %p197 = scmp.eq.s32.totalorder %s26, 0
    %p198 = por %p196, %p197
    %p199 = scmp.ne.s32.totalorder %s191, %s193
    %p200 = scmp.eq.s32.totalorder %s31, 1
    %p201 = por %p199, %p200
    %p202 = scmp.ne.s32.totalorder %s193, %s194
    %p203 = scmp.eq.s32.totalorder %s31, 0
    %p204 = por %p202, %p203
    %p205 = scmp.ne.s32.totalorder %s193, %s194
    %p206 = scmp.eq.s32.totalorder %s32, 1
    %p207 = por %p205, %p206
    %p209 = scmp.ne.s32.totalorder %s194, %s208
    %p210 = scmp.eq.s32.totalorder %s32, 0
    %p211 = por %p209, %p210
    %s213 = sadd.s32 %s212, 1
    %p216 = scmp.eq.s32.totalorder %s26, 1
    %p217 = scmp.ne.s32.totalorder %s212, %s214
    %p218 = scmp.eq.s32.totalorder %s26, 0
    %p219 = por %p217, %p218
    %p220 = scmp.ne.s32.totalorder %s212, %s214
    %p221 = scmp.eq.s32.totalorder %s31, 1
    %p222 = por %p220, %p221
    %p223 = scmp.ne.s32.totalorder %s214, %s215
    %p224 = scmp.eq.s32.totalorder %s31, 0
    %p225 = por %p223, %p224
    %p226 = scmp.ne.s32.totalorder %s214, %s215
    %p227 = scmp.eq.s32.totalorder %s32, 1
    %p228 = por %p226, %p227
    %p230 = scmp.ne.s32.totalorder %s215, %s229
    %p231 = scmp.eq.s32.totalorder %s32, 0
    %p232 = por %p230, %p231
    %s234 = sadd.s32 %s233, 1
    %p237 = scmp.eq.s32.totalorder %s26, 1
    %p238 = scmp.ne.s32.totalorder %s233, %s235
    %p239 = scmp.eq.s32.totalorder %s26, 0
    %p240 = por %p238, %p239
    %p241 = scmp.ne.s32.totalorder %s233, %s235
    %p242 = scmp.eq.s32.totalorder %s31, 1
    %p243 = por %p241, %p242
    %p244 = scmp.ne.s32.totalorder %s235, %s236
    %p245 = scmp.eq.s32.totalorder %s31, 0
    %p246 = por %p244, %p245
    %p247 = scmp.ne.s32.totalorder %s235, %s236
    %p248 = scmp.eq.s32.totalorder %s32, 1
    %p249 = por %p247, %p248
    %p251 = scmp.ne.s32.totalorder %s236, %s250
    %p252 = scmp.eq.s32.totalorder %s32, 0
    %p253 = por %p251, %p252
    %s255 = sadd.s32 %s254, 1
    %p258 = scmp.eq.s32.totalorder %s26, 1
    %p259 = scmp.ne.s32.totalorder %s254, %s256
    %p260 = scmp.eq.s32.totalorder %s26, 0
    %p261 = por %p259, %p260
    %p262 = scmp.ne.s32.totalorder %s254, %s256
    %p263 = scmp.eq.s32.totalorder %s31, 1
    %p264 = por %p262, %p263
    %p265 = scmp.ne.s32.totalorder %s256, %s257
    %p266 = scmp.eq.s32.totalorder %s31, 0
    %p267 = por %p265, %p266
    %p268 = scmp.ne.s32.totalorder %s256, %s257
    %p269 = scmp.eq.s32.totalorder %s32, 1
    %p270 = por %p268, %p269
    %p272 = scmp.ne.s32.totalorder %s257, %s271
    %p273 = scmp.eq.s32.totalorder %s32, 0
    %p274 = por %p272, %p273
    %s276 = sadd.s32 %s275, 1
    %p279 = scmp.eq.s32.totalorder %s26, 1
    %p280 = scmp.ne.s32.totalorder %s275, %s277
    %p281 = scmp.eq.s32.totalorder %s26, 0
    %p282 = por %p280, %p281
    %p283 = scmp.ne.s32.totalorder %s275, %s277
    %p284 = scmp.eq.s32.totalorder %s31, 1
    %p285 = por %p283, %p284
    %p286 = scmp.ne.s32.totalorder %s277, %s278
    %p287 = scmp.eq.s32.totalorder %s31, 0
    %p288 = por %p286, %p287
    %p289 = scmp.ne.s32.totalorder %s277, %s278
    %p290 = scmp.eq.s32.totalorder %s32, 1
    %p291 = por %p289, %p290
    %p293 = scmp.ne.s32.totalorder %s278, %s292
    %p294 = scmp.eq.s32.totalorder %s32, 0
    %p295 = por %p293, %p294
    %s297 = sadd.s32 %s296, 1
    %p300 = scmp.eq.s32.totalorder %s26, 1
    %p301 = scmp.ne.s32.totalorder %s296, %s298
    %p302 = scmp.eq.s32.totalorder %s26, 0
    %p303 = por %p301, %p302
    %p304 = scmp.ne.s32.totalorder %s296, %s298
    %p305 = scmp.eq.s32.totalorder %s31, 1
    %p306 = por %p304, %p305
    %p307 = scmp.ne.s32.totalorder %s298, %s299
    %p308 = scmp.eq.s32.totalorder %s31, 0
    %p309 = por %p307, %p308
    %p310 = scmp.ne.s32.totalorder %s298, %s299
    %p311 = scmp.eq.s32.totalorder %s32, 1
    %p312 = por %p310, %p311
    %p314 = scmp.ne.s32.totalorder %s299, %s313
    %p315 = scmp.eq.s32.totalorder %s32, 0
    %p316 = por %p314, %p315
    %s318 = sadd.s32 %s317, 1
    %p321 = scmp.eq.s32.totalorder %s26, 1
    %p322 = scmp.ne.s32.totalorder %s317, %s319
    %p323 = scmp.eq.s32.totalorder %s26, 0
    %p324 = por %p322, %p323
    %p325 = scmp.ne.s32.totalorder %s317, %s319
    %p326 = scmp.eq.s32.totalorder %s31, 1
    %p327 = por %p325, %p326
    %p328 = scmp.ne.s32.totalorder %s319, %s320
    %p329 = scmp.eq.s32.totalorder %s31, 0
    %p330 = por %p328, %p329
    %p331 = scmp.ne.s32.totalorder %s319, %s320
    %p332 = scmp.eq.s32.totalorder %s32, 1
    %p333 = por %p331, %p332
    %p335 = scmp.ne.s32.totalorder %s320, %s334
    %p336 = scmp.eq.s32.totalorder %s32, 0
    %p337 = por %p335, %p336
    %s339 = sadd.s32 %s338, 1
    %p342 = scmp.eq.s32.totalorder %s26, 1
    %p343 = scmp.ne.s32.totalorder %s338, %s340
    %p344 = scmp.eq.s32.totalorder %s26, 0
    %p345 = por %p343, %p344
    %p346 = scmp.ne.s32.totalorder %s338, %s340
    %p347 = scmp.eq.s32.totalorder %s31, 1
    %p348 = por %p346, %p347
    %p349 = scmp.ne.s32.totalorder %s340, %s341
    %p350 = scmp.eq.s32.totalorder %s31, 0
    %p351 = por %p349, %p350
    %p352 = scmp.ne.s32.totalorder %s340, %s341
    %p353 = scmp.eq.s32.totalorder %s32, 1
    %p354 = por %p352, %p353
    %p356 = scmp.ne.s32.totalorder %s341, %s355
    %p357 = scmp.eq.s32.totalorder %s32, 0
    %p358 = por %p356, %p357
    %s360 = sadd.s32 %s359, 1
    %p363 = scmp.eq.s32.totalorder %s26, 1
    %p364 = scmp.ne.s32.totalorder %s359, %s361
    %p365 = scmp.eq.s32.totalorder %s26, 0
    %p366 = por %p364, %p365
    %p367 = scmp.ne.s32.totalorder %s359, %s361
    %p368 = scmp.eq.s32.totalorder %s31, 1
    %p369 = por %p367, %p368
    %p370 = scmp.ne.s32.totalorder %s361, %s362
    %p371 = scmp.eq.s32.totalorder %s31, 0
    %p372 = por %p370, %p371
    %p373 = scmp.ne.s32.totalorder %s361, %s362
    %p374 = scmp.eq.s32.totalorder %s32, 1
    %p375 = por %p373, %p374
    %p377 = scmp.ne.s32.totalorder %s362, %s376
    %p378 = scmp.eq.s32.totalorder %s32, 0
    %p379 = por %p377, %p378
    %s381 = sadd.s32 %s380, 1
    %p384 = scmp.eq.s32.totalorder %s26, 1
    %p385 = scmp.ne.s32.totalorder %s380, %s382
    %p386 = scmp.eq.s32.totalorder %s26, 0
    %p387 = por %p385, %p386
    %p388 = scmp.ne.s32.totalorder %s380, %s382
    %p389 = scmp.eq.s32.totalorder %s31, 1
    %p390 = por %p388, %p389
    %p391 = scmp.ne.s32.totalorder %s382, %s383
    %p392 = scmp.eq.s32.totalorder %s31, 0
    %p393 = por %p391, %p392
    %p394 = scmp.ne.s32.totalorder %s382, %s383
    %p395 = scmp.eq.s32.totalorder %s32, 1
    %p396 = por %p394, %p395
    %p398 = scmp.ne.s32.totalorder %s383, %s397
    %p399 = scmp.eq.s32.totalorder %s32, 0
    %p400 = por %p398, %p399
    %s402 = sadd.s32 %s401, 1
    %p405 = scmp.eq.s32.totalorder %s26, 1
    %p406 = scmp.ne.s32.totalorder %s401, %s403
    %p407 = scmp.eq.s32.totalorder %s26, 0
    %p408 = por %p406, %p407
    %p409 = scmp.ne.s32.totalorder %s401, %s403
    %p410 = scmp.eq.s32.totalorder %s31, 1
    %p411 = por %p409, %p410
    %p412 = scmp.ne.s32.totalorder %s403, %s404
    %p413 = scmp.eq.s32.totalorder %s31, 0
    %p414 = por %p412, %p413
    %p415 = scmp.ne.s32.totalorder %s403, %s404
    %p416 = scmp.eq.s32.totalorder %s32, 1
    %p417 = por %p415, %p416
    %p419 = scmp.ne.s32.totalorder %s404, %s418
    %p420 = scmp.eq.s32.totalorder %s32, 0
    %p421 = por %p419, %p420
    %s423 = sadd.s32 %s422, 1
    %p426 = scmp.eq.s32.totalorder %s26, 1
    %p427 = scmp.ne.s32.totalorder %s422, %s424
    %p428 = scmp.eq.s32.totalorder %s26, 0
    %p429 = por %p427, %p428
    %p430 = scmp.ne.s32.totalorder %s422, %s424
    %p431 = scmp.eq.s32.totalorder %s31, 1
    %p432 = por %p430, %p431
    %p433 = scmp.ne.s32.totalorder %s424, %s425
    %p434 = scmp.eq.s32.totalorder %s31, 0
    %p435 = por %p433, %p434
    %p436 = scmp.ne.s32.totalorder %s424, %s425
    %p437 = scmp.eq.s32.totalorder %s32, 1
    %p438 = por %p436, %p437
    %p440 = scmp.ne.s32.totalorder %s425, %s439
    %p441 = scmp.eq.s32.totalorder %s32, 0
    %p442 = por %p440, %p441
    %s444 = sadd.s32 %s443, 1
    %p447 = scmp.eq.s32.totalorder %s26, 1
    %p448 = scmp.ne.s32.totalorder %s443, %s445
    %p449 = scmp.eq.s32.totalorder %s26, 0
    %p450 = por %p448, %p449
    %p451 = scmp.ne.s32.totalorder %s443, %s445
    %p452 = scmp.eq.s32.totalorder %s31, 1
    %p453 = por %p451, %p452
    %p454 = scmp.ne.s32.totalorder %s445, %s446
    %p455 = scmp.eq.s32.totalorder %s31, 0
    %p456 = por %p454, %p455
    %p457 = scmp.ne.s32.totalorder %s445, %s446
    %p458 = scmp.eq.s32.totalorder %s32, 1
    %p459 = por %p457, %p458
    %p461 = scmp.ne.s32.totalorder %s446, %s460
    %p462 = scmp.eq.s32.totalorder %s32, 0
    %p463 = por %p461, %p462
    %s464 = ssub.s32 %s26, %s33
    %p465 = scmp.eq.s32.totalorder %s464, 0
    %s467 = sadd.s32 %s466, 1
    %s468 = scalar_select %p465, %s466, %s467
    %p471 = pneg %p465
    %p472 = scmp.eq.s32.totalorder %s26, 1
    %p473 = por %p471, %p472
    %p474 = scmp.ne.s32.totalorder %s466, %s469
    %p475 = scmp.eq.s32.totalorder %s26, 0
    %p476 = por %p474, %p475
    %p477 = scmp.ne.s32.totalorder %s466, %s469
    %p478 = scmp.eq.s32.totalorder %s31, 1
    %p479 = por %p477, %p478
    %p480 = scmp.ne.s32.totalorder %s469, %s470
    %p481 = scmp.eq.s32.totalorder %s31, 0
    %p482 = por %p480, %p481
    %p483 = scmp.ne.s32.totalorder %s469, %s470
    %p484 = scmp.eq.s32.totalorder %s32, 1
    %p485 = por %p483, %p484
    %p487 = scmp.ne.s32.totalorder %s470, %s486
    %p488 = scmp.eq.s32.totalorder %s32, 0
    %p489 = por %p487, %p488
    %p490 = scmp.le.s32.totalorder 1, %s26
    %p491 = scmp.lt.s32.totalorder %s26, 3
    %p492 = pnand %p490, %p491
    %p493 = pneg %p492
    // Predicated region
    $region9: #{autoencoder_forward.9} parent=5 // pred_check
      _
    $region10: #{autoencoder_forward.9} parent=5 // pred_check_branch
      %495 = sbr.rel (%p492) target = $region12
    $region11: #{autoencoder_forward.9} parent=5 // pred_region
      %s496 = ssub.s32 %s26, 1
      // Predicated region
      $region13: #{autoencoder_forward.9} parent=11 // pred_check
        %p497 = pneg %p99
      $region14: #{autoencoder_forward.9} parent=11 // pred_check_branch
        %499 = sbr.rel (%p497) target = $region16
      $region15: #{autoencoder_forward.9} parent=11 // pred_region
        _
      $region16: #{autoencoder_forward.9} parent=11 // pred_fallthru
        _
      // Predicated region
      $region17: #{autoencoder_forward.9} parent=11 // pred_check
        %p500 = pneg %p120
      $region18: #{autoencoder_forward.9} parent=11 // pred_check_branch
        %502 = sbr.rel (%p500) target = $region20
      $region19: #{autoencoder_forward.9} parent=11 // pred_region
        _
      $region20: #{autoencoder_forward.9} parent=11 // pred_fallthru
        _
      // Predicated region
      $region21: #{autoencoder_forward.9} parent=11 // pred_check
        %p503 = pneg %p141
      $region22: #{autoencoder_forward.9} parent=11 // pred_check_branch
        %505 = sbr.rel (%p503) target = $region24
      $region23: #{autoencoder_forward.9} parent=11 // pred_region
        _
      $region24: #{autoencoder_forward.9} parent=11 // pred_fallthru
        _
      // Predicated region
      $region25: #{autoencoder_forward.9} parent=11 // pred_check
        %p506 = pneg %p162
      $region26: #{autoencoder_forward.9} parent=11 // pred_check_branch
        %508 = sbr.rel (%p506) target = $region28
      $region27: #{autoencoder_forward.9} parent=11 // pred_region
        _
      $region28: #{autoencoder_forward.9} parent=11 // pred_fallthru
        _
      // Predicated region
      $region29: #{autoencoder_forward.9} parent=11 // pred_check
        %p509 = pneg %p183
      $region30: #{autoencoder_forward.9} parent=11 // pred_check_branch
        %511 = sbr.rel (%p509) target = $region32
      $region31: #{autoencoder_forward.9} parent=11 // pred_region
        _
      $region32: #{autoencoder_forward.9} parent=11 // pred_fallthru
        _
      // Predicated region
      $region33: #{autoencoder_forward.9} parent=11 // pred_check
        %p512 = pneg %p204
      $region34: #{autoencoder_forward.9} parent=11 // pred_check_branch
        %514 = sbr.rel (%p512) target = $region36
      $region35: #{autoencoder_forward.9} parent=11 // pred_region
        _
      $region36: #{autoencoder_forward.9} parent=11 // pred_fallthru
        _
      // Predicated region
      $region37: #{autoencoder_forward.9} parent=11 // pred_check
        %p515 = pneg %p225
      $region38: #{autoencoder_forward.9} parent=11 // pred_check_branch
        %517 = sbr.rel (%p515) target = $region40
      $region39: #{autoencoder_forward.9} parent=11 // pred_region
        _
      $region40: #{autoencoder_forward.9} parent=11 // pred_fallthru
        _
      // Predicated region
      $region41: #{autoencoder_forward.9} parent=11 // pred_check
        %p518 = pneg %p246
      $region42: #{autoencoder_forward.9} parent=11 // pred_check_branch
        %520 = sbr.rel (%p518) target = $region44
      $region43: #{autoencoder_forward.9} parent=11 // pred_region
        _
      $region44: #{autoencoder_forward.9} parent=11 // pred_fallthru
        _
      // Predicated region
      $region45: #{autoencoder_forward.9} parent=11 // pred_check
        %p521 = pneg %p267
      $region46: #{autoencoder_forward.9} parent=11 // pred_check_branch
        %523 = sbr.rel (%p521) target = $region48
      $region47: #{autoencoder_forward.9} parent=11 // pred_region
        _
      $region48: #{autoencoder_forward.9} parent=11 // pred_fallthru
        _
      // Predicated region
      $region49: #{autoencoder_forward.9} parent=11 // pred_check
        %p524 = pneg %p288
      $region50: #{autoencoder_forward.9} parent=11 // pred_check_branch
        %526 = sbr.rel (%p524) target = $region52
      $region51: #{autoencoder_forward.9} parent=11 // pred_region
        _
      $region52: #{autoencoder_forward.9} parent=11 // pred_fallthru
        _
      // Predicated region
      $region53: #{autoencoder_forward.9} parent=11 // pred_check
        %p527 = pneg %p309
      $region54: #{autoencoder_forward.9} parent=11 // pred_check_branch
        %529 = sbr.rel (%p527) target = $region56
      $region55: #{autoencoder_forward.9} parent=11 // pred_region
        _
      $region56: #{autoencoder_forward.9} parent=11 // pred_fallthru
        _
      // Predicated region
      $region57: #{autoencoder_forward.9} parent=11 // pred_check
        %p530 = pneg %p330
      $region58: #{autoencoder_forward.9} parent=11 // pred_check_branch
        %532 = sbr.rel (%p530) target = $region60
      $region59: #{autoencoder_forward.9} parent=11 // pred_region
        _
      $region60: #{autoencoder_forward.9} parent=11 // pred_fallthru
        _
      // Predicated region
      $region61: #{autoencoder_forward.9} parent=11 // pred_check
        %p533 = pneg %p351
      $region62: #{autoencoder_forward.9} parent=11 // pred_check_branch
        %535 = sbr.rel (%p533) target = $region64
      $region63: #{autoencoder_forward.9} parent=11 // pred_region
        _
      $region64: #{autoencoder_forward.9} parent=11 // pred_fallthru
        _
      // Predicated region
      $region65: #{autoencoder_forward.9} parent=11 // pred_check
        %p536 = pneg %p372
      $region66: #{autoencoder_forward.9} parent=11 // pred_check_branch
        %538 = sbr.rel (%p536) target = $region68
      $region67: #{autoencoder_forward.9} parent=11 // pred_region
        _
      $region68: #{autoencoder_forward.9} parent=11 // pred_fallthru
        _
      // Predicated region
      $region69: #{autoencoder_forward.9} parent=11 // pred_check
        %p539 = pneg %p393
      $region70: #{autoencoder_forward.9} parent=11 // pred_check_branch
        %541 = sbr.rel (%p539) target = $region72
      $region71: #{autoencoder_forward.9} parent=11 // pred_region
        _
      $region72: #{autoencoder_forward.9} parent=11 // pred_fallthru
        _
      // Predicated region
      $region73: #{autoencoder_forward.9} parent=11 // pred_check
        %p542 = pneg %p414
      $region74: #{autoencoder_forward.9} parent=11 // pred_check_branch
        %544 = sbr.rel (%p542) target = $region76
      $region75: #{autoencoder_forward.9} parent=11 // pred_region
        _
      $region76: #{autoencoder_forward.9} parent=11 // pred_fallthru
        _
      // Predicated region
      $region77: #{autoencoder_forward.9} parent=11 // pred_check
        %p545 = pneg %p435
      $region78: #{autoencoder_forward.9} parent=11 // pred_check_branch
        %547 = sbr.rel (%p545) target = $region80
      $region79: #{autoencoder_forward.9} parent=11 // pred_region
        _
      $region80: #{autoencoder_forward.9} parent=11 // pred_fallthru
        _
      // Predicated region
      $region81: #{autoencoder_forward.9} parent=11 // pred_check
        %p548 = pneg %p456
      $region82: #{autoencoder_forward.9} parent=11 // pred_check_branch
        %550 = sbr.rel (%p548) target = $region84
      $region83: #{autoencoder_forward.9} parent=11 // pred_region
        _
      $region84: #{autoencoder_forward.9} parent=11 // pred_fallthru
        _
    $region12: #{autoencoder_forward.9} parent=5 // pred_fallthru
      _
    %p551 = scmp.lt.s32.totalorder %s26, 2
    // Predicated region
    $region85: #{autoencoder_forward.9} parent=5 // pred_check
      %p552 = pneg %p551
    $region86: #{autoencoder_forward.9} parent=5 // pred_check_branch
      %554 = sbr.rel (%p552) target = $region88
    $region87: #{autoencoder_forward.9} parent=5 // pred_region
      // Predicated region
      $region89: #{autoencoder_forward.9} parent=87 // pred_check
        %p555 = pneg %p46
      $region90: #{autoencoder_forward.9} parent=87 // pred_check_branch
        %557 = sbr.rel (%p555) target = $region92
      $region91: #{autoencoder_forward.9} parent=87 // pred_region
        %p558 = scmp.lt.s32.totalorder %s26, 1
        %s559 = scalar_select %p558, %s26, 1
        %s560 = smul.addr %s559, 4
        %s561 = scalar_lea.vmem %s0, %s560
      $region92: #{autoencoder_forward.9} parent=87 // pred_fallthru
        _
      // Predicated region
      $region93: #{autoencoder_forward.9} parent=87 // pred_check
        %p562 = pneg %p72
      $region94: #{autoencoder_forward.9} parent=87 // pred_check_branch
        %564 = sbr.rel (%p562) target = $region96
      $region95: #{autoencoder_forward.9} parent=87 // pred_region
        %p565 = scmp.lt.s32.totalorder %s26, 1
        %s566 = scalar_select %p565, %s26, 1
        %s567 = scalar_lea.vmem %s1, %s566
      $region96: #{autoencoder_forward.9} parent=87 // pred_fallthru
        _
    $region88: #{autoencoder_forward.9} parent=5 // pred_fallthru
      _
    %p568 = scmp.le.s32.totalorder 1, %s26
    %p569 = scmp.lt.s32.totalorder %s26, 3
    %p570 = pnand %p568, %p569
    %p571 = pneg %p570
    // Predicated region
    $region97: #{autoencoder_forward.9} parent=5 // pred_check
      _
    $region98: #{autoencoder_forward.9} parent=5 // pred_check_branch
      %573 = sbr.rel (%p570) target = $region100
    $region99: #{autoencoder_forward.9} parent=5 // pred_region
      %s574 = ssub.s32 %s26, 1
      %p575 = scmp.lt.s32.totalorder %s31, 1
      %s576 = scalar_select %p575, %s31, 1
      %s577 = smul.addr %s576, 4
      %s578 = scalar_lea.vmem %s0, %s577
      %p579 = pneg %p52
      %p580 = pneg %p49
      %p581 = scmp.lt.s32.totalorder %s31, 1
      %s582 = scalar_select %p581, %s31, 1
      %s583 = scalar_lea.vmem %s1, %s582
      %p584 = pneg %p78
      %p585 = pneg %p75
      %p586 = pneg %p99
      %p587 = pneg %p96
      %p588 = pneg %p120
      %p589 = pneg %p117
      %p590 = pneg %p141
      %p591 = pneg %p138
      %p592 = pneg %p162
      %p593 = pneg %p159
      %p594 = pneg %p183
      %p595 = pneg %p180
      %p596 = pneg %p204
      %p597 = pneg %p201
      %p598 = pneg %p225
      %p599 = pneg %p222
      %p600 = pneg %p246
      %p601 = pneg %p243
      %p602 = pneg %p267
      %p603 = pneg %p264
      %p604 = pneg %p288
      %p605 = pneg %p285
      %p606 = pneg %p309
      %p607 = pneg %p306
      %p608 = pneg %p330
      %p609 = pneg %p327
      %p610 = pneg %p351
      %p611 = pneg %p348
      %p612 = pneg %p372
      %p613 = pneg %p369
      %p614 = pneg %p393
      %p615 = pneg %p390
      %p616 = pneg %p414
      %p617 = pneg %p411
      %p618 = pneg %p435
      %p619 = pneg %p432
      %p620 = pneg %p456
      %p621 = pneg %p453
      %p622 = pneg %p482
      %p623 = pneg %p479
      %p624 = scmp.lt.s32.totalorder %s31, 1
      %s625 = scalar_select %p624, %s31, 1
      %s626 = smul.addr %s625, 4
      %s627 = scalar_lea.vmem %s20, %s626
      %p628 = scmp.lt.s32.totalorder %s31, 1
      %s629 = scalar_select %p628, %s31, 1
      %s630 = smul.addr %s629, 4
      %s631 = scalar_lea.vmem %s0, %s630
      %p632 = scmp.lt.s32.totalorder %s31, 1
      %s633 = scalar_select %p632, %s31, 1
      %s634 = scalar_lea.vmem %s1, %s633
      %p635 = scmp.lt.s32.totalorder %s31, 1
      %s636 = scalar_select %p635, %s31, 1
      %s637 = smul.addr %s636, 4
      %s638 = scalar_lea.vmem %s20, %s637
      %v639 = vld [vmem:[%s631] sm:$0xf]
      %v640 = vld [vmem:[%s2] sm:$0xff]
      %v641 = vld [vmem:[%s2 + $0x8] sm:$0xff]
      %v642 = vld [vmem:[%s2 + $0x10] sm:$0xff]
      %v643 = vld [vmem:[%s2 + $0x18] sm:$0xff]
      %v644 = vld [vmem:[%s3] sm:$0x1]
      %v645 = vld [vmem:[%s4] sm:$0xff]
      %v646 = vld [vmem:[%s4 + $0x8] sm:$0xff]
      %v647 = vld [vmem:[%s4 + $0x10] sm:$0xff]
      %v648 = vld [vmem:[%s4 + $0x18] sm:$0xff]
      %v649 = vld [vmem:[%s5] sm:$0x1]
      %v651 = vlaneseq
      %v652 = vshrl.u32 %v651, 7
      %v653 = vsub.s32 0, %v652
      %v654 = vrot.slane %v644, %v653
      %vm656 = vcmask 261120
      %v658 = vsel %vm656, %v639, 0
      %660 = vmatprep.subr.mxu0 0.0
      %661 = vmatpush1.msra.mxu0 0.0
      %662 = vmatprep.subr.mxu0 0.0
      %663 = vmatpush1.msra.mxu0 0.0
      %664 = vmatprep.subr.mxu0 0.0
      %665 = vmatpush1.msra.mxu0 0.0
      %666 = vmatprep.subr.mxu0 0.0
      %667 = vmatpush1.msra.mxu0 0.0
      %668 = vmatprep.subr.mxu0 0.0
      %669 = vmatpush1.msra.mxu0 0.0
      %670 = vmatprep.subr.mxu0 0.0
      %671 = vmatpush1.msra.mxu0 0.0
      %672 = vmatprep.subr.mxu0 0.0
      %673 = vmatpush1.msra.mxu0 0.0
      %674 = vmatprep.subr.mxu0 0.0
      %675 = vmatpush1.msra.mxu0 0.0
      %676 = vmatprep.subr.mxu0 0.0
      %677 = vmatpush1.msra.mxu0 0.0
      %678 = vmatprep.subr.mxu0 0.0
      %679 = vmatpush1.msra.mxu0 0.0
      %680 = vmatprep.subr.mxu0 0.0
      %681 = vmatpush1.msra.mxu0 0.0
      %682 = vmatprep.subr.mxu0 0.0
      %683 = vmatpush1.msra.mxu0 0.0
      %684 = vmatprep.subr.mxu0 0.0
      %685 = vmatpush1.msra.mxu0 %v643
      %686 = vmatprep.subr.mxu0 0.0
      %687 = vmatpush1.msra.mxu0 %v642
      %688 = vmatprep.subr.mxu0 0.0
      %689 = vmatpush1.msra.mxu0 %v641
      %690 = vmatprep.subr.mxu0 0.0
      %691 = vmatpush1.msra.mxu0 %v640
      %692 = vmatprep.subr.mxu0 0.0
      %693 = vmatpush2.msra.mxu0 0.0
      %694 = vmatprep.subr.mxu0 0.0
      %695 = vmatpush2.msra.mxu0 0.0
      %696 = vmatprep.subr.mxu0 0.0
      %697 = vmatpush2.msra.mxu0 0.0
      %698 = vmatprep.subr.mxu0 0.0
      %699 = vmatpush2.msra.mxu0 0.0
      %700 = vmatprep.subr.mxu0 0.0
      %701 = vmatpush2.msra.mxu0 0.0
      %702 = vmatprep.subr.mxu0 0.0
      %703 = vmatpush2.msra.mxu0 0.0
      %704 = vmatprep.subr.mxu0 0.0
      %705 = vmatpush2.msra.mxu0 0.0
      %706 = vmatprep.subr.mxu0 0.0
      %707 = vmatpush2.msra.mxu0 0.0
      %708 = vmatprep.subr.mxu0 0.0
      %709 = vmatpush2.msra.mxu0 0.0
      %710 = vmatprep.subr.mxu0 0.0
      %711 = vmatpush2.msra.mxu0 0.0
      %712 = vmatprep.subr.mxu0 0.0
      %713 = vmatpush2.msra.mxu0 0.0
      %714 = vmatprep.subr.mxu0 0.0
      %715 = vmatpush2.msra.mxu0 0.0
      %716 = vmatprep.subr.mxu0 0.0
      %717 = vmatpush2.msra.mxu0 0.0
      %718 = vmatprep.subr.mxu0 0.0
      %719 = vmatpush2.msra.mxu0 0.0
      %720 = vmatprep.subr.mxu0 0.0
      %721 = vmatpush2.msra.mxu0 0.0
      %722 = vmatprep.subr.mxu0 0.0
      %723 = vmatpush2.msra.mxu0 0.0
      %724 = vmatprep.mubr.f32.mxu0 0.0
      %725 = vmatmul.mubr.f32.gmra.mxu0 %v658
      %v726 = vpop.f32.mrf.mxu0
      %v727 = vadd.f32 %v654, %v726
      %v728 = vpop.f32.mrf.mxu0
      %729 = vdwg.mxu0
      %731 = vrot.lane.b32.xlu0 %v727, 96
      %v732 = vpop.permute.xlu0 %731
      %vm733 = vcmask 64512
      %v734 = vsel %vm733, %v727, 0
      %v736 = vsel %vm733, %v732, 0
      %738 = vmatprep.subr.mxu0 0.0
      %739 = vmatpush1.xpose.msra.mxu0 0.0
      %740 = vmatprep.subr.mxu0 0.0
      %741 = vmatpush1.xpose.msra.mxu0 0.0
      %742 = vmatprep.subr.mxu0 0.0
      %743 = vmatpush1.xpose.msra.mxu0 0.0
      %744 = vmatprep.subr.mxu0 0.0
      %745 = vmatpush1.xpose.msra.mxu0 0.0
      %746 = vmatprep.subr.mxu0 0.0
      %747 = vmatpush1.xpose.msra.mxu0 0.0
      %748 = vmatprep.subr.mxu0 0.0
      %749 = vmatpush1.xpose.msra.mxu0 0.0
      %750 = vmatprep.subr.mxu0 0.0
      %751 = vmatpush1.xpose.msra.mxu0 0.0
      %752 = vmatprep.subr.mxu0 0.0
      %753 = vmatpush1.xpose.msra.mxu0 0.0
      %754 = vmatprep.subr.mxu0 0.0
      %755 = vmatpush1.xpose.msra.mxu0 0.0
      %756 = vmatprep.subr.mxu0 0.0
      %757 = vmatpush1.xpose.msra.mxu0 0.0
      %758 = vmatprep.subr.mxu0 0.0
      %759 = vmatpush1.xpose.msra.mxu0 0.0
      %760 = vmatprep.subr.mxu0 0.0
      %761 = vmatpush1.xpose.msra.mxu0 0.0
      %762 = vmatprep.subr.mxu0 0.0
      %763 = vmatpush1.xpose.msra.mxu0 0.0
      %764 = vmatprep.subr.mxu0 0.0
      %765 = vmatpush1.xpose.msra.mxu0 0.0
      %766 = vmatprep.subr.mxu0 0.0
      %767 = vmatpush1.xpose.msra.mxu0 0.0
      %768 = vmatprep.subr.mxu0 0.0
      %769 = vmatpush1.xpose.msra.mxu0 %v736
      %770 = vmatprep.subr.mxu0 0.0
      %771 = vmatpush2.xpose.msra.mxu0 0.0
      %772 = vmatprep.subr.mxu0 0.0
      %773 = vmatpush2.xpose.msra.mxu0 0.0
      %774 = vmatprep.subr.mxu0 0.0
      %775 = vmatpush2.xpose.msra.mxu0 0.0
      %776 = vmatprep.subr.mxu0 0.0
      %777 = vmatpush2.xpose.msra.mxu0 0.0
      %778 = vmatprep.subr.mxu0 0.0
      %779 = vmatpush2.xpose.msra.mxu0 0.0
      %780 = vmatprep.subr.mxu0 0.0
      %781 = vmatpush2.xpose.msra.mxu0 0.0
      %782 = vmatprep.subr.mxu0 0.0
      %783 = vmatpush2.xpose.msra.mxu0 0.0
      %784 = vmatprep.subr.mxu0 0.0
      %785 = vmatpush2.xpose.msra.mxu0 0.0
      %786 = vmatprep.subr.mxu0 0.0
      %787 = vmatpush2.xpose.msra.mxu0 0.0
      %788 = vmatprep.subr.mxu0 0.0
      %789 = vmatpush2.xpose.msra.mxu0 0.0
      %790 = vmatprep.subr.mxu0 0.0
      %791 = vmatpush2.xpose.msra.mxu0 0.0
      %792 = vmatprep.subr.mxu0 0.0
      %793 = vmatpush2.xpose.msra.mxu0 0.0
      %794 = vmatprep.subr.mxu0 0.0
      %795 = vmatpush2.xpose.msra.mxu0 0.0
      %796 = vmatprep.subr.mxu0 0.0
      %797 = vmatpush2.xpose.msra.mxu0 0.0
      %798 = vmatprep.subr.mxu0 0.0
      %799 = vmatpush2.xpose.msra.mxu0 0.0
      %800 = vmatprep.subr.mxu0 0.0
      %801 = vmatpush2.xpose.msra.mxu0 0.0
      %802 = vmatprep.mubr.f32.mxu0 0.0
      %803 = vmatmul.mubr.f32.gmra.mxu0 %v734
      %v804 = vpop.f32.mrf.mxu0
      %v805 = vadd.f32 0.0, %v804
      %v806 = vpop.f32.mrf.mxu0
      %807 = vdwg.mxu0
      %vm808 = vcmask 27648
      %v809 = vsel %vm808, %v805, -inf
      %810 = vmax.xlane.f32.xlu0 %v809
      %v811 = vpop.xlane.xlu0 %810
      %v812 = vsub.f32 %v805, %v811
      %v813 = vmul.f32 %v812, 1.442695
      %v814 = vpow.pop %v813
      %v815 = vsel %vm808, %v814, 0.0
      %816 = vadd.xlane.f32.xlu0 %v815
      %v817 = vpop.xlane.xlu0 %816
      %v818 = vrcp.pop %v817
      %v819 = vmul.f32 %v814, %v818
      %820 = vrot.lane.b32.xlu0 %v727, 64
      %v821 = vpop.permute.xlu0 %820
      %vm822 = vcmask 31744
      %v824 = vsel %vm822, %v819, 0
      %vm826 = vcmask 1043456
      %v827 = vsel %vm826, %v821, 0
      %829 = vmatprep.subr.mxu0 0.0
      %830 = vmatpush1.msra.mxu0 0.0
      %831 = vmatprep.subr.mxu0 0.0
      %832 = vmatpush1.msra.mxu0 0.0
      %833 = vmatprep.subr.mxu0 0.0
      %834 = vmatpush1.msra.mxu0 0.0
      %835 = vmatprep.subr.mxu0 0.0
      %836 = vmatpush1.msra.mxu0 0.0
      %837 = vmatprep.subr.mxu0 0.0
      %838 = vmatpush1.msra.mxu0 0.0
      %839 = vmatprep.subr.mxu0 0.0
      %840 = vmatpush1.msra.mxu0 0.0
      %841 = vmatprep.subr.mxu0 0.0
      %842 = vmatpush1.msra.mxu0 0.0
      %843 = vmatprep.subr.mxu0 0.0
      %844 = vmatpush1.msra.mxu0 0.0
      %845 = vmatprep.subr.mxu0 0.0
      %846 = vmatpush1.msra.mxu0 0.0
      %847 = vmatprep.subr.mxu0 0.0
      %848 = vmatpush1.msra.mxu0 0.0
      %849 = vmatprep.subr.mxu0 0.0
      %850 = vmatpush1.msra.mxu0 0.0
      %851 = vmatprep.subr.mxu0 0.0
      %852 = vmatpush1.msra.mxu0 0.0
      %853 = vmatprep.subr.mxu0 0.0
      %854 = vmatpush1.msra.mxu0 0.0
      %855 = vmatprep.subr.mxu0 0.0
      %856 = vmatpush1.msra.mxu0 0.0
      %857 = vmatprep.subr.mxu0 0.0
      %858 = vmatpush1.msra.mxu0 0.0
      %859 = vmatprep.subr.mxu0 0.0
      %860 = vmatpush1.msra.mxu0 %v827
      %861 = vmatprep.subr.mxu0 0.0
      %862 = vmatpush2.msra.mxu0 0.0
      %863 = vmatprep.subr.mxu0 0.0
      %864 = vmatpush2.msra.mxu0 0.0
      %865 = vmatprep.subr.mxu0 0.0
      %866 = vmatpush2.msra.mxu0 0.0
      %867 = vmatprep.subr.mxu0 0.0
      %868 = vmatpush2.msra.mxu0 0.0
      %869 = vmatprep.subr.mxu0 0.0
      %870 = vmatpush2.msra.mxu0 0.0
      %871 = vmatprep.subr.mxu0 0.0
      %872 = vmatpush2.msra.mxu0 0.0
      %873 = vmatprep.subr.mxu0 0.0
      %874 = vmatpush2.msra.mxu0 0.0
      %875 = vmatprep.subr.mxu0 0.0
      %876 = vmatpush2.msra.mxu0 0.0
      %877 = vmatprep.subr.mxu0 0.0
      %878 = vmatpush2.msra.mxu0 0.0
      %879 = vmatprep.subr.mxu0 0.0
      %880 = vmatpush2.msra.mxu0 0.0
      %881 = vmatprep.subr.mxu0 0.0
      %882 = vmatpush2.msra.mxu0 0.0
      %883 = vmatprep.subr.mxu0 0.0
      %884 = vmatpush2.msra.mxu0 0.0
      %885 = vmatprep.subr.mxu0 0.0
      %886 = vmatpush2.msra.mxu0 0.0
      %887 = vmatprep.subr.mxu0 0.0
      %888 = vmatpush2.msra.mxu0 0.0
      %889 = vmatprep.subr.mxu0 0.0
      %890 = vmatpush2.msra.mxu0 0.0
      %891 = vmatprep.subr.mxu0 0.0
      %892 = vmatpush2.msra.mxu0 0.0
      %893 = vmatprep.mubr.f32.mxu0 0.0
      %894 = vmatmul.mubr.f32.gmra.mxu0 %v824
      %v895 = vpop.f32.mrf.mxu0
      %v896 = vadd.f32 0.0, %v895
      %v897 = vpop.f32.mrf.mxu0
      %898 = vdwg.mxu0
      %899 = vrot.lane.b32.xlu0 %v727, 120
      %v900 = vpop.permute.xlu0 %899
      %901 = vrot.lane.b32.xlu0 %v727, 88
      %v902 = vpop.permute.xlu0 %901
      %v903 = vsel %vm733, %v900, 0
      %v905 = vsel %vm733, %v902, 0
      %907 = vmatprep.subr.mxu0 0.0
      %908 = vmatpush1.xpose.msra.mxu0 0.0
      %909 = vmatprep.subr.mxu0 0.0
      %910 = vmatpush1.xpose.msra.mxu0 0.0
      %911 = vmatprep.subr.mxu0 0.0
      %912 = vmatpush1.xpose.msra.mxu0 0.0
      %913 = vmatprep.subr.mxu0 0.0
      %914 = vmatpush1.xpose.msra.mxu0 0.0
      %915 = vmatprep.subr.mxu0 0.0
      %916 = vmatpush1.xpose.msra.mxu0 0.0
      %917 = vmatprep.subr.mxu0 0.0
      %918 = vmatpush1.xpose.msra.mxu0 0.0
      %919 = vmatprep.subr.mxu0 0.0
      %920 = vmatpush1.xpose.msra.mxu0 0.0
      %921 = vmatprep.subr.mxu0 0.0
      %922 = vmatpush1.xpose.msra.mxu0 0.0
      %923 = vmatprep.subr.mxu0 0.0
      %924 = vmatpush1.xpose.msra.mxu0 0.0
      %925 = vmatprep.subr.mxu0 0.0
      %926 = vmatpush1.xpose.msra.mxu0 0.0
      %927 = vmatprep.subr.mxu0 0.0
      %928 = vmatpush1.xpose.msra.mxu0 0.0
      %929 = vmatprep.subr.mxu0 0.0
      %930 = vmatpush1.xpose.msra.mxu0 0.0
      %931 = vmatprep.subr.mxu0 0.0
      %932 = vmatpush1.xpose.msra.mxu0 0.0
      %933 = vmatprep.subr.mxu0 0.0
      %934 = vmatpush1.xpose.msra.mxu0 0.0
      %935 = vmatprep.subr.mxu0 0.0
      %936 = vmatpush1.xpose.msra.mxu0 0.0
      %937 = vmatprep.subr.mxu0 0.0
      %938 = vmatpush1.xpose.msra.mxu0 %v905
      %939 = vmatprep.subr.mxu0 0.0
      %940 = vmatpush2.xpose.msra.mxu0 0.0
      %941 = vmatprep.subr.mxu0 0.0
      %942 = vmatpush2.xpose.msra.mxu0 0.0
      %943 = vmatprep.subr.mxu0 0.0
      %944 = vmatpush2.xpose.msra.mxu0 0.0
      %945 = vmatprep.subr.mxu0 0.0
      %946 = vmatpush2.xpose.msra.mxu0 0.0
      %947 = vmatprep.subr.mxu0 0.0
      %948 = vmatpush2.xpose.msra.mxu0 0.0
      %949 = vmatprep.subr.mxu0 0.0
      %950 = vmatpush2.xpose.msra.mxu0 0.0
      %951 = vmatprep.subr.mxu0 0.0
      %952 = vmatpush2.xpose.msra.mxu0 0.0
      %953 = vmatprep.subr.mxu0 0.0
      %954 = vmatpush2.xpose.msra.mxu0 0.0
      %955 = vmatprep.subr.mxu0 0.0
      %956 = vmatpush2.xpose.msra.mxu0 0.0
      %957 = vmatprep.subr.mxu0 0.0
      %958 = vmatpush2.xpose.msra.mxu0 0.0
      %959 = vmatprep.subr.mxu0 0.0
      %960 = vmatpush2.xpose.msra.mxu0 0.0
      %961 = vmatprep.subr.mxu0 0.0
      %962 = vmatpush2.xpose.msra.mxu0 0.0
      %963 = vmatprep.subr.mxu0 0.0
      %964 = vmatpush2.xpose.msra.mxu0 0.0
      %965 = vmatprep.subr.mxu0 0.0
      %966 = vmatpush2.xpose.msra.mxu0 0.0
      %967 = vmatprep.subr.mxu0 0.0
      %968 = vmatpush2.xpose.msra.mxu0 0.0
      %969 = vmatprep.subr.mxu0 0.0
      %970 = vmatpush2.xpose.msra.mxu0 0.0
      %971 = vmatprep.mubr.f32.mxu0 0.0
      %972 = vmatmul.mubr.f32.gmra.mxu0 %v903
      %v973 = vpop.f32.mrf.mxu0
      %v974 = vadd.f32 0.0, %v973
      %v975 = vpop.f32.mrf.mxu0
      %976 = vdwg.mxu0
      %v977 = vsel %vm808, %v974, -inf
      %978 = vmax.xlane.f32.xlu0 %v977
      %v979 = vpop.xlane.xlu0 %978
      %v980 = vsub.f32 %v974, %v979
      %v981 = vmul.f32 %v980, 1.442695
      %v982 = vpow.pop %v981
      %v983 = vsel %vm808, %v982, 0.0
      %984 = vadd.xlane.f32.xlu0 %v983
      %v985 = vpop.xlane.xlu0 %984
      %v986 = vrcp.pop %v985
      %v987 = vmul.f32 %v982, %v986
      %988 = vrot.lane.b32.xlu0 %v727, 56
      %v989 = vpop.permute.xlu0 %988
      %v991 = vsel %vm822, %v987, 0
      %v993 = vsel %vm826, %v989, 0
      %995 = vmatprep.subr.mxu0 0.0
      %996 = vmatpush1.msra.mxu0 0.0
      %997 = vmatprep.subr.mxu0 0.0
      %998 = vmatpush1.msra.mxu0 0.0
      %999 = vmatprep.subr.mxu0 0.0
      %1000 = vmatpush1.msra.mxu0 0.0
      %1001 = vmatprep.subr.mxu0 0.0
      %1002 = vmatpush1.msra.mxu0 0.0
      %1003 = vmatprep.subr.mxu0 0.0
      %1004 = vmatpush1.msra.mxu0 0.0
      %1005 = vmatprep.subr.mxu0 0.0
      %1006 = vmatpush1.msra.mxu0 0.0
      %1007 = vmatprep.subr.mxu0 0.0
      %1008 = vmatpush1.msra.mxu0 0.0
      %1009 = vmatprep.subr.mxu0 0.0
      %1010 = vmatpush1.msra.mxu0 0.0
      %1011 = vmatprep.subr.mxu0 0.0
      %1012 = vmatpush1.msra.mxu0 0.0
      %1013 = vmatprep.subr.mxu0 0.0
      %1014 = vmatpush1.msra.mxu0 0.0
      %1015 = vmatprep.subr.mxu0 0.0
      %1016 = vmatpush1.msra.mxu0 0.0
      %1017 = vmatprep.subr.mxu0 0.0
      %1018 = vmatpush1.msra.mxu0 0.0
      %1019 = vmatprep.subr.mxu0 0.0
      %1020 = vmatpush1.msra.mxu0 0.0
      %1021 = vmatprep.subr.mxu0 0.0
      %1022 = vmatpush1.msra.mxu0 0.0
      %1023 = vmatprep.subr.mxu0 0.0
      %1024 = vmatpush1.msra.mxu0 0.0
      %1025 = vmatprep.subr.mxu0 0.0
      %1026 = vmatpush1.msra.mxu0 %v993
      %1027 = vmatprep.subr.mxu0 0.0
      %1028 = vmatpush2.msra.mxu0 0.0
      %1029 = vmatprep.subr.mxu0 0.0
      %1030 = vmatpush2.msra.mxu0 0.0
      %1031 = vmatprep.subr.mxu0 0.0
      %1032 = vmatpush2.msra.mxu0 0.0
      %1033 = vmatprep.subr.mxu0 0.0
      %1034 = vmatpush2.msra.mxu0 0.0
      %1035 = vmatprep.subr.mxu0 0.0
      %1036 = vmatpush2.msra.mxu0 0.0
      %1037 = vmatprep.subr.mxu0 0.0
      %1038 = vmatpush2.msra.mxu0 0.0
      %1039 = vmatprep.subr.mxu0 0.0
      %1040 = vmatpush2.msra.mxu0 0.0
      %1041 = vmatprep.subr.mxu0 0.0
      %1042 = vmatpush2.msra.mxu0 0.0
      %1043 = vmatprep.subr.mxu0 0.0
      %1044 = vmatpush2.msra.mxu0 0.0
      %1045 = vmatprep.subr.mxu0 0.0
      %1046 = vmatpush2.msra.mxu0 0.0
      %1047 = vmatprep.subr.mxu0 0.0
      %1048 = vmatpush2.msra.mxu0 0.0
      %1049 = vmatprep.subr.mxu0 0.0
      %1050 = vmatpush2.msra.mxu0 0.0
      %1051 = vmatprep.subr.mxu0 0.0
      %1052 = vmatpush2.msra.mxu0 0.0
      %1053 = vmatprep.subr.mxu0 0.0
      %1054 = vmatpush2.msra.mxu0 0.0
      %1055 = vmatprep.subr.mxu0 0.0
      %1056 = vmatpush2.msra.mxu0 0.0
      %1057 = vmatprep.subr.mxu0 0.0
      %1058 = vmatpush2.msra.mxu0 0.0
      %1059 = vmatprep.mubr.f32.mxu0 0.0
      %1060 = vmatmul.mubr.f32.gmra.mxu0 %v991
      %v1061 = vpop.f32.mrf.mxu0
      %v1062 = vadd.f32 0.0, %v1061
      %v1063 = vpop.f32.mrf.mxu0
      %1064 = vdwg.mxu0
      %1065 = vrot.lane.b32.xlu0 %v727, 112
      %v1066 = vpop.permute.xlu0 %1065
      %1067 = vrot.lane.b32.xlu0 %v727, 80
      %v1068 = vpop.permute.xlu0 %1067
      %v1069 = vsel %vm733, %v1066, 0
      %v1071 = vsel %vm733, %v1068, 0
      %1073 = vmatprep.subr.mxu0 0.0
      %1074 = vmatpush1.xpose.msra.mxu0 0.0
      %1075 = vmatprep.subr.mxu0 0.0
      %1076 = vmatpush1.xpose.msra.mxu0 0.0
      %1077 = vmatprep.subr.mxu0 0.0
      %1078 = vmatpush1.xpose.msra.mxu0 0.0
      %1079 = vmatprep.subr.mxu0 0.0
      %1080 = vmatpush1.xpose.msra.mxu0 0.0
      %1081 = vmatprep.subr.mxu0 0.0
      %1082 = vmatpush1.xpose.msra.mxu0 0.0
      %1083 = vmatprep.subr.mxu0 0.0
      %1084 = vmatpush1.xpose.msra.mxu0 0.0
      %1085 = vmatprep.subr.mxu0 0.0
      %1086 = vmatpush1.xpose.msra.mxu0 0.0
      %1087 = vmatprep.subr.mxu0 0.0
      %1088 = vmatpush1.xpose.msra.mxu0 0.0
      %1089 = vmatprep.subr.mxu0 0.0
      %1090 = vmatpush1.xpose.msra.mxu0 0.0
      %1091 = vmatprep.subr.mxu0 0.0
      %1092 = vmatpush1.xpose.msra.mxu0 0.0
      %1093 = vmatprep.subr.mxu0 0.0
      %1094 = vmatpush1.xpose.msra.mxu0 0.0
      %1095 = vmatprep.subr.mxu0 0.0
      %1096 = vmatpush1.xpose.msra.mxu0 0.0
      %1097 = vmatprep.subr.mxu0 0.0
      %1098 = vmatpush1.xpose.msra.mxu0 0.0
      %1099 = vmatprep.subr.mxu0 0.0
      %1100 = vmatpush1.xpose.msra.mxu0 0.0
      %1101 = vmatprep.subr.mxu0 0.0
      %1102 = vmatpush1.xpose.msra.mxu0 0.0
      %1103 = vmatprep.subr.mxu0 0.0
      %1104 = vmatpush1.xpose.msra.mxu0 %v1071
      %1105 = vmatprep.subr.mxu0 0.0
      %1106 = vmatpush2.xpose.msra.mxu0 0.0
      %1107 = vmatprep.subr.mxu0 0.0
      %1108 = vmatpush2.xpose.msra.mxu0 0.0
      %1109 = vmatprep.subr.mxu0 0.0
      %1110 = vmatpush2.xpose.msra.mxu0 0.0
      %1111 = vmatprep.subr.mxu0 0.0
      %1112 = vmatpush2.xpose.msra.mxu0 0.0
      %1113 = vmatprep.subr.mxu0 0.0
      %1114 = vmatpush2.xpose.msra.mxu0 0.0
      %1115 = vmatprep.subr.mxu0 0.0
      %1116 = vmatpush2.xpose.msra.mxu0 0.0
      %1117 = vmatprep.subr.mxu0 0.0
      %1118 = vmatpush2.xpose.msra.mxu0 0.0
      %1119 = vmatprep.subr.mxu0 0.0
      %1120 = vmatpush2.xpose.msra.mxu0 0.0
      %1121 = vmatprep.subr.mxu0 0.0
      %1122 = vmatpush2.xpose.msra.mxu0 0.0
      %1123 = vmatprep.subr.mxu0 0.0
      %1124 = vmatpush2.xpose.msra.mxu0 0.0
      %1125 = vmatprep.subr.mxu0 0.0
      %1126 = vmatpush2.xpose.msra.mxu0 0.0
      %1127 = vmatprep.subr.mxu0 0.0
      %1128 = vmatpush2.xpose.msra.mxu0 0.0
      %1129 = vmatprep.subr.mxu0 0.0
      %1130 = vmatpush2.xpose.msra.mxu0 0.0
      %1131 = vmatprep.subr.mxu0 0.0
      %1132 = vmatpush2.xpose.msra.mxu0 0.0
      %1133 = vmatprep.subr.mxu0 0.0
      %1134 = vmatpush2.xpose.msra.mxu0 0.0
      %1135 = vmatprep.subr.mxu0 0.0
      %1136 = vmatpush2.xpose.msra.mxu0 0.0
      %1137 = vmatprep.mubr.f32.mxu0 0.0
      %1138 = vmatmul.mubr.f32.gmra.mxu0 %v1069
      %v1139 = vpop.f32.mrf.mxu0
      %v1140 = vadd.f32 0.0, %v1139
      %v1141 = vpop.f32.mrf.mxu0
      %1142 = vdwg.mxu0
      %v1143 = vsel %vm808, %v1140, -inf
      %1144 = vmax.xlane.f32.xlu0 %v1143
      %v1145 = vpop.xlane.xlu0 %1144
      %v1146 = vsub.f32 %v1140, %v1145
      %v1147 = vmul.f32 %v1146, 1.442695
      %v1148 = vpow.pop %v1147
      %v1149 = vsel %vm808, %v1148, 0.0
      %1150 = vadd.xlane.f32.xlu0 %v1149
      %v1151 = vpop.xlane.xlu0 %1150
      %v1152 = vrcp.pop %v1151
      %v1153 = vmul.f32 %v1148, %v1152
      %1154 = vrot.lane.b32.xlu0 %v727, 48
      %v1155 = vpop.permute.xlu0 %1154
      %v1157 = vsel %vm822, %v1153, 0
      %v1159 = vsel %vm826, %v1155, 0
      %1161 = vmatprep.subr.mxu0 0.0
      %1162 = vmatpush1.msra.mxu0 0.0
      %1163 = vmatprep.subr.mxu0 0.0
      %1164 = vmatpush1.msra.mxu0 0.0
      %1165 = vmatprep.subr.mxu0 0.0
      %1166 = vmatpush1.msra.mxu0 0.0
      %1167 = vmatprep.subr.mxu0 0.0
      %1168 = vmatpush1.msra.mxu0 0.0
      %1169 = vmatprep.subr.mxu0 0.0
      %1170 = vmatpush1.msra.mxu0 0.0
      %1171 = vmatprep.subr.mxu0 0.0
      %1172 = vmatpush1.msra.mxu0 0.0
      %1173 = vmatprep.subr.mxu0 0.0
      %1174 = vmatpush1.msra.mxu0 0.0
      %1175 = vmatprep.subr.mxu0 0.0
      %1176 = vmatpush1.msra.mxu0 0.0
      %1177 = vmatprep.subr.mxu0 0.0
      %1178 = vmatpush1.msra.mxu0 0.0
      %1179 = vmatprep.subr.mxu0 0.0
      %1180 = vmatpush1.msra.mxu0 0.0
      %1181 = vmatprep.subr.mxu0 0.0
      %1182 = vmatpush1.msra.mxu0 0.0
      %1183 = vmatprep.subr.mxu0 0.0
      %1184 = vmatpush1.msra.mxu0 0.0
      %1185 = vmatprep.subr.mxu0 0.0
      %1186 = vmatpush1.msra.mxu0 0.0
      %1187 = vmatprep.subr.mxu0 0.0
      %1188 = vmatpush1.msra.mxu0 0.0
      %1189 = vmatprep.subr.mxu0 0.0
      %1190 = vmatpush1.msra.mxu0 0.0
      %1191 = vmatprep.subr.mxu0 0.0
      %1192 = vmatpush1.msra.mxu0 %v1159
      %1193 = vmatprep.subr.mxu0 0.0
      %1194 = vmatpush2.msra.mxu0 0.0
      %1195 = vmatprep.subr.mxu0 0.0
      %1196 = vmatpush2.msra.mxu0 0.0
      %1197 = vmatprep.subr.mxu0 0.0
      %1198 = vmatpush2.msra.mxu0 0.0
      %1199 = vmatprep.subr.mxu0 0.0
      %1200 = vmatpush2.msra.mxu0 0.0
      %1201 = vmatprep.subr.mxu0 0.0
      %1202 = vmatpush2.msra.mxu0 0.0
      %1203 = vmatprep.subr.mxu0 0.0
      %1204 = vmatpush2.msra.mxu0 0.0
      %1205 = vmatprep.subr.mxu0 0.0
      %1206 = vmatpush2.msra.mxu0 0.0
      %1207 = vmatprep.subr.mxu0 0.0
      %1208 = vmatpush2.msra.mxu0 0.0
      %1209 = vmatprep.subr.mxu0 0.0
      %1210 = vmatpush2.msra.mxu0 0.0
      %1211 = vmatprep.subr.mxu0 0.0
      %1212 = vmatpush2.msra.mxu0 0.0
      %1213 = vmatprep.subr.mxu0 0.0
      %1214 = vmatpush2.msra.mxu0 0.0
      %1215 = vmatprep.subr.mxu0 0.0
      %1216 = vmatpush2.msra.mxu0 0.0
      %1217 = vmatprep.subr.mxu0 0.0
      %1218 = vmatpush2.msra.mxu0 0.0
      %1219 = vmatprep.subr.mxu0 0.0
      %1220 = vmatpush2.msra.mxu0 0.0
      %1221 = vmatprep.subr.mxu0 0.0
      %1222 = vmatpush2.msra.mxu0 0.0
      %1223 = vmatprep.subr.mxu0 0.0
      %1224 = vmatpush2.msra.mxu0 0.0
      %1225 = vmatprep.mubr.f32.mxu0 0.0
      %1226 = vmatmul.mubr.f32.gmra.mxu0 %v1157
      %v1227 = vpop.f32.mrf.mxu0
      %v1228 = vadd.f32 0.0, %v1227
      %v1229 = vpop.f32.mrf.mxu0
      %1230 = vdwg.mxu0
      %1231 = vrot.lane.b32.xlu0 %v727, 104
      %v1232 = vpop.permute.xlu0 %1231
      %1233 = vrot.lane.b32.xlu0 %v727, 72
      %v1234 = vpop.permute.xlu0 %1233
      %v1235 = vsel %vm733, %v1232, 0
      %v1237 = vsel %vm733, %v1234, 0
      %1239 = vmatprep.subr.mxu0 0.0
      %1240 = vmatpush1.xpose.msra.mxu0 0.0
      %1241 = vmatprep.subr.mxu0 0.0
      %1242 = vmatpush1.xpose.msra.mxu0 0.0
      %1243 = vmatprep.subr.mxu0 0.0
      %1244 = vmatpush1.xpose.msra.mxu0 0.0
      %1245 = vmatprep.subr.mxu0 0.0
      %1246 = vmatpush1.xpose.msra.mxu0 0.0
      %1247 = vmatprep.subr.mxu0 0.0
      %1248 = vmatpush1.xpose.msra.mxu0 0.0
      %1249 = vmatprep.subr.mxu0 0.0
      %1250 = vmatpush1.xpose.msra.mxu0 0.0
      %1251 = vmatprep.subr.mxu0 0.0
      %1252 = vmatpush1.xpose.msra.mxu0 0.0
      %1253 = vmatprep.subr.mxu0 0.0
      %1254 = vmatpush1.xpose.msra.mxu0 0.0
      %1255 = vmatprep.subr.mxu0 0.0
      %1256 = vmatpush1.xpose.msra.mxu0 0.0
      %1257 = vmatprep.subr.mxu0 0.0
      %1258 = vmatpush1.xpose.msra.mxu0 0.0
      %1259 = vmatprep.subr.mxu0 0.0
      %1260 = vmatpush1.xpose.msra.mxu0 0.0
      %1261 = vmatprep.subr.mxu0 0.0
      %1262 = vmatpush1.xpose.msra.mxu0 0.0
      %1263 = vmatprep.subr.mxu0 0.0
      %1264 = vmatpush1.xpose.msra.mxu0 0.0
      %1265 = vmatprep.subr.mxu0 0.0
      %1266 = vmatpush1.xpose.msra.mxu0 0.0
      %1267 = vmatprep.subr.mxu0 0.0
      %1268 = vmatpush1.xpose.msra.mxu0 0.0
      %1269 = vmatprep.subr.mxu0 0.0
      %1270 = vmatpush1.xpose.msra.mxu0 %v1237
      %1271 = vmatprep.subr.mxu0 0.0
      %1272 = vmatpush2.xpose.msra.mxu0 0.0
      %1273 = vmatprep.subr.mxu0 0.0
      %1274 = vmatpush2.xpose.msra.mxu0 0.0
      %1275 = vmatprep.subr.mxu0 0.0
      %1276 = vmatpush2.xpose.msra.mxu0 0.0
      %1277 = vmatprep.subr.mxu0 0.0
      %1278 = vmatpush2.xpose.msra.mxu0 0.0
      %1279 = vmatprep.subr.mxu0 0.0
      %1280 = vmatpush2.xpose.msra.mxu0 0.0
      %1281 = vmatprep.subr.mxu0 0.0
      %1282 = vmatpush2.xpose.msra.mxu0 0.0
      %1283 = vmatprep.subr.mxu0 0.0
      %1284 = vmatpush2.xpose.msra.mxu0 0.0
      %1285 = vmatprep.subr.mxu0 0.0
      %1286 = vmatpush2.xpose.msra.mxu0 0.0
      %1287 = vmatprep.subr.mxu0 0.0
      %1288 = vmatpush2.xpose.msra.mxu0 0.0
      %1289 = vmatprep.subr.mxu0 0.0
      %1290 = vmatpush2.xpose.msra.mxu0 0.0
      %1291 = vmatprep.subr.mxu0 0.0
      %1292 = vmatpush2.xpose.msra.mxu0 0.0
      %1293 = vmatprep.subr.mxu0 0.0
      %1294 = vmatpush2.xpose.msra.mxu0 0.0
      %1295 = vmatprep.subr.mxu0 0.0
      %1296 = vmatpush2.xpose.msra.mxu0 0.0
      %1297 = vmatprep.subr.mxu0 0.0
      %1298 = vmatpush2.xpose.msra.mxu0 0.0
      %1299 = vmatprep.subr.mxu0 0.0
      %1300 = vmatpush2.xpose.msra.mxu0 0.0
      %1301 = vmatprep.subr.mxu0 0.0
      %1302 = vmatpush2.xpose.msra.mxu0 0.0
      %1303 = vmatprep.mubr.f32.mxu0 0.0
      %1304 = vmatmul.mubr.f32.gmra.mxu0 %v1235
      %v1305 = vpop.f32.mrf.mxu0
      %v1306 = vadd.f32 0.0, %v1305
      %v1307 = vpop.f32.mrf.mxu0
      %1308 = vdwg.mxu0
      %v1309 = vsel %vm808, %v1306, -inf
      %1310 = vmax.xlane.f32.xlu0 %v1309
      %v1311 = vpop.xlane.xlu0 %1310
      %v1312 = vsub.f32 %v1306, %v1311
      %v1313 = vmul.f32 %v1312, 1.442695
      %v1314 = vpow.pop %v1313
      %v1315 = vsel %vm808, %v1314, 0.0
      %1316 = vadd.xlane.f32.xlu0 %v1315
      %v1317 = vpop.xlane.xlu0 %1316
      %v1318 = vrcp.pop %v1317
      %v1319 = vmul.f32 %v1314, %v1318
      %1320 = vrot.lane.b32.xlu0 %v727, 40
      %v1321 = vpop.permute.xlu0 %1320
      %v1323 = vsel %vm822, %v1319, 0
      %v1325 = vsel %vm826, %v1321, 0
      %1327 = vmatprep.subr.mxu0 0.0
      %1328 = vmatpush1.msra.mxu0 0.0
      %1329 = vmatprep.subr.mxu0 0.0
      %1330 = vmatpush1.msra.mxu0 0.0
      %1331 = vmatprep.subr.mxu0 0.0
      %1332 = vmatpush1.msra.mxu0 0.0
      %1333 = vmatprep.subr.mxu0 0.0
      %1334 = vmatpush1.msra.mxu0 0.0
      %1335 = vmatprep.subr.mxu0 0.0
      %1336 = vmatpush1.msra.mxu0 0.0
      %1337 = vmatprep.subr.mxu0 0.0
      %1338 = vmatpush1.msra.mxu0 0.0
      %1339 = vmatprep.subr.mxu0 0.0
      %1340 = vmatpush1.msra.mxu0 0.0
      %1341 = vmatprep.subr.mxu0 0.0
      %1342 = vmatpush1.msra.mxu0 0.0
      %1343 = vmatprep.subr.mxu0 0.0
      %1344 = vmatpush1.msra.mxu0 0.0
      %1345 = vmatprep.subr.mxu0 0.0
      %1346 = vmatpush1.msra.mxu0 0.0
      %1347 = vmatprep.subr.mxu0 0.0
      %1348 = vmatpush1.msra.mxu0 0.0
      %1349 = vmatprep.subr.mxu0 0.0
      %1350 = vmatpush1.msra.mxu0 0.0
      %1351 = vmatprep.subr.mxu0 0.0
      %1352 = vmatpush1.msra.mxu0 0.0
      %1353 = vmatprep.subr.mxu0 0.0
      %1354 = vmatpush1.msra.mxu0 0.0
      %1355 = vmatprep.subr.mxu0 0.0
      %1356 = vmatpush1.msra.mxu0 0.0
      %1357 = vmatprep.subr.mxu0 0.0
      %1358 = vmatpush1.msra.mxu0 %v1325
      %1359 = vmatprep.subr.mxu0 0.0
      %1360 = vmatpush2.msra.mxu0 0.0
      %1361 = vmatprep.subr.mxu0 0.0
      %1362 = vmatpush2.msra.mxu0 0.0
      %1363 = vmatprep.subr.mxu0 0.0
      %1364 = vmatpush2.msra.mxu0 0.0
      %1365 = vmatprep.subr.mxu0 0.0
      %1366 = vmatpush2.msra.mxu0 0.0
      %1367 = vmatprep.subr.mxu0 0.0
      %1368 = vmatpush2.msra.mxu0 0.0
      %1369 = vmatprep.subr.mxu0 0.0
      %1370 = vmatpush2.msra.mxu0 0.0
      %1371 = vmatprep.subr.mxu0 0.0
      %1372 = vmatpush2.msra.mxu0 0.0
      %1373 = vmatprep.subr.mxu0 0.0
      %1374 = vmatpush2.msra.mxu0 0.0
      %1375 = vmatprep.subr.mxu0 0.0
      %1376 = vmatpush2.msra.mxu0 0.0
      %1377 = vmatprep.subr.mxu0 0.0
      %1378 = vmatpush2.msra.mxu0 0.0
      %1379 = vmatprep.subr.mxu0 0.0
      %1380 = vmatpush2.msra.mxu0 0.0
      %1381 = vmatprep.subr.mxu0 0.0
      %1382 = vmatpush2.msra.mxu0 0.0
      %1383 = vmatprep.subr.mxu0 0.0
      %1384 = vmatpush2.msra.mxu0 0.0
      %1385 = vmatprep.subr.mxu0 0.0
      %1386 = vmatpush2.msra.mxu0 0.0
      %1387 = vmatprep.subr.mxu0 0.0
      %1388 = vmatpush2.msra.mxu0 0.0
      %1389 = vmatprep.subr.mxu0 0.0
      %1390 = vmatpush2.msra.mxu0 0.0
      %1391 = vmatprep.mubr.f32.mxu0 0.0
      %1392 = vmatmul.mubr.f32.gmra.mxu0 %v1323
      %v1393 = vpop.f32.mrf.mxu0
      %v1394 = vadd.f32 0.0, %v1393
      %v1395 = vpop.f32.mrf.mxu0
      %1396 = vdwg.mxu0
      %1398 = vrot.lane.b32.xlu0 %v1062, 8
      %v1399 = vpop.permute.xlu0 %1398
      %1402 = vrot.lane.b32.xlu0 %v1228, 16
      %v1403 = vpop.permute.xlu0 %1402
      %1406 = vrot.lane.b32.xlu0 %v1394, 24
      %v1407 = vpop.permute.xlu0 %1406
      %v1409 = vsel %vm733, %v896, %v1399
      %vm1410 = vcmask 130048
      %v1411 = vsel %vm1410, %v1409, %v1403
      %vm1412 = vcmask 195584
      %v1413 = vsel %vm1412, %v1411, %v1407
      %v1415 = vlaneseq
      %v1416 = vshrl.u32 %v1415, 7
      %v1417 = vsub.s32 0, %v1416
      %v1418 = vrot.slane %v649, %v1417
      %v1421 = vsel %vm656, %v1413, 0
      %1423 = vmatprep.subr.mxu0 0.0
      %1424 = vmatpush1.msra.mxu0 0.0
      %1425 = vmatprep.subr.mxu0 0.0
      %1426 = vmatpush1.msra.mxu0 0.0
      %1427 = vmatprep.subr.mxu0 0.0
      %1428 = vmatpush1.msra.mxu0 0.0
      %1429 = vmatprep.subr.mxu0 0.0
      %1430 = vmatpush1.msra.mxu0 0.0
      %1431 = vmatprep.subr.mxu0 0.0
      %1432 = vmatpush1.msra.mxu0 0.0
      %1433 = vmatprep.subr.mxu0 0.0
      %1434 = vmatpush1.msra.mxu0 0.0
      %1435 = vmatprep.subr.mxu0 0.0
      %1436 = vmatpush1.msra.mxu0 0.0
      %1437 = vmatprep.subr.mxu0 0.0
      %1438 = vmatpush1.msra.mxu0 0.0
      %1439 = vmatprep.subr.mxu0 0.0
      %1440 = vmatpush1.msra.mxu0 0.0
      %1441 = vmatprep.subr.mxu0 0.0
      %1442 = vmatpush1.msra.mxu0 0.0
      %1443 = vmatprep.subr.mxu0 0.0
      %1444 = vmatpush1.msra.mxu0 0.0
      %1445 = vmatprep.subr.mxu0 0.0
      %1446 = vmatpush1.msra.mxu0 0.0
      %1447 = vmatprep.subr.mxu0 0.0
      %1448 = vmatpush1.msra.mxu0 %v648
      %1449 = vmatprep.subr.mxu0 0.0
      %1450 = vmatpush1.msra.mxu0 %v647
      %1451 = vmatprep.subr.mxu0 0.0
      %1452 = vmatpush1.msra.mxu0 %v646
      %1453 = vmatprep.subr.mxu0 0.0
      %1454 = vmatpush1.msra.mxu0 %v645
      %1455 = vmatprep.subr.mxu0 0.0
      %1456 = vmatpush2.msra.mxu0 0.0
      %1457 = vmatprep.subr.mxu0 0.0
      %1458 = vmatpush2.msra.mxu0 0.0
      %1459 = vmatprep.subr.mxu0 0.0
      %1460 = vmatpush2.msra.mxu0 0.0
      %1461 = vmatprep.subr.mxu0 0.0
      %1462 = vmatpush2.msra.mxu0 0.0
      %1463 = vmatprep.subr.mxu0 0.0
      %1464 = vmatpush2.msra.mxu0 0.0
      %1465 = vmatprep.subr.mxu0 0.0
      %1466 = vmatpush2.msra.mxu0 0.0
      %1467 = vmatprep.subr.mxu0 0.0
      %1468 = vmatpush2.msra.mxu0 0.0
      %1469 = vmatprep.subr.mxu0 0.0
      %1470 = vmatpush2.msra.mxu0 0.0
      %1471 = vmatprep.subr.mxu0 0.0
      %1472 = vmatpush2.msra.mxu0 0.0
      %1473 = vmatprep.subr.mxu0 0.0
      %1474 = vmatpush2.msra.mxu0 0.0
      %1475 = vmatprep.subr.mxu0 0.0
      %1476 = vmatpush2.msra.mxu0 0.0
      %1477 = vmatprep.subr.mxu0 0.0
      %1478 = vmatpush2.msra.mxu0 0.0
      %1479 = vmatprep.subr.mxu0 0.0
      %1480 = vmatpush2.msra.mxu0 0.0
      %1481 = vmatprep.subr.mxu0 0.0
      %1482 = vmatpush2.msra.mxu0 0.0
      %1483 = vmatprep.subr.mxu0 0.0
      %1484 = vmatpush2.msra.mxu0 0.0
      %1485 = vmatprep.subr.mxu0 0.0
      %1486 = vmatpush2.msra.mxu0 0.0
      %1487 = vmatprep.mubr.f32.mxu0 0.0
      %1488 = vmatmul.mubr.f32.gmra.mxu0 %v1421
      %v1489 = vpop.f32.mrf.mxu0
      %v1490 = vadd.f32 %v1418, %v1489
      %v1491 = vpop.f32.mrf.mxu0
      %1492 = vdwg.mxu0
      %v1493 = vadd.f32 %v639, %v1490
      %v1494 = vld [vmem:[%s14] sm:$0x1]
      %v1495 = vld [vmem:[%s15] sm:$0x1]
      %vm1496 = vcmask 257024
      %v1497 = vsel %vm1496, %v1493, 0.0
      %1498 = vadd.xlane.f32.xlu0 %v1497
      %v1499 = vpop.xlane.xlu0 %1498
      %v1500 = vrcp.pop 32.0
      %v1501 = vmul.f32 %v1499, %v1500
      %v1502 = vsub.f32 %v1493, %v1501
      %v1503 = vmul.f32 %v1502, %v1502
      %v1504 = vsel %vm1496, %v1503, 0.0
      %1505 = vadd.xlane.f32.xlu0 %v1504
      %v1506 = vpop.xlane.xlu0 %1505
      %v1507 = vmul.f32 %v1506, %v1500
      %v1508 = vadd.f32 %v1507, 1e-05
      %v1509 = vrsqrt.pop %v1508
      %v1510 = vmul.f32 %v1502, %v1509
      %v1512 = vlaneseq
      %v1513 = vshrl.u32 %v1512, 7
      %v1514 = vsub.s32 0, %v1513
      %v1515 = vrot.slane %v1494, %v1514
      %v1517 = vmul.f32 %v1510, %v1515
      %v1519 = vlaneseq
      %v1520 = vshrl.u32 %v1519, 7
      %v1521 = vsub.s32 0, %v1520
      %v1522 = vrot.slane %v1495, %v1521
      %v1524 = vadd.f32 %v1517, %v1522
      %v1525 = vld [vmem:[%s634] sm:$0x1]
      %v1526 = vld [vmem:[%s6] sm:$0xff]
      %v1527 = vld [vmem:[%s6 + $0x8] sm:$0xff]
      %v1528 = vld [vmem:[%s6 + $0x10] sm:$0xff]
      %v1529 = vld [vmem:[%s6 + $0x18] sm:$0xff]
      %v1530 = vld [vmem:[%s7] sm:$0x1]
      %v1532 = vsel %vm656, %v1525, 0
      %1534 = vmatprep.subr.mxu0 0.0
      %1535 = vmatpush1.msra.mxu0 0.0
      %1536 = vmatprep.subr.mxu0 0.0
      %1537 = vmatpush1.msra.mxu0 0.0
      %1538 = vmatprep.subr.mxu0 0.0
      %1539 = vmatpush1.msra.mxu0 0.0
      %1540 = vmatprep.subr.mxu0 0.0
      %1541 = vmatpush1.msra.mxu0 0.0
      %1542 = vmatprep.subr.mxu0 0.0
      %1543 = vmatpush1.msra.mxu0 0.0
      %1544 = vmatprep.subr.mxu0 0.0
      %1545 = vmatpush1.msra.mxu0 0.0
      %1546 = vmatprep.subr.mxu0 0.0
      %1547 = vmatpush1.msra.mxu0 0.0
      %1548 = vmatprep.subr.mxu0 0.0
      %1549 = vmatpush1.msra.mxu0 0.0
      %1550 = vmatprep.subr.mxu0 0.0
      %1551 = vmatpush1.msra.mxu0 0.0
      %1552 = vmatprep.subr.mxu0 0.0
      %1553 = vmatpush1.msra.mxu0 0.0
      %1554 = vmatprep.subr.mxu0 0.0
      %1555 = vmatpush1.msra.mxu0 0.0
      %1556 = vmatprep.subr.mxu0 0.0
      %1557 = vmatpush1.msra.mxu0 0.0
      %1558 = vmatprep.subr.mxu0 0.0
      %1559 = vmatpush1.msra.mxu0 %v1529
      %1560 = vmatprep.subr.mxu0 0.0
      %1561 = vmatpush1.msra.mxu0 %v1528
      %1562 = vmatprep.subr.mxu0 0.0
      %1563 = vmatpush1.msra.mxu0 %v1527
      %1564 = vmatprep.subr.mxu0 0.0
      %1565 = vmatpush1.msra.mxu0 %v1526
      %1566 = vmatprep.subr.mxu0 0.0
      %1567 = vmatpush2.msra.mxu0 0.0
      %1568 = vmatprep.subr.mxu0 0.0
      %1569 = vmatpush2.msra.mxu0 0.0
      %1570 = vmatprep.subr.mxu0 0.0
      %1571 = vmatpush2.msra.mxu0 0.0
      %1572 = vmatprep.subr.mxu0 0.0
      %1573 = vmatpush2.msra.mxu0 0.0
      %1574 = vmatprep.subr.mxu0 0.0
      %1575 = vmatpush2.msra.mxu0 0.0
      %1576 = vmatprep.subr.mxu0 0.0
      %1577 = vmatpush2.msra.mxu0 0.0
      %1578 = vmatprep.subr.mxu0 0.0
      %1579 = vmatpush2.msra.mxu0 0.0
      %1580 = vmatprep.subr.mxu0 0.0
      %1581 = vmatpush2.msra.mxu0 0.0
      %1582 = vmatprep.subr.mxu0 0.0
      %1583 = vmatpush2.msra.mxu0 0.0
      %1584 = vmatprep.subr.mxu0 0.0
      %1585 = vmatpush2.msra.mxu0 0.0
      %1586 = vmatprep.subr.mxu0 0.0
      %1587 = vmatpush2.msra.mxu0 0.0
      %1588 = vmatprep.subr.mxu0 0.0
      %1589 = vmatpush2.msra.mxu0 0.0
      %1590 = vmatprep.subr.mxu0 0.0
      %1591 = vmatpush2.msra.mxu0 0.0
      %1592 = vmatprep.subr.mxu0 0.0
      %1593 = vmatpush2.msra.mxu0 0.0
      %1594 = vmatprep.subr.mxu0 0.0
      %1595 = vmatpush2.msra.mxu0 0.0
      %1596 = vmatprep.subr.mxu0 0.0
      %1597 = vmatpush2.msra.mxu0 0.0
      %1598 = vmatprep.mubr.f32.mxu0 0.0
      %1599 = vmatmul.mubr.f32.gmra.mxu0 %v1532
      %v1600 = vpop.f32.mrf.mxu0
      %v1601 = vadd.f32 %v1530, %v1600
      %v1602 = vpop.f32.mrf.mxu0
      %1603 = vdwg.mxu0
      %v1604 = vld [vmem:[%s8] sm:$0xff]
      %v1605 = vld [vmem:[%s8 + $0x8] sm:$0xff]
      %v1606 = vld [vmem:[%s8 + $0x10] sm:$0xff]
      %v1607 = vld [vmem:[%s8 + $0x18] sm:$0xff]
      %v1608 = vld [vmem:[%s9] sm:$0x1]
      %v1610 = vsel %vm656, %v1601, 0
      %1612 = vmatprep.subr.mxu0 0.0
      %1613 = vmatpush1.msra.mxu0 0.0
      %1614 = vmatprep.subr.mxu0 0.0
      %1615 = vmatpush1.msra.mxu0 0.0
      %1616 = vmatprep.subr.mxu0 0.0
      %1617 = vmatpush1.msra.mxu0 0.0
      %1618 = vmatprep.subr.mxu0 0.0
      %1619 = vmatpush1.msra.mxu0 0.0
      %1620 = vmatprep.subr.mxu0 0.0
      %1621 = vmatpush1.msra.mxu0 0.0
      %1622 = vmatprep.subr.mxu0 0.0
      %1623 = vmatpush1.msra.mxu0 0.0
      %1624 = vmatprep.subr.mxu0 0.0
      %1625 = vmatpush1.msra.mxu0 0.0
      %1626 = vmatprep.subr.mxu0 0.0
      %1627 = vmatpush1.msra.mxu0 0.0
      %1628 = vmatprep.subr.mxu0 0.0
      %1629 = vmatpush1.msra.mxu0 0.0
      %1630 = vmatprep.subr.mxu0 0.0
      %1631 = vmatpush1.msra.mxu0 0.0
      %1632 = vmatprep.subr.mxu0 0.0
      %1633 = vmatpush1.msra.mxu0 0.0
      %1634 = vmatprep.subr.mxu0 0.0
      %1635 = vmatpush1.msra.mxu0 0.0
      %1636 = vmatprep.subr.mxu0 0.0
      %1637 = vmatpush1.msra.mxu0 %v1607
      %1638 = vmatprep.subr.mxu0 0.0
      %1639 = vmatpush1.msra.mxu0 %v1606
      %1640 = vmatprep.subr.mxu0 0.0
      %1641 = vmatpush1.msra.mxu0 %v1605
      %1642 = vmatprep.subr.mxu0 0.0
      %1643 = vmatpush1.msra.mxu0 %v1604
      %1644 = vmatprep.subr.mxu0 0.0
      %1645 = vmatpush2.msra.mxu0 0.0
      %1646 = vmatprep.subr.mxu0 0.0
      %1647 = vmatpush2.msra.mxu0 0.0
      %1648 = vmatprep.subr.mxu0 0.0
      %1649 = vmatpush2.msra.mxu0 0.0
      %1650 = vmatprep.subr.mxu0 0.0
      %1651 = vmatpush2.msra.mxu0 0.0
      %1652 = vmatprep.subr.mxu0 0.0
      %1653 = vmatpush2.msra.mxu0 0.0
      %1654 = vmatprep.subr.mxu0 0.0
      %1655 = vmatpush2.msra.mxu0 0.0
      %1656 = vmatprep.subr.mxu0 0.0
      %1657 = vmatpush2.msra.mxu0 0.0
      %1658 = vmatprep.subr.mxu0 0.0
      %1659 = vmatpush2.msra.mxu0 0.0
      %1660 = vmatprep.subr.mxu0 0.0
      %1661 = vmatpush2.msra.mxu0 0.0
      %1662 = vmatprep.subr.mxu0 0.0
      %1663 = vmatpush2.msra.mxu0 0.0
      %1664 = vmatprep.subr.mxu0 0.0
      %1665 = vmatpush2.msra.mxu0 0.0
      %1666 = vmatprep.subr.mxu0 0.0
      %1667 = vmatpush2.msra.mxu0 0.0
      %1668 = vmatprep.subr.mxu0 0.0
      %1669 = vmatpush2.msra.mxu0 0.0
      %1670 = vmatprep.subr.mxu0 0.0
      %1671 = vmatpush2.msra.mxu0 0.0
      %1672 = vmatprep.subr.mxu0 0.0
      %1673 = vmatpush2.msra.mxu0 0.0
      %1674 = vmatprep.subr.mxu0 0.0
      %1675 = vmatpush2.msra.mxu0 0.0
      %1676 = vmatprep.mubr.f32.mxu0 0.0
      %1677 = vmatmul.mubr.f32.gmra.mxu0 %v1610
      %v1678 = vpop.f32.mrf.mxu0
      %v1679 = vadd.f32 %v1608, %v1678
      %v1680 = vpop.f32.mrf.mxu0
      %1681 = vdwg.mxu0
      %v1682 = vlaneseq
      %v1683 = vshrl.u32 %v1682, 7
      %v1684 = vsub.s32 0, %v1683
      %v1685 = vrot.slane %v1679, %v1684
      %v1686 = vadd.f32 %v1524, %v1685
      %v1687 = vld [vmem:[%s16] sm:$0x1]
      %v1688 = vld [vmem:[%s17] sm:$0x1]
      %v1689 = vsel %vm1496, %v1686, 0.0
      %1690 = vadd.xlane.f32.xlu0 %v1689
      %v1691 = vpop.xlane.xlu0 %1690
      %v1692 = vmul.f32 %v1691, %v1500
      %v1693 = vsub.f32 %v1686, %v1692
      %v1694 = vmul.f32 %v1693, %v1693
      %v1695 = vsel %vm1496, %v1694, 0.0
      %1696 = vadd.xlane.f32.xlu0 %v1695
      %v1697 = vpop.xlane.xlu0 %1696
      %v1698 = vmul.f32 %v1697, %v1500
      %v1699 = vadd.f32 %v1698, 1e-05
      %v1700 = vrsqrt.pop %v1699
      %v1701 = vmul.f32 %v1693, %v1700
      %v1703 = vlaneseq
      %v1704 = vshrl.u32 %v1703, 7
      %v1705 = vsub.s32 0, %v1704
      %v1706 = vrot.slane %v1687, %v1705
      %v1708 = vmul.f32 %v1701, %v1706
      %v1710 = vlaneseq
      %v1711 = vshrl.u32 %v1710, 7
      %v1712 = vsub.s32 0, %v1711
      %v1713 = vrot.slane %v1688, %v1712
      %v1715 = vadd.f32 %v1708, %v1713
      %v1716 = vld [vmem:[%s10] sm:$0xff]
      %v1717 = vld [vmem:[%s10 + $0x8] sm:$0xff]
      %v1718 = vld [vmem:[%s10 + $0x10] sm:$0xff]
      %v1719 = vld [vmem:[%s10 + $0x18] sm:$0xff]
      %v1720 = vld [vmem:[%s11] sm:$0x1]
      %v1721 = vld [vmem:[%s12] sm:$0xff]
      %v1722 = vld [vmem:[%s12 + $0x8] sm:$0xff]
      %v1723 = vld [vmem:[%s12 + $0x10] sm:$0xff]
      %v1724 = vld [vmem:[%s12 + $0x18] sm:$0xff]
      %v1725 = vld [vmem:[%s12 + $0x20] sm:$0xff]
      %v1726 = vld [vmem:[%s12 + $0x28] sm:$0xff]
      %v1727 = vld [vmem:[%s12 + $0x30] sm:$0xff]
      %v1728 = vld [vmem:[%s12 + $0x38] sm:$0xff]
      %v1729 = vld [vmem:[%s13] sm:$0x1]
      %v1731 = vlaneseq
      %v1732 = vshrl.u32 %v1731, 7
      %v1733 = vsub.s32 0, %v1732
      %v1734 = vrot.slane %v1720, %v1733
      %v1737 = vsel %vm656, %v1715, 0
      %1739 = vmatprep.subr.mxu0 0.0
      %1740 = vmatpush1.msra.mxu0 0.0
      %1741 = vmatprep.subr.mxu0 0.0
      %1742 = vmatpush1.msra.mxu0 0.0
      %1743 = vmatprep.subr.mxu0 0.0
      %1744 = vmatpush1.msra.mxu0 0.0
      %1745 = vmatprep.subr.mxu0 0.0
      %1746 = vmatpush1.msra.mxu0 0.0
      %1747 = vmatprep.subr.mxu0 0.0
      %1748 = vmatpush1.msra.mxu0 0.0
      %1749 = vmatprep.subr.mxu0 0.0
      %1750 = vmatpush1.msra.mxu0 0.0
      %1751 = vmatprep.subr.mxu0 0.0
      %1752 = vmatpush1.msra.mxu0 0.0
      %1753 = vmatprep.subr.mxu0 0.0
      %1754 = vmatpush1.msra.mxu0 0.0
      %1755 = vmatprep.subr.mxu0 0.0
      %1756 = vmatpush1.msra.mxu0 0.0
      %1757 = vmatprep.subr.mxu0 0.0
      %1758 = vmatpush1.msra.mxu0 0.0
      %1759 = vmatprep.subr.mxu0 0.0
      %1760 = vmatpush1.msra.mxu0 0.0
      %1761 = vmatprep.subr.mxu0 0.0
      %1762 = vmatpush1.msra.mxu0 0.0
      %1763 = vmatprep.subr.mxu0 0.0
      %1764 = vmatpush1.msra.mxu0 %v1719
      %1765 = vmatprep.subr.mxu0 0.0
      %1766 = vmatpush1.msra.mxu0 %v1718
      %1767 = vmatprep.subr.mxu0 0.0
      %1768 = vmatpush1.msra.mxu0 %v1717
      %1769 = vmatprep.subr.mxu0 0.0
      %1770 = vmatpush1.msra.mxu0 %v1716
      %1771 = vmatprep.subr.mxu0 0.0
      %1772 = vmatpush2.msra.mxu0 0.0
      %1773 = vmatprep.subr.mxu0 0.0
      %1774 = vmatpush2.msra.mxu0 0.0
      %1775 = vmatprep.subr.mxu0 0.0
      %1776 = vmatpush2.msra.mxu0 0.0
      %1777 = vmatprep.subr.mxu0 0.0
      %1778 = vmatpush2.msra.mxu0 0.0
      %1779 = vmatprep.subr.mxu0 0.0
      %1780 = vmatpush2.msra.mxu0 0.0
      %1781 = vmatprep.subr.mxu0 0.0
      %1782 = vmatpush2.msra.mxu0 0.0
      %1783 = vmatprep.subr.mxu0 0.0
      %1784 = vmatpush2.msra.mxu0 0.0
      %1785 = vmatprep.subr.mxu0 0.0
      %1786 = vmatpush2.msra.mxu0 0.0
      %1787 = vmatprep.subr.mxu0 0.0
      %1788 = vmatpush2.msra.mxu0 0.0
      %1789 = vmatprep.subr.mxu0 0.0
      %1790 = vmatpush2.msra.mxu0 0.0
      %1791 = vmatprep.subr.mxu0 0.0
      %1792 = vmatpush2.msra.mxu0 0.0
      %1793 = vmatprep.subr.mxu0 0.0
      %1794 = vmatpush2.msra.mxu0 0.0
      %1795 = vmatprep.subr.mxu0 0.0
      %1796 = vmatpush2.msra.mxu0 0.0
      %1797 = vmatprep.subr.mxu0 0.0
      %1798 = vmatpush2.msra.mxu0 0.0
      %1799 = vmatprep.subr.mxu0 0.0
      %1800 = vmatpush2.msra.mxu0 0.0
      %1801 = vmatprep.subr.mxu0 0.0
      %1802 = vmatpush2.msra.mxu0 0.0
      %1803 = vmatprep.mubr.f32.mxu0 0.0
      %1804 = vmatmul.mubr.f32.gmra.mxu0 %v1737
      %v1805 = vpop.f32.mrf.mxu0
      %v1806 = vadd.f32 %v1734, %v1805
      %v1807 = vpop.f32.mrf.mxu0
      %1808 = vdwg.mxu0
      %v1809 = vmax.f32 %v1806, 0.0
      %v1811 = vlaneseq
      %v1812 = vshrl.u32 %v1811, 7
      %v1813 = vsub.s32 0, %v1812
      %v1814 = vrot.slane %v1729, %v1813
      %vm1816 = vcmask 523264
      %v1818 = vsel %vm1816, %v1809, 0
      %1820 = vmatprep.subr.mxu0 0.0
      %1821 = vmatpush1.msra.mxu0 0.0
      %1822 = vmatprep.subr.mxu0 0.0
      %1823 = vmatpush1.msra.mxu0 0.0
      %1824 = vmatprep.subr.mxu0 0.0
      %1825 = vmatpush1.msra.mxu0 0.0
      %1826 = vmatprep.subr.mxu0 0.0
      %1827 = vmatpush1.msra.mxu0 0.0
      %1828 = vmatprep.subr.mxu0 0.0
      %1829 = vmatpush1.msra.mxu0 0.0
      %1830 = vmatprep.subr.mxu0 0.0
      %1831 = vmatpush1.msra.mxu0 0.0
      %1832 = vmatprep.subr.mxu0 0.0
      %1833 = vmatpush1.msra.mxu0 0.0
      %1834 = vmatprep.subr.mxu0 0.0
      %1835 = vmatpush1.msra.mxu0 0.0
      %1836 = vmatprep.subr.mxu0 0.0
      %1837 = vmatpush1.msra.mxu0 %v1728
      %1838 = vmatprep.subr.mxu0 0.0
      %1839 = vmatpush1.msra.mxu0 %v1727
      %1840 = vmatprep.subr.mxu0 0.0
      %1841 = vmatpush1.msra.mxu0 %v1726
      %1842 = vmatprep.subr.mxu0 0.0
      %1843 = vmatpush1.msra.mxu0 %v1725
      %1844 = vmatprep.subr.mxu0 0.0
      %1845 = vmatpush1.msra.mxu0 %v1724
      %1846 = vmatprep.subr.mxu0 0.0
      %1847 = vmatpush1.msra.mxu0 %v1723
      %1848 = vmatprep.subr.mxu0 0.0
      %1849 = vmatpush1.msra.mxu0 %v1722
      %1850 = vmatprep.subr.mxu0 0.0
      %1851 = vmatpush1.msra.mxu0 %v1721
      %1852 = vmatprep.subr.mxu0 0.0
      %1853 = vmatpush2.msra.mxu0 0.0
      %1854 = vmatprep.subr.mxu0 0.0
      %1855 = vmatpush2.msra.mxu0 0.0
      %1856 = vmatprep.subr.mxu0 0.0
      %1857 = vmatpush2.msra.mxu0 0.0
      %1858 = vmatprep.subr.mxu0 0.0
      %1859 = vmatpush2.msra.mxu0 0.0
      %1860 = vmatprep.subr.mxu0 0.0
      %1861 = vmatpush2.msra.mxu0 0.0
      %1862 = vmatprep.subr.mxu0 0.0
      %1863 = vmatpush2.msra.mxu0 0.0
      %1864 = vmatprep.subr.mxu0 0.0
      %1865 = vmatpush2.msra.mxu0 0.0
      %1866 = vmatprep.subr.mxu0 0.0
      %1867 = vmatpush2.msra.mxu0 0.0
      %1868 = vmatprep.subr.mxu0 0.0
      %1869 = vmatpush2.msra.mxu0 0.0
      %1870 = vmatprep.subr.mxu0 0.0
      %1871 = vmatpush2.msra.mxu0 0.0
      %1872 = vmatprep.subr.mxu0 0.0
      %1873 = vmatpush2.msra.mxu0 0.0
      %1874 = vmatprep.subr.mxu0 0.0
      %1875 = vmatpush2.msra.mxu0 0.0
      %1876 = vmatprep.subr.mxu0 0.0
      %1877 = vmatpush2.msra.mxu0 0.0
      %1878 = vmatprep.subr.mxu0 0.0
      %1879 = vmatpush2.msra.mxu0 0.0
      %1880 = vmatprep.subr.mxu0 0.0
      %1881 = vmatpush2.msra.mxu0 0.0
      %1882 = vmatprep.subr.mxu0 0.0
      %1883 = vmatpush2.msra.mxu0 0.0
      %1884 = vmatprep.mubr.f32.mxu0 0.0
      %1885 = vmatmul.mubr.f32.gmra.mxu0 %v1818
      %v1886 = vpop.f32.mrf.mxu0
      %v1887 = vadd.f32 %v1814, %v1886
      %v1888 = vpop.f32.mrf.mxu0
      %1889 = vdwg.mxu0
      %v1890 = vadd.f32 %v1715, %v1887
      %v1891 = vld [vmem:[%s18] sm:$0x1]
      %v1892 = vld [vmem:[%s19] sm:$0x1]
      %v1893 = vsel %vm1496, %v1890, 0.0
      %1894 = vadd.xlane.f32.xlu0 %v1893
      %v1895 = vpop.xlane.xlu0 %1894
      %v1896 = vmul.f32 %v1895, %v1500
      %v1897 = vsub.f32 %v1890, %v1896
      %v1898 = vmul.f32 %v1897, %v1897
      %v1899 = vsel %vm1496, %v1898, 0.0
      %1900 = vadd.xlane.f32.xlu0 %v1899
      %v1901 = vpop.xlane.xlu0 %1900
      %v1902 = vmul.f32 %v1901, %v1500
      %v1903 = vadd.f32 %v1902, 1e-05
      %v1904 = vrsqrt.pop %v1903
      %v1905 = vmul.f32 %v1897, %v1904
      %v1907 = vlaneseq
      %v1908 = vshrl.u32 %v1907, 7
      %v1909 = vsub.s32 0, %v1908
      %v1910 = vrot.slane %v1891, %v1909
      %v1912 = vmul.f32 %v1905, %v1910
      %v1914 = vlaneseq
      %v1915 = vshrl.u32 %v1914, 7
      %v1916 = vsub.s32 0, %v1915
      %v1917 = vrot.slane %v1892, %v1916
      %v1919 = vadd.f32 %v1912, %v1917
      %1920 = vst.msk [vmem:[%s638] sm:$0xf] %vm1496, %v1919
      %p1921 = scmp.lt.s32.totalorder %s31, 1
      %s1922 = scalar_select %p1921, %s31, 1
      %s1923 = smul.addr %s1922, 4
      %s1924 = scalar_lea.vmem %s20, %s1923
      // Predicated region
      $region101: #{autoencoder_forward.9} parent=99 // pred_check
        %p1925 = pneg %p479
      $region102: #{autoencoder_forward.9} parent=99 // pred_check_branch
        %1927 = sbr.rel (%p1925) target = $region104
      $region103: #{autoencoder_forward.9} parent=99 // pred_region
        _
      $region104: #{autoencoder_forward.9} parent=99 // pred_fallthru
        _
    $region100: #{autoencoder_forward.9} parent=5 // pred_fallthru
      _
    %p1928 = scmp.le.s32.totalorder 2, %s26
    // Predicated region
    $region105: #{autoencoder_forward.9} parent=5 // pred_check
      %p1929 = pneg %p1928
    $region106: #{autoencoder_forward.9} parent=5 // pred_check_branch
      %1931 = sbr.rel (%p1929) target = $region108
    $region107: #{autoencoder_forward.9} parent=5 // pred_region
      %s1932 = ssub.s32 %s26, 2
      // Predicated region
      $region109: #{autoencoder_forward.9} parent=107 // pred_check
        %p1933 = pneg %p485
      $region110: #{autoencoder_forward.9} parent=107 // pred_check_branch
        %1935 = sbr.rel (%p1933) target = $region112
      $region111: #{autoencoder_forward.9} parent=107 // pred_region
        %p1936 = scmp.lt.s32.totalorder %s32, 1
        %s1937 = scalar_select %p1936, %s32, 1
        %s1938 = smul.addr %s1937, 4
        %s1939 = scalar_lea.vmem %s20, %s1938
      $region112: #{autoencoder_forward.9} parent=107 // pred_fallthru
        _
    $region108: #{autoencoder_forward.9} parent=5 // pred_fallthru
      _
  $region6: #{autoencoder_forward.9} parent=0 // loop_footer
    %s30 = sadd.s32 1, %s26
  $region7: #{autoencoder_forward.9} parent=0 // loop_footer_branch
    %25 = sbr.rel target = $region3
  $region8: #{autoencoder_forward.9} parent=0 // loop_exit
    _

</llo_original>
